<compile_context>
chip_gen: v7x
topology: tpu7x:2x2x1
jax: 0.10.0
libtpu: 0.0.40
codegen_flags: <defaults>
</compile_context>

<pallas_src>
import math

import numpy as np
import jax
import jax.numpy as jnp
from jax import lax
from jax.experimental import pallas as pl
from jax.experimental.pallas import tpu as pltpu

# ----------------------------- config ---------------------------------------
PATCH_LEN = 8
D_MODEL = 32
D_FF = 64
N_HEADS = 4
E_LAYERS = 2
EPS_REVIN = 1e-5
EPS_LN = 1e-5
NEG_INF = -1e30

_LAYER_KEYS = ("wq", "bq", "wk", "bk", "wv", "bv", "wo", "bo",
               "ln1w", "ln1b", "w1", "bf1", "w2", "bf2", "ln2w", "ln2b")


# ----------------------------- pure-JAX reference -----------------------------
def _layernorm(x, w, b):
    mu = jnp.mean(x, axis=-1, keepdims=True)
    xc = x - mu
    var = jnp.mean(xc * xc, axis=-1, keepdims=True)
    return xc * lax.rsqrt(var + EPS_LN) * w + b


def _attn_ffn_block(x, wq, bq, wk, bk, wv, bv, wo, bo,
                    ln1w, ln1b, w1, bf1, w2, bf2, ln2w, ln2b):
    """Reference: one decoder-only layer on a single sequence x: (N, D)."""
    n, d = x.shape
    dh = d // N_HEADS
    scale = 1.0 / math.sqrt(dh)

    q = jnp.dot(x, wq, preferred_element_type=jnp.float32) + bq
    k = jnp.dot(x, wk, preferred_element_type=jnp.float32) + bk
    v = jnp.dot(x, wv, preferred_element_type=jnp.float32) + bv

    row = lax.broadcasted_iota(jnp.int32, (n, n), 0)
    col = lax.broadcasted_iota(jnp.int32, (n, n), 1)
    causal = col <= row

    heads = []
    for h in range(N_HEADS):
        sl = slice(h * dh, (h + 1) * dh)
        qh, kh, vh = q[:, sl], k[:, sl], v[:, sl]
        s = lax.dot_general(qh, kh, (((1,), (1,)), ((), ())),
                            preferred_element_type=jnp.float32) * scale
        s = jnp.where(causal, s, NEG_INF)
        s = s - jnp.max(s, axis=-1, keepdims=True)
        p = jnp.exp(s)
        p = p / jnp.sum(p, axis=-1, keepdims=True)
        heads.append(jnp.dot(p, vh, preferred_element_type=jnp.float32))
    ctx = jnp.concatenate(heads, axis=-1)

    attn_out = jnp.dot(ctx, wo, preferred_element_type=jnp.float32) + bo
    x = _layernorm(x + attn_out, ln1w, ln1b)

    y = jnp.dot(x, w1, preferred_element_type=jnp.float32) + bf1
    y = jnp.maximum(y, 0.0)  # configs.activation == 'relu'
    y = jnp.dot(y, w2, preferred_element_type=jnp.float32) + bf2
    return _layernorm(x + y, ln2w, ln2b)


def ref_forecast(x_enc, params):
    B, L, M = x_enc.shape
    N = L // PATCH_LEN
    mean = jnp.mean(x_enc, axis=1, keepdims=True)
    xc = x_enc - mean
    var = jnp.mean(xc * xc, axis=1, keepdims=True)
    std = jnp.sqrt(var + EPS_REVIN)
    xn = xc / std
    patches = jnp.transpose(xn, (0, 2, 1)).reshape(B * M, N, PATCH_LEN)
    h = jnp.einsum("bnp,pd->bnd", patches, params["w_emb"]) + params["pos_table"][:N][None]
    for lp in params["layers"]:
        wts = [lp[k] for k in _LAYER_KEYS]
        h = jax.vmap(lambda s: _attn_ffn_block(s, *wts))(h)
    h = _layernorm(h, params["normw"], params["normb"])
    y = jnp.einsum("bnd,dp->bnp", h, params["wproj"]) + params["bproj"]
    y = jnp.transpose(y.reshape(B, M, N * PATCH_LEN), (0, 2, 1))
    return y * std + mean


# ----------------------------- fused Pallas kernel ----------------------------
def _fused_kernel(p_ref, wemb_ref, pos_ref,
                  wqkv_ref, bqkv_ref, wo_ref, w1_ref, b1_ref, w2_ref, vecd_ref,
                  headln_ref, wproj_ref, bproj_ref,
                  gblk_ref, bias_ref, rep_ref, hsel_ref, den_ref,
                  pexp_ref, osel_ref, rowg_ref,
                  o_ref):
    f32 = jnp.float32
    D = D_MODEL

    def layernorm(x, w, b):
        mu = jnp.mean(x, axis=-1, keepdims=True)
        xc = x - mu
        var = jnp.mean(xc * xc, axis=-1, keepdims=True)
        return xc * lax.rsqrt(var + EPS_LN) * w + b

    # ---- 1) RevIN: instance norm over time, per channel (rows grouped by channel) ----
    p = p_ref[0]                                                               # (R, P)
    gb = gblk_ref[...]                                                         # (R, R) 1/L blocks
    mean_rows = jnp.sum(jnp.dot(gb, p, preferred_element_type=f32),
                        axis=-1, keepdims=True)                                # (R, 1)
    xc = p - mean_rows
    var_rows = jnp.sum(jnp.dot(gb, xc * xc, preferred_element_type=f32),
                       axis=-1, keepdims=True)                                 # biased variance
    std_rows = jnp.sqrt(var_rows + EPS_REVIN)
    xn = xc * lax.rsqrt(var_rows + EPS_REVIN)                                  # (R, P)

    # ---- 2) patch embedding + positional embedding ------------------------------
    h = jnp.dot(xn, wemb_ref[...], preferred_element_type=f32) + pos_ref[...]  # (R, D)

    attn_bias = bias_ref[...]                                                  # (R, H*R)
    rep = rep_ref[...]                                                         # (H*R, R)
    head_sel = hsel_ref[...]                                                   # (H*R, D)
    den_blk = den_ref[...]                                                     # (H*R, H*R)

    # ---- 3) decoder-only transformer layers (unrolled) --------------------------
    for l in range(E_LAYERS):
        vec = vecd_ref[l]                                                      # (6, D)
        bo, bf2 = vec[0:1], vec[1:2]
        ln1w, ln1b = vec[2:3], vec[3:4]
        ln2w, ln2b = vec[4:5], vec[5:6]

        # 1/sqrt(dh) scale is folded into the Q columns of wqkv/bqkv at pack time.
        qkv = jnp.dot(h, wqkv_ref[l], preferred_element_type=f32) + bqkv_ref[l]  # (R, 3D)
        q = qkv[:, 0:D]
        k = qkv[:, D:2 * D]
        v = qkv[:, 2 * D:3 * D]

        # all heads at once via block-diagonal expansion (replication done on the MXU)
        k_exp = jnp.dot(rep, k, preferred_element_type=f32) * head_sel          # (H*R, D)
        v_exp = jnp.dot(rep, v, preferred_element_type=f32) * head_sel          # (H*R, D)
        s = lax.dot_general(q, k_exp, (((1,), (1,)), ((), ())),
                            preferred_element_type=f32) + attn_bias             # (R, H*R)
        s = s - jnp.max(s, axis=-1, keepdims=True)
        e = jnp.exp(s)
        den = jnp.dot(e, den_blk, preferred_element_type=f32)                   # per-head sums
        prob = e * pl.reciprocal(den, approx=True)
        ctx = jnp.dot(prob, v_exp, preferred_element_type=f32)                  # (R, D)

        attn_out = jnp.dot(ctx, wo_ref[l], preferred_element_type=f32) + bo
        h = layernorm(h + attn_out, ln1w, ln1b)

        y = jnp.dot(h, w1_ref[l], preferred_element_type=f32) + b1_ref[l]
        y = jnp.maximum(y, 0.0)                                                  # relu
        y = jnp.dot(y, w2_ref[l], preferred_element_type=f32) + bf2
        h = layernorm(h + y, ln2w, ln2b)

    # ---- 4) final LayerNorm + projection back to patch_len ------------------------
    hl = headln_ref[...]
    hn = layernorm(h, hl[0:1], hl[1:2])
    yp = jnp.dot(hn, wproj_ref[...], preferred_element_type=f32) + bproj_ref[...]  # (R, P)

    # ---- 5) de-normalize, emit lane-dense (TB, M*L) --------------------------------
    yd = yp * std_rows + mean_rows                                                  # (R, P)
    y_wide = jnp.dot(yd, pexp_ref[...], preferred_element_type=f32) * osel_ref[...]  # (R, M*L)
    o_ref[0] = jnp.dot(rowg_ref[...], y_wide, preferred_element_type=f32)            # (TB, M*L)


# ----------------------------- host-side packing / constants -------------------
def _np(a):
    return np.asarray(a, dtype=np.float32)


def _pick_grid(B):
    """2 programs on v7x (2 TensorCores/chip) when B is even, else 1 fused program."""
    try:
        kind = jax.devices()[0].device_kind.lower().replace(" ", "")
        two_tc = ("v7" in kind) or ("tpu7" in kind)
    except Exception:
        two_tc = False
    if two_tc and B % 2 == 0:
        return 2
    return 1


def _pack_params_np(params):
    layers = params["layers"]
    scale = 1.0 / math.sqrt(D_MODEL // N_HEADS)

    def stack(key):
        return np.stack([_np(lp[key]) for lp in layers], axis=0)

    wqkv = np.stack([np.concatenate([_np(lp["wq"]) * scale, _np(lp["wk"]), _np(lp["wv"])],
                                    axis=1) for lp in layers], axis=0)          # (E, D, 3D)
    bqkv = np.stack([np.concatenate([_np(lp["bq"]) * scale, _np(lp["bk"]), _np(lp["bv"])],
                                    axis=1) for lp in layers], axis=0)          # (E, 1, 3D)
    vecd = np.stack([np.concatenate([_np(lp["bo"]), _np(lp["bf2"]), _np(lp["ln1w"]),
                                     _np(lp["ln1b"]), _np(lp["ln2w"]), _np(lp["ln2b"])],
                                    axis=0) for lp in layers], axis=0)          # (E, 6, D)
    headln = np.concatenate([_np(params["normw"]), _np(params["normb"])], axis=0)  # (2, D)
    return dict(w_emb=_np(params["w_emb"]), wqkv=wqkv, bqkv=bqkv, wo=stack("wo"),
                w1=stack("w1"), b1=stack("bf1"), w2=stack("w2"),
                vecd=vecd, headln=headln,
                wproj=_np(params["wproj"]), bproj=_np(params["bproj"]))


def _build_constants_np(TB, M, N):
    P = PATCH_LEN
    L = N * P
    MN = M * N
    R = TB * MN
    HR = N_HEADS * R
    ML = M * L
    dh = D_MODEL // N_HEADS
    f = np.float32

    r = np.arange(R)[:, None]
    c = np.arange(R)[None, :]
    g_blk = np.where(r // N == c // N, 1.0 / L, 0.0).astype(f)                   # (R, R)

    cc = np.arange(HR)[None, :] % R
    attn_bias = np.where((r // N == cc // N) & (cc <= r), 0.0, NEG_INF).astype(f)  # (R, H*R)

    rep = (np.arange(HR)[:, None] % R == np.arange(R)[None, :]).astype(f)        # (H*R, R)
    head_sel = (np.arange(HR)[:, None] // R ==
                np.arange(D_MODEL)[None, :] // dh).astype(f)                     # (H*R, D)
    den_blk = (np.arange(HR)[:, None] // R ==
               np.arange(HR)[None, :] // R).astype(f)                            # (H*R, H*R)

    p_expand = (np.arange(ML)[None, :] % P == np.arange(P)[:, None]).astype(f)   # (P, M*L)
    out_sel = (np.arange(R)[:, None] % MN ==
               np.arange(ML)[None, :] // P).astype(f)                            # (R, M*L)
    row_gather = (np.arange(TB)[:, None] ==
                  np.arange(R)[None, :] // MN).astype(f)                         # (TB, R)

    return dict(g_blk=g_blk, attn_bias=attn_bias, rep=rep, head_sel=head_sel,
                den_blk=den_blk, p_expand=p_expand, out_sel=out_sel,
                row_gather=row_gather)


def prepare_forecast(params, B, L, M):
    """One-time host-side packing of parameters + constant masks (numpy, no XLA dispatch)."""
    assert L % PATCH_LEN == 0
    N = L // PATCH_LEN
    G = _pick_grid(B)
    TB = B // G
    R = TB * M * N
    ML = M * L

    pk = _pack_params_np(params)
    cs = _build_constants_np(TB, M, N)
    pos_tiled = np.tile(_np(params["pos_table"])[:N], (TB * M, 1))               # (R, D)

    host_inputs = (
        pk["w_emb"], pos_tiled,
        pk["wqkv"], pk["bqkv"], pk["wo"], pk["w1"], pk["b1"], pk["w2"], pk["vecd"],
        pk["headln"], pk["wproj"], pk["bproj"],
        cs["g_blk"], cs["attn_bias"], cs["rep"], cs["head_sel"], cs["den_blk"],
        cs["p_expand"], cs["out_sel"], cs["row_gather"],
    )
    inputs = tuple(jnp.asarray(a) for a in host_inputs)
    return dict(G=G, TB=TB, R=R, ML=ML, N=N, inputs=inputs)


# ----------------------------- wrapper ------------------------------------------
def timer_forecast(x_enc, prep):
    B, L, M = x_enc.shape
    G, TB, R, ML = prep["G"], prep["TB"], prep["R"], prep["ML"]

    # XLA-side layout plumbing: (B, L, M) -> (B, M, L) -> (G, TB*M*N, P)
    patches = jnp.transpose(x_enc, (0, 2, 1)).reshape(G, R, PATCH_LEN)

    def full(a):
        nd = a.ndim
        return pl.BlockSpec(a.shape, lambda g, _n=nd: (0,) * _n)

    in_specs = ([pl.BlockSpec((1, R, PATCH_LEN), lambda g: (g, 0, 0))]
                + [full(a) for a in prep["inputs"]])

    out = pl.pallas_call(
        _fused_kernel,
        out_shape=jax.ShapeDtypeStruct((G, TB, ML), jnp.float32),
        grid=(G,),
        in_specs=in_specs,
        out_specs=pl.BlockSpec((1, TB, ML), lambda g: (g, 0, 0)),
        compiler_params=pltpu.CompilerParams(dimension_semantics=("parallel",)),
    )(patches, *prep["inputs"])

    # lane-dense kernel output (G, TB, M*L) -> required (B, L, M)
    out = out.reshape(B, M, L)
    return jnp.transpose(out, (0, 2, 1))


# ----------------------------- parameter init ------------------------------------
def _sinusoidal_pe(max_len, d_model):
    pe = np.zeros((max_len, d_model), np.float32)
    position = np.arange(max_len, dtype=np.float32)[:, None]
    div_term = np.exp(np.arange(0, d_model, 2, dtype=np.float32) * -(math.log(10000.0) / d_model))
    pe[:, 0::2] = np.sin(position * div_term)
    pe[:, 1::2] = np.cos(position * div_term)
    return jnp.asarray(pe)


def init_params(key, max_len=64):
    # all Linear / Conv1d(k=1) weights stored as (in_dim, out_dim) so kernels do x @ W + b.
    ks = list(jax.random.split(key, 4 + E_LAYERS * 8))
    it = iter(ks)

    def w(din, dout):
        return jax.random.normal(next(it), (din, dout), jnp.float32) * 0.02

    def b(dout):
        return jnp.zeros((1, dout), jnp.float32)

    params = {
        "w_emb": w(PATCH_LEN, D_MODEL),            # value_embedding (no bias)
        "pos_table": _sinusoidal_pe(max_len, D_MODEL),
        "normw": jnp.ones((1, D_MODEL), jnp.float32),
        "normb": jnp.zeros((1, D_MODEL), jnp.float32),
        "wproj": w(D_MODEL, PATCH_LEN),
        "bproj": b(PATCH_LEN),
        "layers": [],
    }
    for _ in range(E_LAYERS):
        lp = {
            "wq": w(D_MODEL, D_MODEL), "bq": b(D_MODEL),
            "wk": w(D_MODEL, D_MODEL), "bk": b(D_MODEL),
            "wv": w(D_MODEL, D_MODEL), "bv": b(D_MODEL),
            "wo": w(D_MODEL, D_MODEL), "bo": b(D_MODEL),
            "ln1w": jnp.ones((1, D_MODEL), jnp.float32), "ln1b": jnp.zeros((1, D_MODEL), jnp.float32),
            "w1": w(D_MODEL, D_FF), "bf1": b(D_FF),
            "w2": w(D_FF, D_MODEL), "bf2": b(D_MODEL),
            "ln2w": jnp.ones((1, D_MODEL), jnp.float32), "ln2b": jnp.zeros((1, D_MODEL), jnp.float32),
        }
        params["layers"].append(lp)
    return params


# ----------------------------- main ------------------------------------------------
if __name__ == "__main__":
    key = jax.random.PRNGKey(0)
    k_x, k_p = jax.random.split(key)

    B, L, M = 2, 32, 4                       # L must be a multiple of PATCH_LEN
    x_enc = jax.random.normal(k_x, (B, L, M), jnp.float32)
    # x_mark_enc / x_dec / x_mark_dec are unused by the 'forecast' branch of Timer.
    x_mark_enc = jnp.zeros((B, L, 4), jnp.float32)
    x_dec = jnp.zeros((B, L, M), jnp.float32)
    x_mark_dec = jnp.zeros((B, L, 4), jnp.float32)

    params = init_params(k_p)
    prep = prepare_forecast(params, B, L, M)         # one-time packing, cached

    forecast = jax.jit(lambda x: timer_forecast(x, prep))
    out = jax.block_until_ready(forecast(x_enc))
    assert out.shape == (B, L, M)

    ref = jax.block_until_ready(ref_forecast(x_enc, params))
    if not np.allclose(np.asarray(out), np.asarray(ref), rtol=1e-2, atol=1e-2):
        raise AssertionError(
            f"Pallas vs reference mismatch: max abs err = {float(jnp.max(jnp.abs(out - ref)))}")

    print("KERNEL_OK")
</pallas_src>

<mosaic_0001>
module attributes {stable_mosaic.version = 11 : i64} {
  func.func @_fused_kernel(%arg0: i32, %arg1: memref<1x32x8xf32, #tpu.memory_space<vmem>>, %arg2: memref<8x32xf32, #tpu.memory_space<vmem>>, %arg3: memref<32x32xf32, #tpu.memory_space<vmem>>, %arg4: memref<2x32x96xf32, #tpu.memory_space<vmem>>, %arg5: memref<2x1x96xf32, #tpu.memory_space<vmem>>, %arg6: memref<2x32x32xf32, #tpu.memory_space<vmem>>, %arg7: memref<2x32x64xf32, #tpu.memory_space<vmem>>, %arg8: memref<2x1x64xf32, #tpu.memory_space<vmem>>, %arg9: memref<2x64x32xf32, #tpu.memory_space<vmem>>, %arg10: memref<2x6x32xf32, #tpu.memory_space<vmem>>, %arg11: memref<2x32xf32, #tpu.memory_space<vmem>>, %arg12: memref<32x8xf32, #tpu.memory_space<vmem>>, %arg13: memref<1x8xf32, #tpu.memory_space<vmem>>, %arg14: memref<32x32xf32, #tpu.memory_space<vmem>>, %arg15: memref<32x128xf32, #tpu.memory_space<vmem>>, %arg16: memref<128x32xf32, #tpu.memory_space<vmem>>, %arg17: memref<128x32xf32, #tpu.memory_space<vmem>>, %arg18: memref<128x128xf32, #tpu.memory_space<vmem>>, %arg19: memref<8x128xf32, #tpu.memory_space<vmem>>, %arg20: memref<32x128xf32, #tpu.memory_space<vmem>>, %arg21: memref<2x32xf32, #tpu.memory_space<vmem>>, %arg22: memref<1x2x128xf32, #tpu.memory_space<vmem>>) attributes {dimension_semantics = [#tpu.dimension_semantics<parallel>], iteration_bounds = array<i64: 1>, scalar_prefetch = 0 : i64, scratch_operands = 0 : i64, tpu.core_type = #tpu.core_type<tc>, window_params = [{transform_indices = @transform_0, window_bounds = array<i64: 1, 32, 8>}, {pipeline_mode = #tpu.pipeline_mode<synchronous>, transform_indices = @transform_1, window_bounds = array<i64: 8, 32>}, {pipeline_mode = #tpu.pipeline_mode<synchronous>, transform_indices = @transform_2, window_bounds = array<i64: 32, 32>}, {pipeline_mode = #tpu.pipeline_mode<synchronous>, transform_indices = @transform_3, window_bounds = array<i64: 2, 32, 96>}, {pipeline_mode = #tpu.pipeline_mode<synchronous>, transform_indices = @transform_4, window_bounds = array<i64: 2, 1, 96>}, {pipeline_mode = #tpu.pipeline_mode<synchronous>, transform_indices = @transform_5, window_bounds = array<i64: 2, 32, 32>}, {pipeline_mode = #tpu.pipeline_mode<synchronous>, transform_indices = @transform_6, window_bounds = array<i64: 2, 32, 64>}, {pipeline_mode = #tpu.pipeline_mode<synchronous>, transform_indices = @transform_7, window_bounds = array<i64: 2, 1, 64>}, {pipeline_mode = #tpu.pipeline_mode<synchronous>, transform_indices = @transform_8, window_bounds = array<i64: 2, 64, 32>}, {pipeline_mode = #tpu.pipeline_mode<synchronous>, transform_indices = @transform_9, window_bounds = array<i64: 2, 6, 32>}, {pipeline_mode = #tpu.pipeline_mode<synchronous>, transform_indices = @transform_10, window_bounds = array<i64: 2, 32>}, {pipeline_mode = #tpu.pipeline_mode<synchronous>, transform_indices = @transform_11, window_bounds = array<i64: 32, 8>}, {pipeline_mode = #tpu.pipeline_mode<synchronous>, transform_indices = @transform_12, window_bounds = array<i64: 1, 8>}, {pipeline_mode = #tpu.pipeline_mode<synchronous>, transform_indices = @transform_13, window_bounds = array<i64: 32, 32>}, {pipeline_mode = #tpu.pipeline_mode<synchronous>, transform_indices = @transform_14, window_bounds = array<i64: 32, 128>}, {pipeline_mode = #tpu.pipeline_mode<synchronous>, transform_indices = @transform_15, window_bounds = array<i64: 128, 32>}, {pipeline_mode = #tpu.pipeline_mode<synchronous>, transform_indices = @transform_16, window_bounds = array<i64: 128, 32>}, {pipeline_mode = #tpu.pipeline_mode<synchronous>, transform_indices = @transform_17, window_bounds = array<i64: 128, 128>}, {pipeline_mode = #tpu.pipeline_mode<synchronous>, transform_indices = @transform_18, window_bounds = array<i64: 8, 128>}, {pipeline_mode = #tpu.pipeline_mode<synchronous>, transform_indices = @transform_19, window_bounds = array<i64: 32, 128>}, {pipeline_mode = #tpu.pipeline_mode<synchronous>, transform_indices = @transform_20, window_bounds = array<i64: 2, 32>}, {transform_indices = @transform_21, window_bounds = array<i64: 1, 2, 128>}]} {
    %c0 = arith.constant 0 : index
    %c0_0 = arith.constant 0 : index
    %c0_1 = arith.constant 0 : index
    %0 = vector.load %arg1[%c0, %c0_0, %c0_1] : memref<1x32x8xf32, #tpu.memory_space<vmem>>, vector<1x32x8xf32>
    %1 = vector.shape_cast %0 : vector<1x32x8xf32> to vector<32x8xf32>
    %c0_2 = arith.constant 0 : index
    %c0_3 = arith.constant 0 : index
    %2 = vector.load %arg14[%c0_2, %c0_3] : memref<32x32xf32, #tpu.memory_space<vmem>>, vector<32x32xf32>
    %cst = arith.constant dense<0.000000e+00> : vector<32x8xf32>
    %3 = tpu.matmul %2, %1, %cst {dimension_numbers = #tpu.dot_dimension_numbers<[1], [0], [0], [1], [0, 0, 1, 1], [], []>} : vector<32x32xf32>, vector<32x8xf32>, vector<32x8xf32> -> vector<32x8xf32>
    %cst_4 = arith.constant dense<0.000000e+00> : vector<32xf32>
    %4 = vector.multi_reduction <add>, %3, %cst_4 [1] : vector<32x8xf32> to vector<32xf32>
    %5 = vector.shape_cast %4 : vector<32xf32> to vector<32x1xf32>
    %6 = vector.broadcast %5 : vector<32x1xf32> to vector<32x8xf32>
    %7 = arith.subf %1, %6 : vector<32x8xf32>
    %8 = arith.mulf %7, %7 : vector<32x8xf32>
    %cst_5 = arith.constant dense<0.000000e+00> : vector<32x8xf32>
    %9 = tpu.matmul %2, %8, %cst_5 {dimension_numbers = #tpu.dot_dimension_numbers<[1], [0], [0], [1], [0, 0, 1, 1], [], []>} : vector<32x32xf32>, vector<32x8xf32>, vector<32x8xf32> -> vector<32x8xf32>
    %cst_6 = arith.constant dense<0.000000e+00> : vector<32xf32>
    %10 = vector.multi_reduction <add>, %9, %cst_6 [1] : vector<32x8xf32> to vector<32xf32>
    %11 = vector.shape_cast %10 : vector<32xf32> to vector<32x1xf32>
    %cst_7 = arith.constant 9.99999974E-6 : f32
    %12 = vector.broadcast %cst_7 : f32 to vector<32x1xf32>
    %13 = arith.addf %11, %12 : vector<32x1xf32>
    %14 = math.sqrt %13 : vector<32x1xf32>
    %cst_8 = arith.constant 9.99999974E-6 : f32
    %15 = vector.broadcast %cst_8 : f32 to vector<32x1xf32>
    %16 = arith.addf %11, %15 : vector<32x1xf32>
    %17 = math.rsqrt %16 : vector<32x1xf32>
    %18 = vector.broadcast %17 : vector<32x1xf32> to vector<32x8xf32>
    %19 = arith.mulf %7, %18 : vector<32x8xf32>
    %c0_9 = arith.constant 0 : index
    %c0_10 = arith.constant 0 : index
    %20 = vector.load %arg2[%c0_9, %c0_10] : memref<8x32xf32, #tpu.memory_space<vmem>>, vector<8x32xf32>
    %cst_11 = arith.constant dense<0.000000e+00> : vector<32x32xf32>
    %21 = tpu.matmul %19, %20, %cst_11 {dimension_numbers = #tpu.dot_dimension_numbers<[1], [0], [0], [1], [0, 0, 1, 1], [], []>} : vector<32x8xf32>, vector<8x32xf32>, vector<32x32xf32> -> vector<32x32xf32>
    %c0_12 = arith.constant 0 : index
    %c0_13 = arith.constant 0 : index
    %22 = vector.load %arg3[%c0_12, %c0_13] : memref<32x32xf32, #tpu.memory_space<vmem>>, vector<32x32xf32>
    %23 = arith.addf %21, %22 : vector<32x32xf32>
    %c0_14 = arith.constant 0 : index
    %c0_15 = arith.constant 0 : index
    %24 = vector.load %arg15[%c0_14, %c0_15] : memref<32x128xf32, #tpu.memory_space<vmem>>, vector<32x128xf32>
    %c0_16 = arith.constant 0 : index
    %c0_17 = arith.constant 0 : index
    %25 = vector.load %arg16[%c0_16, %c0_17] : memref<128x32xf32, #tpu.memory_space<vmem>>, vector<128x32xf32>
    %c0_18 = arith.constant 0 : index
    %c0_19 = arith.constant 0 : index
    %26 = vector.load %arg17[%c0_18, %c0_19] : memref<128x32xf32, #tpu.memory_space<vmem>>, vector<128x32xf32>
    %c0_20 = arith.constant 0 : index
    %c0_21 = arith.constant 0 : index
    %27 = vector.load %arg18[%c0_20, %c0_21] : memref<128x128xf32, #tpu.memory_space<vmem>>, vector<128x128xf32>
    %c0_22 = arith.constant 0 : index
    %c0_23 = arith.constant 0 : index
    %c0_24 = arith.constant 0 : index
    %28 = vector.load %arg10[%c0_22, %c0_23, %c0_24] : memref<2x6x32xf32, #tpu.memory_space<vmem>>, vector<1x6x32xf32>
    %29 = vector.shape_cast %28 : vector<1x6x32xf32> to vector<6x32xf32>
    %30 = vector.extract_strided_slice %29 {offsets = [0, 0], sizes = [1, 32], strides = [1, 1]} : vector<6x32xf32> to vector<1x32xf32>
    %31 = vector.extract_strided_slice %29 {offsets = [1, 0], sizes = [1, 32], strides = [1, 1]} : vector<6x32xf32> to vector<1x32xf32>
    %32 = vector.extract_strided_slice %29 {offsets = [2, 0], sizes = [1, 32], strides = [1, 1]} : vector<6x32xf32> to vector<1x32xf32>
    %33 = vector.extract_strided_slice %29 {offsets = [3, 0], sizes = [1, 32], strides = [1, 1]} : vector<6x32xf32> to vector<1x32xf32>
    %34 = vector.extract_strided_slice %29 {offsets = [4, 0], sizes = [1, 32], strides = [1, 1]} : vector<6x32xf32> to vector<1x32xf32>
    %35 = vector.extract_strided_slice %29 {offsets = [5, 0], sizes = [1, 32], strides = [1, 1]} : vector<6x32xf32> to vector<1x32xf32>
    %c0_25 = arith.constant 0 : index
    %c0_26 = arith.constant 0 : index
    %c0_27 = arith.constant 0 : index
    %36 = vector.load %arg4[%c0_25, %c0_26, %c0_27] : memref<2x32x96xf32, #tpu.memory_space<vmem>>, vector<1x32x96xf32>
    %37 = vector.shape_cast %36 : vector<1x32x96xf32> to vector<32x96xf32>
    %cst_28 = arith.constant dense<0.000000e+00> : vector<32x96xf32>
    %38 = tpu.matmul %23, %37, %cst_28 {dimension_numbers = #tpu.dot_dimension_numbers<[1], [0], [0], [1], [0, 0, 1, 1], [], []>} : vector<32x32xf32>, vector<32x96xf32>, vector<32x96xf32> -> vector<32x96xf32>
    %c0_29 = arith.constant 0 : index
    %c0_30 = arith.constant 0 : index
    %c0_31 = arith.constant 0 : index
    %39 = vector.load %arg5[%c0_29, %c0_30, %c0_31] : memref<2x1x96xf32, #tpu.memory_space<vmem>>, vector<1x1x96xf32>
    %40 = vector.shape_cast %39 : vector<1x1x96xf32> to vector<1x96xf32>
    %41 = vector.broadcast %40 : vector<1x96xf32> to vector<32x96xf32>
    %42 = arith.addf %38, %41 : vector<32x96xf32>
    %43 = vector.extract_strided_slice %42 {offsets = [0, 0], sizes = [32, 32], strides = [1, 1]} : vector<32x96xf32> to vector<32x32xf32>
    %44 = vector.extract_strided_slice %42 {offsets = [0, 32], sizes = [32, 32], strides = [1, 1]} : vector<32x96xf32> to vector<32x32xf32>
    %45 = vector.extract_strided_slice %42 {offsets = [0, 64], sizes = [32, 32], strides = [1, 1]} : vector<32x96xf32> to vector<32x32xf32>
    %cst_32 = arith.constant dense<0.000000e+00> : vector<128x32xf32>
    %46 = tpu.matmul %25, %44, %cst_32 {dimension_numbers = #tpu.dot_dimension_numbers<[1], [0], [0], [1], [0, 0, 1, 1], [], []>} : vector<128x32xf32>, vector<32x32xf32>, vector<128x32xf32> -> vector<128x32xf32>
    %47 = arith.mulf %46, %26 : vector<128x32xf32>
    %cst_33 = arith.constant dense<0.000000e+00> : vector<128x32xf32>
    %48 = tpu.matmul %25, %45, %cst_33 {dimension_numbers = #tpu.dot_dimension_numbers<[1], [0], [0], [1], [0, 0, 1, 1], [], []>} : vector<128x32xf32>, vector<32x32xf32>, vector<128x32xf32> -> vector<128x32xf32>
    %49 = arith.mulf %48, %26 : vector<128x32xf32>
    %cst_34 = arith.constant dense<0.000000e+00> : vector<32x128xf32>
    %50 = tpu.matmul %43, %47, %cst_34 {dimension_numbers = #tpu.dot_dimension_numbers<[1], [1], [0], [0], [0, 0, 1, 0], [], []>} : vector<32x32xf32>, vector<128x32xf32>, vector<32x128xf32> -> vector<32x128xf32>
    %51 = arith.addf %50, %24 : vector<32x128xf32>
    %cst_35 = arith.constant dense<0xFF800000> : vector<32xf32>
    %52 = vector.multi_reduction <maximumf>, %51, %cst_35 [1] : vector<32x128xf32> to vector<32xf32>
    %53 = vector.shape_cast %52 : vector<32xf32> to vector<32x1xf32>
    %54 = vector.broadcast %53 : vector<32x1xf32> to vector<32x128xf32>
    %55 = arith.subf %51, %54 : vector<32x128xf32>
    %56 = math.exp %55 : vector<32x128xf32>
    %cst_36 = arith.constant dense<0.000000e+00> : vector<32x128xf32>
    %57 = tpu.matmul %56, %27, %cst_36 {dimension_numbers = #tpu.dot_dimension_numbers<[1], [0], [0], [1], [0, 0, 1, 1], [], []>} : vector<32x128xf32>, vector<128x128xf32>, vector<32x128xf32> -> vector<32x128xf32>
    %58 = tpu.reciprocal %57 {approx = true} : vector<32x128xf32> -> vector<32x128xf32>
    %59 = arith.mulf %56, %58 : vector<32x128xf32>
    %cst_37 = arith.constant dense<0.000000e+00> : vector<32x32xf32>
    %60 = tpu.matmul %59, %49, %cst_37 {dimension_numbers = #tpu.dot_dimension_numbers<[1], [0], [0], [1], [0, 0, 1, 1], [], []>} : vector<32x128xf32>, vector<128x32xf32>, vector<32x32xf32> -> vector<32x32xf32>
    %c0_38 = arith.constant 0 : index
    %c0_39 = arith.constant 0 : index
    %c0_40 = arith.constant 0 : index
    %61 = vector.load %arg6[%c0_38, %c0_39, %c0_40] : memref<2x32x32xf32, #tpu.memory_space<vmem>>, vector<1x32x32xf32>
    %62 = vector.shape_cast %61 : vector<1x32x32xf32> to vector<32x32xf32>
    %cst_41 = arith.constant dense<0.000000e+00> : vector<32x32xf32>
    %63 = tpu.matmul %60, %62, %cst_41 {dimension_numbers = #tpu.dot_dimension_numbers<[1], [0], [0], [1], [0, 0, 1, 1], [], []>} : vector<32x32xf32>, vector<32x32xf32>, vector<32x32xf32> -> vector<32x32xf32>
    %64 = vector.broadcast %30 : vector<1x32xf32> to vector<32x32xf32>
    %65 = arith.addf %63, %64 : vector<32x32xf32>
    %66 = arith.addf %23, %65 : vector<32x32xf32>
    %cst_42 = arith.constant dense<0.000000e+00> : vector<32xf32>
    %67 = vector.multi_reduction <add>, %66, %cst_42 [1] : vector<32x32xf32> to vector<32xf32>
    %68 = vector.shape_cast %67 : vector<32xf32> to vector<32x1xf32>
    %cst_43 = arith.constant 3.200000e+01 : f32
    %69 = vector.broadcast %cst_43 : f32 to vector<32x1xf32>
    %70 = arith.divf %68, %69 : vector<32x1xf32>
    %71 = vector.broadcast %70 : vector<32x1xf32> to vector<32x32xf32>
    %72 = arith.subf %66, %71 : vector<32x32xf32>
    %73 = arith.mulf %72, %72 : vector<32x32xf32>
    %cst_44 = arith.constant dense<0.000000e+00> : vector<32xf32>
    %74 = vector.multi_reduction <add>, %73, %cst_44 [1] : vector<32x32xf32> to vector<32xf32>
    %75 = vector.shape_cast %74 : vector<32xf32> to vector<32x1xf32>
    %cst_45 = arith.constant 3.200000e+01 : f32
    %76 = vector.broadcast %cst_45 : f32 to vector<32x1xf32>
    %77 = arith.divf %75, %76 : vector<32x1xf32>
    %cst_46 = arith.constant 9.99999974E-6 : f32
    %78 = vector.broadcast %cst_46 : f32 to vector<32x1xf32>
    %79 = arith.addf %77, %78 : vector<32x1xf32>
    %80 = math.rsqrt %79 : vector<32x1xf32>
    %81 = vector.broadcast %80 : vector<32x1xf32> to vector<32x32xf32>
    %82 = arith.mulf %72, %81 : vector<32x32xf32>
    %83 = vector.broadcast %32 : vector<1x32xf32> to vector<32x32xf32>
    %84 = arith.mulf %82, %83 : vector<32x32xf32>
    %85 = vector.broadcast %33 : vector<1x32xf32> to vector<32x32xf32>
    %86 = arith.addf %84, %85 : vector<32x32xf32>
    %c0_47 = arith.constant 0 : index
    %c0_48 = arith.constant 0 : index
    %c0_49 = arith.constant 0 : index
    %87 = vector.load %arg7[%c0_47, %c0_48, %c0_49] : memref<2x32x64xf32, #tpu.memory_space<vmem>>, vector<1x32x64xf32>
    %88 = vector.shape_cast %87 : vector<1x32x64xf32> to vector<32x64xf32>
    %cst_50 = arith.constant dense<0.000000e+00> : vector<32x64xf32>
    %89 = tpu.matmul %86, %88, %cst_50 {dimension_numbers = #tpu.dot_dimension_numbers<[1], [0], [0], [1], [0, 0, 1, 1], [], []>} : vector<32x32xf32>, vector<32x64xf32>, vector<32x64xf32> -> vector<32x64xf32>
    %c0_51 = arith.constant 0 : index
    %c0_52 = arith.constant 0 : index
    %c0_53 = arith.constant 0 : index
    %90 = vector.load %arg8[%c0_51, %c0_52, %c0_53] : memref<2x1x64xf32, #tpu.memory_space<vmem>>, vector<1x1x64xf32>
    %91 = vector.shape_cast %90 : vector<1x1x64xf32> to vector<1x64xf32>
    %92 = vector.broadcast %91 : vector<1x64xf32> to vector<32x64xf32>
    %93 = arith.addf %89, %92 : vector<32x64xf32>
    %cst_54 = arith.constant 0.000000e+00 : f32
    %94 = vector.broadcast %cst_54 : f32 to vector<32x64xf32>
    %95 = arith.maximumf %93, %94 : vector<32x64xf32>
    %c0_55 = arith.constant 0 : index
    %c0_56 = arith.constant 0 : index
    %c0_57 = arith.constant 0 : index
    %96 = vector.load %arg9[%c0_55, %c0_56, %c0_57] : memref<2x64x32xf32, #tpu.memory_space<vmem>>, vector<1x64x32xf32>
    %97 = vector.shape_cast %96 : vector<1x64x32xf32> to vector<64x32xf32>
    %cst_58 = arith.constant dense<0.000000e+00> : vector<32x32xf32>
    %98 = tpu.matmul %95, %97, %cst_58 {dimension_numbers = #tpu.dot_dimension_numbers<[1], [0], [0], [1], [0, 0, 1, 1], [], []>} : vector<32x64xf32>, vector<64x32xf32>, vector<32x32xf32> -> vector<32x32xf32>
    %99 = vector.broadcast %31 : vector<1x32xf32> to vector<32x32xf32>
    %100 = arith.addf %98, %99 : vector<32x32xf32>
    %101 = arith.addf %86, %100 : vector<32x32xf32>
    %cst_59 = arith.constant dense<0.000000e+00> : vector<32xf32>
    %102 = vector.multi_reduction <add>, %101, %cst_59 [1] : vector<32x32xf32> to vector<32xf32>
    %103 = vector.shape_cast %102 : vector<32xf32> to vector<32x1xf32>
    %cst_60 = arith.constant 3.200000e+01 : f32
    %104 = vector.broadcast %cst_60 : f32 to vector<32x1xf32>
    %105 = arith.divf %103, %104 : vector<32x1xf32>
    %106 = vector.broadcast %105 : vector<32x1xf32> to vector<32x32xf32>
    %107 = arith.subf %101, %106 : vector<32x32xf32>
    %108 = arith.mulf %107, %107 : vector<32x32xf32>
    %cst_61 = arith.constant dense<0.000000e+00> : vector<32xf32>
    %109 = vector.multi_reduction <add>, %108, %cst_61 [1] : vector<32x32xf32> to vector<32xf32>
    %110 = vector.shape_cast %109 : vector<32xf32> to vector<32x1xf32>
    %cst_62 = arith.constant 3.200000e+01 : f32
    %111 = vector.broadcast %cst_62 : f32 to vector<32x1xf32>
    %112 = arith.divf %110, %111 : vector<32x1xf32>
    %cst_63 = arith.constant 9.99999974E-6 : f32
    %113 = vector.broadcast %cst_63 : f32 to vector<32x1xf32>
    %114 = arith.addf %112, %113 : vector<32x1xf32>
    %115 = math.rsqrt %114 : vector<32x1xf32>
    %116 = vector.broadcast %115 : vector<32x1xf32> to vector<32x32xf32>
    %117 = arith.mulf %107, %116 : vector<32x32xf32>
    %118 = vector.broadcast %34 : vector<1x32xf32> to vector<32x32xf32>
    %119 = arith.mulf %117, %118 : vector<32x32xf32>
    %120 = vector.broadcast %35 : vector<1x32xf32> to vector<32x32xf32>
    %121 = arith.addf %119, %120 : vector<32x32xf32>
    %c1 = arith.constant 1 : index
    %c0_64 = arith.constant 0 : index
    %c0_65 = arith.constant 0 : index
    %122 = vector.load %arg10[%c1, %c0_64, %c0_65] : memref<2x6x32xf32, #tpu.memory_space<vmem>>, vector<1x6x32xf32>
    %123 = vector.shape_cast %122 : vector<1x6x32xf32> to vector<6x32xf32>
    %124 = vector.extract_strided_slice %123 {offsets = [0, 0], sizes = [1, 32], strides = [1, 1]} : vector<6x32xf32> to vector<1x32xf32>
    %125 = vector.extract_strided_slice %123 {offsets = [1, 0], sizes = [1, 32], strides = [1, 1]} : vector<6x32xf32> to vector<1x32xf32>
    %126 = vector.extract_strided_slice %123 {offsets = [2, 0], sizes = [1, 32], strides = [1, 1]} : vector<6x32xf32> to vector<1x32xf32>
    %127 = vector.extract_strided_slice %123 {offsets = [3, 0], sizes = [1, 32], strides = [1, 1]} : vector<6x32xf32> to vector<1x32xf32>
    %128 = vector.extract_strided_slice %123 {offsets = [4, 0], sizes = [1, 32], strides = [1, 1]} : vector<6x32xf32> to vector<1x32xf32>
    %129 = vector.extract_strided_slice %123 {offsets = [5, 0], sizes = [1, 32], strides = [1, 1]} : vector<6x32xf32> to vector<1x32xf32>
    %c1_66 = arith.constant 1 : index
    %c0_67 = arith.constant 0 : index
    %c0_68 = arith.constant 0 : index
    %130 = vector.load %arg4[%c1_66, %c0_67, %c0_68] : memref<2x32x96xf32, #tpu.memory_space<vmem>>, vector<1x32x96xf32>
    %131 = vector.shape_cast %130 : vector<1x32x96xf32> to vector<32x96xf32>
    %cst_69 = arith.constant dense<0.000000e+00> : vector<32x96xf32>
    %132 = tpu.matmul %121, %131, %cst_69 {dimension_numbers = #tpu.dot_dimension_numbers<[1], [0], [0], [1], [0, 0, 1, 1], [], []>} : vector<32x32xf32>, vector<32x96xf32>, vector<32x96xf32> -> vector<32x96xf32>
    %c1_70 = arith.constant 1 : index
    %c0_71 = arith.constant 0 : index
    %c0_72 = arith.constant 0 : index
    %133 = vector.load %arg5[%c1_70, %c0_71, %c0_72] : memref<2x1x96xf32, #tpu.memory_space<vmem>>, vector<1x1x96xf32>
    %134 = vector.shape_cast %133 : vector<1x1x96xf32> to vector<1x96xf32>
    %135 = vector.broadcast %134 : vector<1x96xf32> to vector<32x96xf32>
    %136 = arith.addf %132, %135 : vector<32x96xf32>
    %137 = vector.extract_strided_slice %136 {offsets = [0, 0], sizes = [32, 32], strides = [1, 1]} : vector<32x96xf32> to vector<32x32xf32>
    %138 = vector.extract_strided_slice %136 {offsets = [0, 32], sizes = [32, 32], strides = [1, 1]} : vector<32x96xf32> to vector<32x32xf32>
    %139 = vector.extract_strided_slice %136 {offsets = [0, 64], sizes = [32, 32], strides = [1, 1]} : vector<32x96xf32> to vector<32x32xf32>
    %cst_73 = arith.constant dense<0.000000e+00> : vector<128x32xf32>
    %140 = tpu.matmul %25, %138, %cst_73 {dimension_numbers = #tpu.dot_dimension_numbers<[1], [0], [0], [1], [0, 0, 1, 1], [], []>} : vector<128x32xf32>, vector<32x32xf32>, vector<128x32xf32> -> vector<128x32xf32>
    %141 = arith.mulf %140, %26 : vector<128x32xf32>
    %cst_74 = arith.constant dense<0.000000e+00> : vector<128x32xf32>
    %142 = tpu.matmul %25, %139, %cst_74 {dimension_numbers = #tpu.dot_dimension_numbers<[1], [0], [0], [1], [0, 0, 1, 1], [], []>} : vector<128x32xf32>, vector<32x32xf32>, vector<128x32xf32> -> vector<128x32xf32>
    %143 = arith.mulf %142, %26 : vector<128x32xf32>
    %cst_75 = arith.constant dense<0.000000e+00> : vector<32x128xf32>
    %144 = tpu.matmul %137, %141, %cst_75 {dimension_numbers = #tpu.dot_dimension_numbers<[1], [1], [0], [0], [0, 0, 1, 0], [], []>} : vector<32x32xf32>, vector<128x32xf32>, vector<32x128xf32> -> vector<32x128xf32>
    %145 = arith.addf %144, %24 : vector<32x128xf32>
    %cst_76 = arith.constant dense<0xFF800000> : vector<32xf32>
    %146 = vector.multi_reduction <maximumf>, %145, %cst_76 [1] : vector<32x128xf32> to vector<32xf32>
    %147 = vector.shape_cast %146 : vector<32xf32> to vector<32x1xf32>
    %148 = vector.broadcast %147 : vector<32x1xf32> to vector<32x128xf32>
    %149 = arith.subf %145, %148 : vector<32x128xf32>
    %150 = math.exp %149 : vector<32x128xf32>
    %cst_77 = arith.constant dense<0.000000e+00> : vector<32x128xf32>
    %151 = tpu.matmul %150, %27, %cst_77 {dimension_numbers = #tpu.dot_dimension_numbers<[1], [0], [0], [1], [0, 0, 1, 1], [], []>} : vector<32x128xf32>, vector<128x128xf32>, vector<32x128xf32> -> vector<32x128xf32>
    %152 = tpu.reciprocal %151 {approx = true} : vector<32x128xf32> -> vector<32x128xf32>
    %153 = arith.mulf %150, %152 : vector<32x128xf32>
    %cst_78 = arith.constant dense<0.000000e+00> : vector<32x32xf32>
    %154 = tpu.matmul %153, %143, %cst_78 {dimension_numbers = #tpu.dot_dimension_numbers<[1], [0], [0], [1], [0, 0, 1, 1], [], []>} : vector<32x128xf32>, vector<128x32xf32>, vector<32x32xf32> -> vector<32x32xf32>
    %c1_79 = arith.constant 1 : index
    %c0_80 = arith.constant 0 : index
    %c0_81 = arith.constant 0 : index
    %155 = vector.load %arg6[%c1_79, %c0_80, %c0_81] : memref<2x32x32xf32, #tpu.memory_space<vmem>>, vector<1x32x32xf32>
    %156 = vector.shape_cast %155 : vector<1x32x32xf32> to vector<32x32xf32>
    %cst_82 = arith.constant dense<0.000000e+00> : vector<32x32xf32>
    %157 = tpu.matmul %154, %156, %cst_82 {dimension_numbers = #tpu.dot_dimension_numbers<[1], [0], [0], [1], [0, 0, 1, 1], [], []>} : vector<32x32xf32>, vector<32x32xf32>, vector<32x32xf32> -> vector<32x32xf32>
    %158 = vector.broadcast %124 : vector<1x32xf32> to vector<32x32xf32>
    %159 = arith.addf %157, %158 : vector<32x32xf32>
    %160 = arith.addf %121, %159 : vector<32x32xf32>
    %cst_83 = arith.constant dense<0.000000e+00> : vector<32xf32>
    %161 = vector.multi_reduction <add>, %160, %cst_83 [1] : vector<32x32xf32> to vector<32xf32>
    %162 = vector.shape_cast %161 : vector<32xf32> to vector<32x1xf32>
    %cst_84 = arith.constant 3.200000e+01 : f32
    %163 = vector.broadcast %cst_84 : f32 to vector<32x1xf32>
    %164 = arith.divf %162, %163 : vector<32x1xf32>
    %165 = vector.broadcast %164 : vector<32x1xf32> to vector<32x32xf32>
    %166 = arith.subf %160, %165 : vector<32x32xf32>
    %167 = arith.mulf %166, %166 : vector<32x32xf32>
    %cst_85 = arith.constant dense<0.000000e+00> : vector<32xf32>
    %168 = vector.multi_reduction <add>, %167, %cst_85 [1] : vector<32x32xf32> to vector<32xf32>
    %169 = vector.shape_cast %168 : vector<32xf32> to vector<32x1xf32>
    %cst_86 = arith.constant 3.200000e+01 : f32
    %170 = vector.broadcast %cst_86 : f32 to vector<32x1xf32>
    %171 = arith.divf %169, %170 : vector<32x1xf32>
    %cst_87 = arith.constant 9.99999974E-6 : f32
    %172 = vector.broadcast %cst_87 : f32 to vector<32x1xf32>
    %173 = arith.addf %171, %172 : vector<32x1xf32>
    %174 = math.rsqrt %173 : vector<32x1xf32>
    %175 = vector.broadcast %174 : vector<32x1xf32> to vector<32x32xf32>
    %176 = arith.mulf %166, %175 : vector<32x32xf32>
    %177 = vector.broadcast %126 : vector<1x32xf32> to vector<32x32xf32>
    %178 = arith.mulf %176, %177 : vector<32x32xf32>
    %179 = vector.broadcast %127 : vector<1x32xf32> to vector<32x32xf32>
    %180 = arith.addf %178, %179 : vector<32x32xf32>
    %c1_88 = arith.constant 1 : index
    %c0_89 = arith.constant 0 : index
    %c0_90 = arith.constant 0 : index
    %181 = vector.load %arg7[%c1_88, %c0_89, %c0_90] : memref<2x32x64xf32, #tpu.memory_space<vmem>>, vector<1x32x64xf32>
    %182 = vector.shape_cast %181 : vector<1x32x64xf32> to vector<32x64xf32>
    %cst_91 = arith.constant dense<0.000000e+00> : vector<32x64xf32>
    %183 = tpu.matmul %180, %182, %cst_91 {dimension_numbers = #tpu.dot_dimension_numbers<[1], [0], [0], [1], [0, 0, 1, 1], [], []>} : vector<32x32xf32>, vector<32x64xf32>, vector<32x64xf32> -> vector<32x64xf32>
    %c1_92 = arith.constant 1 : index
    %c0_93 = arith.constant 0 : index
    %c0_94 = arith.constant 0 : index
    %184 = vector.load %arg8[%c1_92, %c0_93, %c0_94] : memref<2x1x64xf32, #tpu.memory_space<vmem>>, vector<1x1x64xf32>
    %185 = vector.shape_cast %184 : vector<1x1x64xf32> to vector<1x64xf32>
    %186 = vector.broadcast %185 : vector<1x64xf32> to vector<32x64xf32>
    %187 = arith.addf %183, %186 : vector<32x64xf32>
    %cst_95 = arith.constant 0.000000e+00 : f32
    %188 = vector.broadcast %cst_95 : f32 to vector<32x64xf32>
    %189 = arith.maximumf %187, %188 : vector<32x64xf32>
    %c1_96 = arith.constant 1 : index
    %c0_97 = arith.constant 0 : index
    %c0_98 = arith.constant 0 : index
    %190 = vector.load %arg9[%c1_96, %c0_97, %c0_98] : memref<2x64x32xf32, #tpu.memory_space<vmem>>, vector<1x64x32xf32>
    %191 = vector.shape_cast %190 : vector<1x64x32xf32> to vector<64x32xf32>
    %cst_99 = arith.constant dense<0.000000e+00> : vector<32x32xf32>
    %192 = tpu.matmul %189, %191, %cst_99 {dimension_numbers = #tpu.dot_dimension_numbers<[1], [0], [0], [1], [0, 0, 1, 1], [], []>} : vector<32x64xf32>, vector<64x32xf32>, vector<32x32xf32> -> vector<32x32xf32>
    %193 = vector.broadcast %125 : vector<1x32xf32> to vector<32x32xf32>
    %194 = arith.addf %192, %193 : vector<32x32xf32>
    %195 = arith.addf %180, %194 : vector<32x32xf32>
    %cst_100 = arith.constant dense<0.000000e+00> : vector<32xf32>
    %196 = vector.multi_reduction <add>, %195, %cst_100 [1] : vector<32x32xf32> to vector<32xf32>
    %197 = vector.shape_cast %196 : vector<32xf32> to vector<32x1xf32>
    %cst_101 = arith.constant 3.200000e+01 : f32
    %198 = vector.broadcast %cst_101 : f32 to vector<32x1xf32>
    %199 = arith.divf %197, %198 : vector<32x1xf32>
    %200 = vector.broadcast %199 : vector<32x1xf32> to vector<32x32xf32>
    %201 = arith.subf %195, %200 : vector<32x32xf32>
    %202 = arith.mulf %201, %201 : vector<32x32xf32>
    %cst_102 = arith.constant dense<0.000000e+00> : vector<32xf32>
    %203 = vector.multi_reduction <add>, %202, %cst_102 [1] : vector<32x32xf32> to vector<32xf32>
    %204 = vector.shape_cast %203 : vector<32xf32> to vector<32x1xf32>
    %cst_103 = arith.constant 3.200000e+01 : f32
    %205 = vector.broadcast %cst_103 : f32 to vector<32x1xf32>
    %206 = arith.divf %204, %205 : vector<32x1xf32>
    %cst_104 = arith.constant 9.99999974E-6 : f32
    %207 = vector.broadcast %cst_104 : f32 to vector<32x1xf32>
    %208 = arith.addf %206, %207 : vector<32x1xf32>
    %209 = math.rsqrt %208 : vector<32x1xf32>
    %210 = vector.broadcast %209 : vector<32x1xf32> to vector<32x32xf32>
    %211 = arith.mulf %201, %210 : vector<32x32xf32>
    %212 = vector.broadcast %128 : vector<1x32xf32> to vector<32x32xf32>
    %213 = arith.mulf %211, %212 : vector<32x32xf32>
    %214 = vector.broadcast %129 : vector<1x32xf32> to vector<32x32xf32>
    %215 = arith.addf %213, %214 : vector<32x32xf32>
    %c0_105 = arith.constant 0 : index
    %c0_106 = arith.constant 0 : index
    %216 = vector.load %arg11[%c0_105, %c0_106] : memref<2x32xf32, #tpu.memory_space<vmem>>, vector<2x32xf32>
    %217 = vector.extract_strided_slice %216 {offsets = [0, 0], sizes = [1, 32], strides = [1, 1]} : vector<2x32xf32> to vector<1x32xf32>
    %218 = vector.extract_strided_slice %216 {offsets = [1, 0], sizes = [1, 32], strides = [1, 1]} : vector<2x32xf32> to vector<1x32xf32>
    %cst_107 = arith.constant dense<0.000000e+00> : vector<32xf32>
    %219 = vector.multi_reduction <add>, %215, %cst_107 [1] : vector<32x32xf32> to vector<32xf32>
    %220 = vector.shape_cast %219 : vector<32xf32> to vector<32x1xf32>
    %cst_108 = arith.constant 3.200000e+01 : f32
    %221 = vector.broadcast %cst_108 : f32 to vector<32x1xf32>
    %222 = arith.divf %220, %221 : vector<32x1xf32>
    %223 = vector.broadcast %222 : vector<32x1xf32> to vector<32x32xf32>
    %224 = arith.subf %215, %223 : vector<32x32xf32>
    %225 = arith.mulf %224, %224 : vector<32x32xf32>
    %cst_109 = arith.constant dense<0.000000e+00> : vector<32xf32>
    %226 = vector.multi_reduction <add>, %225, %cst_109 [1] : vector<32x32xf32> to vector<32xf32>
    %227 = vector.shape_cast %226 : vector<32xf32> to vector<32x1xf32>
    %cst_110 = arith.constant 3.200000e+01 : f32
    %228 = vector.broadcast %cst_110 : f32 to vector<32x1xf32>
    %229 = arith.divf %227, %228 : vector<32x1xf32>
    %cst_111 = arith.constant 9.99999974E-6 : f32
    %230 = vector.broadcast %cst_111 : f32 to vector<32x1xf32>
    %231 = arith.addf %229, %230 : vector<32x1xf32>
    %232 = math.rsqrt %231 : vector<32x1xf32>
    %233 = vector.broadcast %232 : vector<32x1xf32> to vector<32x32xf32>
    %234 = arith.mulf %224, %233 : vector<32x32xf32>
    %235 = vector.broadcast %217 : vector<1x32xf32> to vector<32x32xf32>
    %236 = arith.mulf %234, %235 : vector<32x32xf32>
    %237 = vector.broadcast %218 : vector<1x32xf32> to vector<32x32xf32>
    %238 = arith.addf %236, %237 : vector<32x32xf32>
    %c0_112 = arith.constant 0 : index
    %c0_113 = arith.constant 0 : index
    %239 = vector.load %arg12[%c0_112, %c0_113] : memref<32x8xf32, #tpu.memory_space<vmem>>, vector<32x8xf32>
    %cst_114 = arith.constant dense<0.000000e+00> : vector<32x8xf32>
    %240 = tpu.matmul %238, %239, %cst_114 {dimension_numbers = #tpu.dot_dimension_numbers<[1], [0], [0], [1], [0, 0, 1, 1], [], []>} : vector<32x32xf32>, vector<32x8xf32>, vector<32x8xf32> -> vector<32x8xf32>
    %c0_115 = arith.constant 0 : index
    %c0_116 = arith.constant 0 : index
    %241 = vector.load %arg13[%c0_115, %c0_116] : memref<1x8xf32, #tpu.memory_space<vmem>>, vector<1x8xf32>
    %242 = vector.broadcast %241 : vector<1x8xf32> to vector<32x8xf32>
    %243 = arith.addf %240, %242 : vector<32x8xf32>
    %244 = vector.broadcast %14 : vector<32x1xf32> to vector<32x8xf32>
    %245 = arith.mulf %243, %244 : vector<32x8xf32>
    %246 = vector.broadcast %5 : vector<32x1xf32> to vector<32x8xf32>
    %247 = arith.addf %245, %246 : vector<32x8xf32>
    %c0_117 = arith.constant 0 : index
    %c0_118 = arith.constant 0 : index
    %248 = vector.load %arg19[%c0_117, %c0_118] : memref<8x128xf32, #tpu.memory_space<vmem>>, vector<8x128xf32>
    %cst_119 = arith.constant dense<0.000000e+00> : vector<32x128xf32>
    %249 = tpu.matmul %247, %248, %cst_119 {dimension_numbers = #tpu.dot_dimension_numbers<[1], [0], [0], [1], [0, 0, 1, 1], [], []>} : vector<32x8xf32>, vector<8x128xf32>, vector<32x128xf32> -> vector<32x128xf32>
    %c0_120 = arith.constant 0 : index
    %c0_121 = arith.constant 0 : index
    %250 = vector.load %arg20[%c0_120, %c0_121] : memref<32x128xf32, #tpu.memory_space<vmem>>, vector<32x128xf32>
    %251 = arith.mulf %249, %250 : vector<32x128xf32>
    %c0_122 = arith.constant 0 : index
    %c0_123 = arith.constant 0 : index
    %252 = vector.load %arg21[%c0_122, %c0_123] : memref<2x32xf32, #tpu.memory_space<vmem>>, vector<2x32xf32>
    %cst_124 = arith.constant dense<0.000000e+00> : vector<2x128xf32>
    %253 = tpu.matmul %252, %251, %cst_124 {dimension_numbers = #tpu.dot_dimension_numbers<[1], [0], [0], [1], [0, 0, 1, 1], [], []>} : vector<2x32xf32>, vector<32x128xf32>, vector<2x128xf32> -> vector<2x128xf32>
    %c0_125 = arith.constant 0 : index
    %c0_126 = arith.constant 0 : index
    %c0_127 = arith.constant 0 : index
    %254 = vector.load %arg22[%c0_125, %c0_126, %c0_127] : memref<1x2x128xf32, #tpu.memory_space<vmem>>, vector<1x2x128xf32>
    %255 = vector.shape_cast %254 : vector<1x2x128xf32> to vector<2x128xf32>
    %256 = vector.shape_cast %253 : vector<2x128xf32> to vector<1x2x128xf32>
    tpu.vector_store %arg22[%c0_125, %c0_126, %c0_127], %256 {strides = array<i32>} : memref<1x2x128xf32, #tpu.memory_space<vmem>>, vector<1x2x128xf32>,
    return
  }
  func.func @transform_0(%arg0: i32) -> (i32, i32, i32) {
    %c0_i32 = arith.constant 0 : i32
    %c0_i32_0 = arith.constant 0 : i32
    %c0_i32_1 = arith.constant 0 : i32
    return %arg0, %c0_i32, %c0_i32_0 : i32, i32, i32
  }
  func.func @transform_1(%arg0: i32) -> (i32, i32) {
    %c0_i32 = arith.constant 0 : i32
    %c0_i32_0 = arith.constant 0 : i32
    %c0_i32_1 = arith.constant 0 : i32
    return %c0_i32, %c0_i32_0 : i32, i32
  }
  func.func @transform_2(%arg0: i32) -> (i32, i32) {
    %c0_i32 = arith.constant 0 : i32
    %c0_i32_0 = arith.constant 0 : i32
    %c0_i32_1 = arith.constant 0 : i32
    return %c0_i32, %c0_i32_0 : i32, i32
  }
  func.func @transform_3(%arg0: i32) -> (i32, i32, i32) {
    %c0_i32 = arith.constant 0 : i32
    %c0_i32_0 = arith.constant 0 : i32
    %c0_i32_1 = arith.constant 0 : i32
    %c0_i32_2 = arith.constant 0 : i32
    return %c0_i32, %c0_i32_0, %c0_i32_1 : i32, i32, i32
  }
  func.func @transform_4(%arg0: i32) -> (i32, i32, i32) {
    %c0_i32 = arith.constant 0 : i32
    %c0_i32_0 = arith.constant 0 : i32
    %c0_i32_1 = arith.constant 0 : i32
    %c0_i32_2 = arith.constant 0 : i32
    return %c0_i32, %c0_i32_0, %c0_i32_1 : i32, i32, i32
  }
  func.func @transform_5(%arg0: i32) -> (i32, i32, i32) {
    %c0_i32 = arith.constant 0 : i32
    %c0_i32_0 = arith.constant 0 : i32
    %c0_i32_1 = arith.constant 0 : i32
    %c0_i32_2 = arith.constant 0 : i32
    return %c0_i32, %c0_i32_0, %c0_i32_1 : i32, i32, i32
  }
  func.func @transform_6(%arg0: i32) -> (i32, i32, i32) {
    %c0_i32 = arith.constant 0 : i32
    %c0_i32_0 = arith.constant 0 : i32
    %c0_i32_1 = arith.constant 0 : i32
    %c0_i32_2 = arith.constant 0 : i32
    return %c0_i32, %c0_i32_0, %c0_i32_1 : i32, i32, i32
  }
  func.func @transform_7(%arg0: i32) -> (i32, i32, i32) {
    %c0_i32 = arith.constant 0 : i32
    %c0_i32_0 = arith.constant 0 : i32
    %c0_i32_1 = arith.constant 0 : i32
    %c0_i32_2 = arith.constant 0 : i32
    return %c0_i32, %c0_i32_0, %c0_i32_1 : i32, i32, i32
  }
  func.func @transform_8(%arg0: i32) -> (i32, i32, i32) {
    %c0_i32 = arith.constant 0 : i32
    %c0_i32_0 = arith.constant 0 : i32
    %c0_i32_1 = arith.constant 0 : i32
    %c0_i32_2 = arith.constant 0 : i32
    return %c0_i32, %c0_i32_0, %c0_i32_1 : i32, i32, i32
  }
  func.func @transform_9(%arg0: i32) -> (i32, i32, i32) {
    %c0_i32 = arith.constant 0 : i32
    %c0_i32_0 = arith.constant 0 : i32
    %c0_i32_1 = arith.constant 0 : i32
    %c0_i32_2 = arith.constant 0 : i32
    return %c0_i32, %c0_i32_0, %c0_i32_1 : i32, i32, i32
  }
  func.func @transform_10(%arg0: i32) -> (i32, i32) {
    %c0_i32 = arith.constant 0 : i32
    %c0_i32_0 = arith.constant 0 : i32
    %c0_i32_1 = arith.constant 0 : i32
    return %c0_i32, %c0_i32_0 : i32, i32
  }
  func.func @transform_11(%arg0: i32) -> (i32, i32) {
    %c0_i32 = arith.constant 0 : i32
    %c0_i32_0 = arith.constant 0 : i32
    %c0_i32_1 = arith.constant 0 : i32
    return %c0_i32, %c0_i32_0 : i32, i32
  }
  func.func @transform_12(%arg0: i32) -> (i32, i32) {
    %c0_i32 = arith.constant 0 : i32
    %c0_i32_0 = arith.constant 0 : i32
    %c0_i32_1 = arith.constant 0 : i32
    return %c0_i32, %c0_i32_0 : i32, i32
  }
  func.func @transform_13(%arg0: i32) -> (i32, i32) {
    %c0_i32 = arith.constant 0 : i32
    %c0_i32_0 = arith.constant 0 : i32
    %c0_i32_1 = arith.constant 0 : i32
    return %c0_i32, %c0_i32_0 : i32, i32
  }
  func.func @transform_14(%arg0: i32) -> (i32, i32) {
    %c0_i32 = arith.constant 0 : i32
    %c0_i32_0 = arith.constant 0 : i32
    %c0_i32_1 = arith.constant 0 : i32
    return %c0_i32, %c0_i32_0 : i32, i32
  }
  func.func @transform_15(%arg0: i32) -> (i32, i32) {
    %c0_i32 = arith.constant 0 : i32
    %c0_i32_0 = arith.constant 0 : i32
    %c0_i32_1 = arith.constant 0 : i32
    return %c0_i32, %c0_i32_0 : i32, i32
  }
  func.func @transform_16(%arg0: i32) -> (i32, i32) {
    %c0_i32 = arith.constant 0 : i32
    %c0_i32_0 = arith.constant 0 : i32
    %c0_i32_1 = arith.constant 0 : i32
    return %c0_i32, %c0_i32_0 : i32, i32
  }
  func.func @transform_17(%arg0: i32) -> (i32, i32) {
    %c0_i32 = arith.constant 0 : i32
    %c0_i32_0 = arith.constant 0 : i32
    %c0_i32_1 = arith.constant 0 : i32
    return %c0_i32, %c0_i32_0 : i32, i32
  }
  func.func @transform_18(%arg0: i32) -> (i32, i32) {
    %c0_i32 = arith.constant 0 : i32
    %c0_i32_0 = arith.constant 0 : i32
    %c0_i32_1 = arith.constant 0 : i32
    return %c0_i32, %c0_i32_0 : i32, i32
  }
  func.func @transform_19(%arg0: i32) -> (i32, i32) {
    %c0_i32 = arith.constant 0 : i32
    %c0_i32_0 = arith.constant 0 : i32
    %c0_i32_1 = arith.constant 0 : i32
    return %c0_i32, %c0_i32_0 : i32, i32
  }
  func.func @transform_20(%arg0: i32) -> (i32, i32) {
    %c0_i32 = arith.constant 0 : i32
    %c0_i32_0 = arith.constant 0 : i32
    %c0_i32_1 = arith.constant 0 : i32
    return %c0_i32, %c0_i32_0 : i32, i32
  }
  func.func @transform_21(%arg0: i32) -> (i32, i32, i32) {
    %c0_i32 = arith.constant 0 : i32
    %c0_i32_0 = arith.constant 0 : i32
    %c0_i32_1 = arith.constant 0 : i32
    return %arg0, %c0_i32, %c0_i32_0 : i32, i32, i32
  }
}

</mosaic_0001>

<llo_original>
// kernel: _lambda_.1
$region0: #{_lambda_.1}
  #allocation0 [shape = 'u32[]', space=smem, size = 0x4, offset = 0x4, fixed_abs, tag = 'smem constant byte address 0x4 - core index']
  #allocation1 [shape = 'u32[144,128]{1,0:T(1,128)}', space=vmem, size = 0x12000, scoped, tag = 'internal scratch']
  %s0 = inlined_call_operand.vmem [shape: f32[1,32,8], index: 0, kind: input, shape index: {}]
  %s1 = inlined_call_operand.hbm [shape: f32[8,32], index: 1, kind: input, shape index: {}]
  %s2 = inlined_call_operand.hbm [shape: f32[32,32], index: 2, kind: input, shape index: {}]
  %s3 = inlined_call_operand.hbm [shape: f32[2,32,96], index: 3, kind: input, shape index: {}]
  %s4 = inlined_call_operand.vmem [shape: f32[2,1,96], index: 4, kind: input, shape index: {}]
  %s5 = inlined_call_operand.hbm [shape: f32[2,32,32], index: 5, kind: input, shape index: {}]
  %s6 = inlined_call_operand.vmem [shape: f32[2,32,64], index: 6, kind: input, shape index: {}]
  %s7 = inlined_call_operand.vmem [shape: f32[2,1,64], index: 7, kind: input, shape index: {}]
  %s8 = inlined_call_operand.hbm [shape: f32[2,64,32], index: 8, kind: input, shape index: {}]
  %s9 = inlined_call_operand.hbm [shape: f32[2,6,32], index: 9, kind: input, shape index: {}]
  %s10 = inlined_call_operand.hbm [shape: f32[2,32], index: 10, kind: input, shape index: {}]
  %s11 = inlined_call_operand.hbm [shape: f32[32,8], index: 11, kind: input, shape index: {}]
  %s12 = inlined_call_operand.vmem [shape: f32[1,8], index: 12, kind: input, shape index: {}]
  %s13 = inlined_call_operand.hbm [shape: f32[32,32], index: 13, kind: input, shape index: {}]
  %s14 = inlined_call_operand.hbm [shape: f32[32,128], index: 14, kind: input, shape index: {}]
  %s15 = inlined_call_operand.hbm [shape: f32[128,32], index: 15, kind: input, shape index: {}]
  %s16 = inlined_call_operand.hbm [shape: f32[128,32], index: 16, kind: input, shape index: {}]
  %s17 = inlined_call_operand.hbm [shape: f32[128,128], index: 17, kind: input, shape index: {}]
  %s18 = inlined_call_operand.vmem [shape: f32[8,128], index: 18, kind: input, shape index: {}]
  %s19 = inlined_call_operand.vmem [shape: f32[32,128], index: 19, kind: input, shape index: {}]
  %s20 = inlined_call_operand.vmem [shape: f32[2,32], index: 20, kind: input, shape index: {}]
  %s21 = inlined_call_operand.vmem [shape: f32[1,2,128], index: 21, kind: output, shape index: {}]
  %s22 = sld [smem:[#allocation0]]
  $region146: #{_lambda_.1} parent=0
    _
  %s24 = ssub.s32 1, %s22
  %s25 = scalar_select 0, %s24, %s22
  $region1: #{_lambda_.1} parent=0
    #allocation2 [shape = 'u8[4096]{0}', space=vmem, size = 0x1000, scoped, tag = 'input window, operand 1, single buffered']
    #allocation3 [shape = 's32[1]{0}', space=sflag, size = 0x4, scoped, tag = 'scoped memory for _lambda_.1']
    #allocation4 [shape = 'u8[16384]{0}', space=vmem, size = 0x4000, scoped, tag = 'input window, operand 2, single buffered']
    #allocation5 [shape = 's32[1]{0}', space=sflag, size = 0x4, scoped, tag = 'scoped memory for _lambda_.1']
    #allocation6 [shape = 'u8[32768]{0}', space=vmem, size = 0x8000, scoped, tag = 'input window, operand 3, single buffered']
    #allocation7 [shape = 'u8[32768]{0}', space=vmem, size = 0x8000, scoped, tag = 'input window, operand 5, single buffered']
    #allocation8 [shape = 's32[1]{0}', space=sflag, size = 0x4, scoped, tag = 'scoped memory for _lambda_.1']
    #allocation9 [shape = 'u8[65536]{0}', space=vmem, size = 0x10000, scoped, tag = 'input window, operand 8, single buffered']
    #allocation10 [shape = 'u8[8192]{0}', space=vmem, size = 0x2000, scoped, tag = 'input window, operand 9, single buffered']
    #allocation11 [shape = 's32[1]{0}', space=sflag, size = 0x4, scoped, tag = 'scoped memory for _lambda_.1']
    #allocation12 [shape = 'u8[1024]{0}', space=vmem, size = 0x400, scoped, tag = 'input window, operand 10, single buffered']
    #allocation13 [shape = 'u8[16384]{0}', space=vmem, size = 0x4000, scoped, tag = 'input window, operand 11, single buffered']
    #allocation14 [shape = 's32[1]{0}', space=sflag, size = 0x4, scoped, tag = 'scoped memory for _lambda_.1']
    #allocation15 [shape = 'u8[16384]{0}', space=vmem, size = 0x4000, scoped, tag = 'input window, operand 13, single buffered']
    #allocation16 [shape = 'u8[16384]{0}', space=vmem, size = 0x4000, scoped, tag = 'input window, operand 14, single buffered']
    #allocation17 [shape = 's32[1]{0}', space=sflag, size = 0x4, scoped, tag = 'scoped memory for _lambda_.1']
    #allocation18 [shape = 'u8[65536]{0}', space=vmem, size = 0x10000, scoped, tag = 'input window, operand 15, single buffered']
    #allocation19 [shape = 'u8[65536]{0}', space=vmem, size = 0x10000, scoped, tag = 'input window, operand 16, single buffered']
    #allocation20 [shape = 's32[1]{0}', space=sflag, size = 0x4, scoped, tag = 'scoped memory for _lambda_.1']
    #allocation21 [shape = 'u8[65536]{0}', space=vmem, size = 0x10000, scoped, tag = 'input window, operand 17, single buffered']
    %26 = vsyncpa [#allocation3], 0
    %27 = vsyncpa [#allocation5], 0
    %28 = vsyncpa [#allocation8], 0
    %29 = vsyncpa [#allocation11], 0
    %30 = vsyncpa [#allocation14], 0
    %31 = vsyncpa [#allocation17], 0
    %32 = vsyncpa [#allocation20], 0
    // Predicated region
    $region2: #{_lambda_.1} parent=1 // pred_check
      _
    $region3: #{_lambda_.1} parent=1 // pred_check_branch
      %34 = sbr.rel (0) target = $region5
    $region4: #{_lambda_.1} parent=1 // pred_region
      _
    $region5: #{_lambda_.1} parent=1 // pred_fallthru
      _
    // Predicated region
    $region6: #{_lambda_.1} parent=1 // pred_check
      _
    $region7: #{_lambda_.1} parent=1 // pred_check_branch
      %36 = sbr.rel (0) target = $region9
    $region8: #{_lambda_.1} parent=1 // pred_region
      %s38 = ssub.s32 128, 128
      %39 = vsyncadd [#allocation3], %s38
      %s41 = sshll.u32 [#allocation2], 4
      %s42 = int_to_ptr.vmem [resolvable:$true] %s41
      %44 = dma.hbm_to_vmem [thread:$0]  %s1, 128, %s42, [#allocation3]
    $region9: #{_lambda_.1} parent=1 // pred_fallthru
      _
    // Predicated region
    $region10: #{_lambda_.1} parent=1 // pred_check
      _
    $region11: #{_lambda_.1} parent=1 // pred_check_branch
      %46 = sbr.rel (0) target = $region13
    $region12: #{_lambda_.1} parent=1 // pred_region
      %s48 = ssub.s32 512, 512
      %49 = vsyncadd [#allocation5], %s48
      %s50 = sshll.u32 [#allocation4], 4
      %s51 = int_to_ptr.vmem [resolvable:$true] %s50
      %56 = dma.hbm_to_vmem [thread:$0]  %s2, 512, %s51, [#allocation5], 128, 128, 8
    $region13: #{_lambda_.1} parent=1 // pred_fallthru
      _
    // Predicated region
    $region14: #{_lambda_.1} parent=1 // pred_check
      _
    $region15: #{_lambda_.1} parent=1 // pred_check_branch
      %58 = sbr.rel (0) target = $region17
    $region16: #{_lambda_.1} parent=1 // pred_region
      %s60 = ssub.s32 1024, 1024
      %61 = vsyncadd [#allocation5], %s60
      %s62 = sshll.u32 [#allocation6], 4
      %s63 = int_to_ptr.vmem [resolvable:$true] %s62
      %68 = dma.hbm_to_vmem [thread:$0]  %s3, 1024, %s63, [#allocation5], 128, 128, 8
    $region17: #{_lambda_.1} parent=1 // pred_fallthru
      _
    // Predicated region
    $region18: #{_lambda_.1} parent=1 // pred_check
      _
    $region19: #{_lambda_.1} parent=1 // pred_check_branch
      %70 = sbr.rel (0) target = $region21
    $region20: #{_lambda_.1} parent=1 // pred_region
      _
    $region21: #{_lambda_.1} parent=1 // pred_fallthru
      _
    // Predicated region
    $region22: #{_lambda_.1} parent=1 // pred_check
      _
    $region23: #{_lambda_.1} parent=1 // pred_check_branch
      %72 = sbr.rel (0) target = $region25
    $region24: #{_lambda_.1} parent=1 // pred_region
      %s74 = ssub.s32 1024, 1024
      %75 = vsyncadd [#allocation8], %s74
      %s76 = sshll.u32 [#allocation7], 4
      %s77 = int_to_ptr.vmem [resolvable:$true] %s76
      %82 = dma.hbm_to_vmem [thread:$0]  %s5, 1024, %s77, [#allocation8], 128, 128, 8
    $region25: #{_lambda_.1} parent=1 // pred_fallthru
      _
    // Predicated region
    $region26: #{_lambda_.1} parent=1 // pred_check
      _
    $region27: #{_lambda_.1} parent=1 // pred_check_branch
      %84 = sbr.rel (0) target = $region29
    $region28: #{_lambda_.1} parent=1 // pred_region
      _
    $region29: #{_lambda_.1} parent=1 // pred_fallthru
      _
    // Predicated region
    $region30: #{_lambda_.1} parent=1 // pred_check
      _
    $region31: #{_lambda_.1} parent=1 // pred_check_branch
      %86 = sbr.rel (0) target = $region33
    $region32: #{_lambda_.1} parent=1 // pred_region
      _
    $region33: #{_lambda_.1} parent=1 // pred_fallthru
      _
    // Predicated region
    $region34: #{_lambda_.1} parent=1 // pred_check
      _
    $region35: #{_lambda_.1} parent=1 // pred_check_branch
      %88 = sbr.rel (0) target = $region37
    $region36: #{_lambda_.1} parent=1 // pred_region
      %s90 = ssub.s32 2048, 2048
      %91 = vsyncadd [#allocation8], %s90
      %s92 = sshll.u32 [#allocation9], 4
      %s93 = int_to_ptr.vmem [resolvable:$true] %s92
      %98 = dma.hbm_to_vmem [thread:$0]  %s8, 2048, %s93, [#allocation8], 128, 128, 8
    $region37: #{_lambda_.1} parent=1 // pred_fallthru
      _
    // Predicated region
    $region38: #{_lambda_.1} parent=1 // pred_check
      _
    $region39: #{_lambda_.1} parent=1 // pred_check_branch
      %100 = sbr.rel (0) target = $region41
    $region40: #{_lambda_.1} parent=1 // pred_region
      %s102 = ssub.s32 256, 256
      %103 = vsyncadd [#allocation11], %s102
      %s104 = sshll.u32 [#allocation10], 4
      %s105 = int_to_ptr.vmem [resolvable:$true] %s104
      %110 = dma.hbm_to_vmem [thread:$0]  %s9, 256, %s105, [#allocation11], 128, 128, 8
    $region41: #{_lambda_.1} parent=1 // pred_fallthru
      _
    // Predicated region
    $region42: #{_lambda_.1} parent=1 // pred_check
      _
    $region43: #{_lambda_.1} parent=1 // pred_check_branch
      %112 = sbr.rel (0) target = $region45
    $region44: #{_lambda_.1} parent=1 // pred_region
      %s114 = ssub.s32 32, 32
      %115 = vsyncadd [#allocation11], %s114
      %s117 = sshll.u32 [#allocation12], 4
      %s118 = int_to_ptr.vmem [resolvable:$true] %s117
      %120 = dma.hbm_to_vmem [thread:$0]  %s10, 32, %s118, [#allocation11]
    $region45: #{_lambda_.1} parent=1 // pred_fallthru
      _
    // Predicated region
    $region46: #{_lambda_.1} parent=1 // pred_check
      _
    $region47: #{_lambda_.1} parent=1 // pred_check_branch
      %122 = sbr.rel (0) target = $region49
    $region48: #{_lambda_.1} parent=1 // pred_region
      %s124 = ssub.s32 512, 512
      %125 = vsyncadd [#allocation14], %s124
      %s126 = sshll.u32 [#allocation13], 4
      %s127 = int_to_ptr.vmem [resolvable:$true] %s126
      %132 = dma.hbm_to_vmem [thread:$0]  %s11, 512, %s127, [#allocation14], 128, 128, 8
    $region49: #{_lambda_.1} parent=1 // pred_fallthru
      _
    // Predicated region
    $region50: #{_lambda_.1} parent=1 // pred_check
      _
    $region51: #{_lambda_.1} parent=1 // pred_check_branch
      %134 = sbr.rel (0) target = $region53
    $region52: #{_lambda_.1} parent=1 // pred_region
      _
    $region53: #{_lambda_.1} parent=1 // pred_fallthru
      _
    // Predicated region
    $region54: #{_lambda_.1} parent=1 // pred_check
      _
    $region55: #{_lambda_.1} parent=1 // pred_check_branch
      %136 = sbr.rel (0) target = $region57
    $region56: #{_lambda_.1} parent=1 // pred_region
      %s138 = ssub.s32 512, 512
      %139 = vsyncadd [#allocation14], %s138
      %s140 = sshll.u32 [#allocation15], 4
      %s141 = int_to_ptr.vmem [resolvable:$true] %s140
      %146 = dma.hbm_to_vmem [thread:$0]  %s13, 512, %s141, [#allocation14], 128, 128, 8
    $region57: #{_lambda_.1} parent=1 // pred_fallthru
      _
    // Predicated region
    $region58: #{_lambda_.1} parent=1 // pred_check
      _
    $region59: #{_lambda_.1} parent=1 // pred_check_branch
      %148 = sbr.rel (0) target = $region61
    $region60: #{_lambda_.1} parent=1 // pred_region
      %s150 = ssub.s32 512, 512
      %151 = vsyncadd [#allocation17], %s150
      %s152 = sshll.u32 [#allocation16], 4
      %s153 = int_to_ptr.vmem [resolvable:$true] %s152
      %158 = dma.hbm_to_vmem [thread:$0]  %s14, 512, %s153, [#allocation17], 128, 128, 8
    $region61: #{_lambda_.1} parent=1 // pred_fallthru
      _
    // Predicated region
    $region62: #{_lambda_.1} parent=1 // pred_check
      _
    $region63: #{_lambda_.1} parent=1 // pred_check_branch
      %160 = sbr.rel (0) target = $region65
    $region64: #{_lambda_.1} parent=1 // pred_region
      %s162 = ssub.s32 2048, 2048
      %163 = vsyncadd [#allocation17], %s162
      %s164 = sshll.u32 [#allocation18], 4
      %s165 = int_to_ptr.vmem [resolvable:$true] %s164
      %170 = dma.hbm_to_vmem [thread:$0]  %s15, 2048, %s165, [#allocation17], 128, 128, 8
    $region65: #{_lambda_.1} parent=1 // pred_fallthru
      _
    // Predicated region
    $region66: #{_lambda_.1} parent=1 // pred_check
      _
    $region67: #{_lambda_.1} parent=1 // pred_check_branch
      %172 = sbr.rel (0) target = $region69
    $region68: #{_lambda_.1} parent=1 // pred_region
      %s174 = ssub.s32 2048, 2048
      %175 = vsyncadd [#allocation20], %s174
      %s176 = sshll.u32 [#allocation19], 4
      %s177 = int_to_ptr.vmem [resolvable:$true] %s176
      %182 = dma.hbm_to_vmem [thread:$0]  %s16, 2048, %s177, [#allocation20], 128, 128, 8
    $region69: #{_lambda_.1} parent=1 // pred_fallthru
      _
    // Predicated region
    $region70: #{_lambda_.1} parent=1 // pred_check
      _
    $region71: #{_lambda_.1} parent=1 // pred_check_branch
      %184 = sbr.rel (0) target = $region73
    $region72: #{_lambda_.1} parent=1 // pred_region
      %s186 = ssub.s32 2048, 2048
      %187 = vsyncadd [#allocation20], %s186
      %s188 = sshll.u32 [#allocation21], 4
      %s189 = int_to_ptr.vmem [resolvable:$true] %s188
      %194 = dma.hbm_to_vmem [thread:$0]  %s17, 2048, %s189, [#allocation20], 128, 128, 8
    $region73: #{_lambda_.1} parent=1 // pred_fallthru
      _
    // Predicated region
    $region74: #{_lambda_.1} parent=1 // pred_check
      _
    $region75: #{_lambda_.1} parent=1 // pred_check_branch
      %196 = sbr.rel (0) target = $region77
    $region76: #{_lambda_.1} parent=1 // pred_region
      _
    $region77: #{_lambda_.1} parent=1 // pred_fallthru
      _
    // Predicated region
    $region78: #{_lambda_.1} parent=1 // pred_check
      _
    $region79: #{_lambda_.1} parent=1 // pred_check_branch
      %198 = sbr.rel (0) target = $region81
    $region80: #{_lambda_.1} parent=1 // pred_region
      _
    $region81: #{_lambda_.1} parent=1 // pred_fallthru
      _
    // Predicated region
    $region82: #{_lambda_.1} parent=1 // pred_check
      _
    $region83: #{_lambda_.1} parent=1 // pred_check_branch
      %200 = sbr.rel (0) target = $region85
    $region84: #{_lambda_.1} parent=1 // pred_region
      _
    $region85: #{_lambda_.1} parent=1 // pred_fallthru
      _
    // Predicated region
    $region86: #{_lambda_.1} parent=1 // pred_check
      _
    $region87: #{_lambda_.1} parent=1 // pred_check_branch
      %202 = sbr.rel (0) target = $region89
    $region88: #{_lambda_.1} parent=1 // pred_region
      %203 = dma.done [#allocation3], 128
    $region89: #{_lambda_.1} parent=1 // pred_fallthru
      _
    // Predicated region
    $region90: #{_lambda_.1} parent=1 // pred_check
      _
    $region91: #{_lambda_.1} parent=1 // pred_check_branch
      %205 = sbr.rel (0) target = $region93
    $region92: #{_lambda_.1} parent=1 // pred_region
      %206 = dma.done [#allocation5], 512
    $region93: #{_lambda_.1} parent=1 // pred_fallthru
      _
    // Predicated region
    $region94: #{_lambda_.1} parent=1 // pred_check
      _
    $region95: #{_lambda_.1} parent=1 // pred_check_branch
      %208 = sbr.rel (0) target = $region97
    $region96: #{_lambda_.1} parent=1 // pred_region
      %209 = dma.done [#allocation5], 1024
    $region97: #{_lambda_.1} parent=1 // pred_fallthru
      _
    // Predicated region
    $region98: #{_lambda_.1} parent=1 // pred_check
      _
    $region99: #{_lambda_.1} parent=1 // pred_check_branch
      %211 = sbr.rel (0) target = $region101
    $region100: #{_lambda_.1} parent=1 // pred_region
      %212 = dma.done [#allocation8], 1024
    $region101: #{_lambda_.1} parent=1 // pred_fallthru
      _
    // Predicated region
    $region102: #{_lambda_.1} parent=1 // pred_check
      _
    $region103: #{_lambda_.1} parent=1 // pred_check_branch
      %214 = sbr.rel (0) target = $region105
    $region104: #{_lambda_.1} parent=1 // pred_region
      %215 = dma.done [#allocation8], 2048
    $region105: #{_lambda_.1} parent=1 // pred_fallthru
      _
    // Predicated region
    $region106: #{_lambda_.1} parent=1 // pred_check
      _
    $region107: #{_lambda_.1} parent=1 // pred_check_branch
      %217 = sbr.rel (0) target = $region109
    $region108: #{_lambda_.1} parent=1 // pred_region
      %218 = dma.done [#allocation11], 256
    $region109: #{_lambda_.1} parent=1 // pred_fallthru
      _
    // Predicated region
    $region110: #{_lambda_.1} parent=1 // pred_check
      _
    $region111: #{_lambda_.1} parent=1 // pred_check_branch
      %220 = sbr.rel (0) target = $region113
    $region112: #{_lambda_.1} parent=1 // pred_region
      %221 = dma.done [#allocation11], 32
    $region113: #{_lambda_.1} parent=1 // pred_fallthru
      _
    // Predicated region
    $region114: #{_lambda_.1} parent=1 // pred_check
      _
    $region115: #{_lambda_.1} parent=1 // pred_check_branch
      %223 = sbr.rel (0) target = $region117
    $region116: #{_lambda_.1} parent=1 // pred_region
      %224 = dma.done [#allocation14], 512
    $region117: #{_lambda_.1} parent=1 // pred_fallthru
      _
    // Predicated region
    $region118: #{_lambda_.1} parent=1 // pred_check
      _
    $region119: #{_lambda_.1} parent=1 // pred_check_branch
      %226 = sbr.rel (0) target = $region121
    $region120: #{_lambda_.1} parent=1 // pred_region
      %227 = dma.done [#allocation14], 512
    $region121: #{_lambda_.1} parent=1 // pred_fallthru
      _
    // Predicated region
    $region122: #{_lambda_.1} parent=1 // pred_check
      _
    $region123: #{_lambda_.1} parent=1 // pred_check_branch
      %229 = sbr.rel (0) target = $region125
    $region124: #{_lambda_.1} parent=1 // pred_region
      %230 = dma.done [#allocation17], 512
    $region125: #{_lambda_.1} parent=1 // pred_fallthru
      _
    // Predicated region
    $region126: #{_lambda_.1} parent=1 // pred_check
      _
    $region127: #{_lambda_.1} parent=1 // pred_check_branch
      %232 = sbr.rel (0) target = $region129
    $region128: #{_lambda_.1} parent=1 // pred_region
      %233 = dma.done [#allocation17], 2048
    $region129: #{_lambda_.1} parent=1 // pred_fallthru
      _
    // Predicated region
    $region130: #{_lambda_.1} parent=1 // pred_check
      _
    $region131: #{_lambda_.1} parent=1 // pred_check_branch
      %235 = sbr.rel (0) target = $region133
    $region132: #{_lambda_.1} parent=1 // pred_region
      %236 = dma.done [#allocation20], 2048
    $region133: #{_lambda_.1} parent=1 // pred_fallthru
      _
    // Predicated region
    $region134: #{_lambda_.1} parent=1 // pred_check
      _
    $region135: #{_lambda_.1} parent=1 // pred_check_branch
      %238 = sbr.rel (0) target = $region137
    $region136: #{_lambda_.1} parent=1 // pred_region
      %239 = dma.done [#allocation20], 2048
    $region137: #{_lambda_.1} parent=1 // pred_fallthru
      _
    %v240 = vld [vmem:[%s0] sm:$0xff]
    %v241 = vld [vmem:[%s0 + $0x8] sm:$0xff]
    %v242 = vld [vmem:[%s0 + $0x10] sm:$0xff]
    %v243 = vld [vmem:[%s0 + $0x18] sm:$0xff]
    %v244 = vld [vmem:[#allocation15] sm:$0xff]
    %v245 = vld [vmem:[#allocation15 + $0x8] sm:$0xff]
    %v246 = vld [vmem:[#allocation15 + $0x10] sm:$0xff]
    %v247 = vld [vmem:[#allocation15 + $0x18] sm:$0xff]
    %vm248 = vcmask 261120
    %v250 = vsel %vm248, %v244, 0
    %v253 = vsel %vm248, %v245, 0
    %v256 = vsel %vm248, %v246, 0
    %v259 = vsel %vm248, %v247, 0
    %261 = vmatprep.subr.mxu0 0.0
    %262 = vmatpush1.msra.mxu0 %v240
    %263 = vmatprep.subr.mxu0 0.0
    %264 = vmatpush1.msra.mxu0 %v241
    %265 = vmatprep.subr.mxu0 0.0
    %266 = vmatpush1.msra.mxu0 %v242
    %267 = vmatprep.subr.mxu0 0.0
    %268 = vmatpush1.msra.mxu0 %v243
    %269 = vmatprep.subr.mxu0 0.0
    %270 = vmatpush1.msra.mxu0 0.0
    %271 = vmatprep.subr.mxu0 0.0
    %272 = vmatpush1.msra.mxu0 0.0
    %273 = vmatprep.subr.mxu0 0.0
    %274 = vmatpush1.msra.mxu0 0.0
    %275 = vmatprep.subr.mxu0 0.0
    %276 = vmatpush1.msra.mxu0 0.0
    %277 = vmatprep.subr.mxu0 0.0
    %278 = vmatpush1.msra.mxu0 0.0
    %279 = vmatprep.subr.mxu0 0.0
    %280 = vmatpush1.msra.mxu0 0.0
    %281 = vmatprep.subr.mxu0 0.0
    %282 = vmatpush1.msra.mxu0 0.0
    %283 = vmatprep.subr.mxu0 0.0
    %284 = vmatpush1.msra.mxu0 0.0
    %285 = vmatprep.subr.mxu0 0.0
    %286 = vmatpush1.msra.mxu0 0.0
    %287 = vmatprep.subr.mxu0 0.0
    %288 = vmatpush1.msra.mxu0 0.0
    %289 = vmatprep.subr.mxu0 0.0
    %290 = vmatpush1.msra.mxu0 0.0
    %291 = vmatprep.subr.mxu0 0.0
    %292 = vmatpush1.msra.mxu0 0.0
    %293 = vmatprep.subr.mxu0 0.0
    %294 = vmatpush1.msra.mxu0 0.0
    %295 = vmatprep.subr.mxu0 0.0
    %296 = vmatpush1.msra.mxu0 0.0
    %297 = vmatprep.subr.mxu0 0.0
    %298 = vmatpush1.msra.mxu0 0.0
    %299 = vmatprep.subr.mxu0 0.0
    %300 = vmatpush1.msra.mxu0 0.0
    %301 = vmatprep.subr.mxu0 0.0
    %302 = vmatpush1.msra.mxu0 0.0
    %303 = vmatprep.subr.mxu0 0.0
    %304 = vmatpush1.msra.mxu0 0.0
    %305 = vmatprep.subr.mxu0 0.0
    %306 = vmatpush1.msra.mxu0 0.0
    %307 = vmatprep.subr.mxu0 0.0
    %308 = vmatpush1.msra.mxu0 0.0
    %309 = vmatprep.subr.mxu0 0.0
    %310 = vmatpush1.msra.mxu0 0.0
    %311 = vmatprep.subr.mxu0 0.0
    %312 = vmatpush1.msra.mxu0 0.0
    %313 = vmatprep.subr.mxu0 0.0
    %314 = vmatpush1.msra.mxu0 0.0
    %315 = vmatprep.subr.mxu0 0.0
    %316 = vmatpush1.msra.mxu0 0.0
    %317 = vmatprep.subr.mxu0 0.0
    %318 = vmatpush1.msra.mxu0 0.0
    %319 = vmatprep.subr.mxu0 0.0
    %320 = vmatpush1.msra.mxu0 0.0
    %321 = vmatprep.subr.mxu0 0.0
    %322 = vmatpush1.msra.mxu0 0.0
    %323 = vmatprep.subr.mxu0 0.0
    %324 = vmatpush1.msra.mxu0 0.0
    %325 = vmatprep.mubr.f32.mxu0 0.0
    %326 = vmatmul.mubr.f32.gmra.mrb[0].mxu0 %v250
    %v327 = vpop.f32.mrb[0].mxu0
    %v328 = vadd.f32 0.0, %v327
    %v329 = vpop.f32.mrb[0].mxu0
    %330 = vmatprep.mubr.f32.mxu0 0.0
    %331 = vmatmul.mubr.f32.gmra.mrb[0].mxu0 %v253
    %v332 = vpop.f32.mrb[0].mxu0
    %v333 = vadd.f32 0.0, %v332
    %v334 = vpop.f32.mrb[0].mxu0
    %335 = vmatprep.mubr.f32.mxu0 0.0
    %336 = vmatmul.mubr.f32.gmra.mrb[0].mxu0 %v256
    %v337 = vpop.f32.mrb[0].mxu0
    %v338 = vadd.f32 0.0, %v337
    %v339 = vpop.f32.mrb[0].mxu0
    %340 = vmatprep.mubr.f32.mxu0 0.0
    %341 = vmatmul.mubr.f32.gmra.mrb[0].mxu0 %v259
    %v342 = vpop.f32.mrb[0].mxu0
    %v343 = vadd.f32 0.0, %v342
    %v344 = vpop.f32.mrb[0].mxu0
    %345 = vdwg.mxu0
    %vm346 = vcmask 64512
    %v347 = vsel %vm346, %v328, 0.0
    %348 = vadd.xlane.f32.xlu0 %v347
    %v349 = vpop.xlane.xlu0 %348
    %v350 = vsel %vm346, %v333, 0.0
    %351 = vadd.xlane.f32.xlu0 %v350
    %v352 = vpop.xlane.xlu0 %351
    %v353 = vsel %vm346, %v338, 0.0
    %354 = vadd.xlane.f32.xlu0 %v353
    %v355 = vpop.xlane.xlu0 %354
    %v356 = vsel %vm346, %v343, 0.0
    %357 = vadd.xlane.f32.xlu0 %v356
    %v358 = vpop.xlane.xlu0 %357
    %v359 = vsub.f32 %v240, %v349
    %v360 = vsub.f32 %v241, %v352
    %v361 = vsub.f32 %v242, %v355
    %v362 = vsub.f32 %v243, %v358
    %v363 = vmul.f32 %v359, %v359
    %v364 = vmul.f32 %v360, %v360
    %v365 = vmul.f32 %v361, %v361
    %v366 = vmul.f32 %v362, %v362
    %367 = vmatprep.subr.mxu0 0.0
    %368 = vmatpush1.msra.mxu0 %v363
    %369 = vmatprep.subr.mxu0 0.0
    %370 = vmatpush1.msra.mxu0 %v364
    %371 = vmatprep.subr.mxu0 0.0
    %372 = vmatpush1.msra.mxu0 %v365
    %373 = vmatprep.subr.mxu0 0.0
    %374 = vmatpush1.msra.mxu0 %v366
    %375 = vmatprep.subr.mxu0 0.0
    %376 = vmatpush1.msra.mxu0 0.0
    %377 = vmatprep.subr.mxu0 0.0
    %378 = vmatpush1.msra.mxu0 0.0
    %379 = vmatprep.subr.mxu0 0.0
    %380 = vmatpush1.msra.mxu0 0.0
    %381 = vmatprep.subr.mxu0 0.0
    %382 = vmatpush1.msra.mxu0 0.0
    %383 = vmatprep.subr.mxu0 0.0
    %384 = vmatpush1.msra.mxu0 0.0
    %385 = vmatprep.subr.mxu0 0.0
    %386 = vmatpush1.msra.mxu0 0.0
    %387 = vmatprep.subr.mxu0 0.0
    %388 = vmatpush1.msra.mxu0 0.0
    %389 = vmatprep.subr.mxu0 0.0
    %390 = vmatpush1.msra.mxu0 0.0
    %391 = vmatprep.subr.mxu0 0.0
    %392 = vmatpush1.msra.mxu0 0.0
    %393 = vmatprep.subr.mxu0 0.0
    %394 = vmatpush1.msra.mxu0 0.0
    %395 = vmatprep.subr.mxu0 0.0
    %396 = vmatpush1.msra.mxu0 0.0
    %397 = vmatprep.subr.mxu0 0.0
    %398 = vmatpush1.msra.mxu0 0.0
    %399 = vmatprep.subr.mxu0 0.0
    %400 = vmatpush1.msra.mxu0 0.0
    %401 = vmatprep.subr.mxu0 0.0
    %402 = vmatpush1.msra.mxu0 0.0
    %403 = vmatprep.subr.mxu0 0.0
    %404 = vmatpush1.msra.mxu0 0.0
    %405 = vmatprep.subr.mxu0 0.0
    %406 = vmatpush1.msra.mxu0 0.0
    %407 = vmatprep.subr.mxu0 0.0
    %408 = vmatpush1.msra.mxu0 0.0
    %409 = vmatprep.subr.mxu0 0.0
    %410 = vmatpush1.msra.mxu0 0.0
    %411 = vmatprep.subr.mxu0 0.0
    %412 = vmatpush1.msra.mxu0 0.0
    %413 = vmatprep.subr.mxu0 0.0
    %414 = vmatpush1.msra.mxu0 0.0
    %415 = vmatprep.subr.mxu0 0.0
    %416 = vmatpush1.msra.mxu0 0.0
    %417 = vmatprep.subr.mxu0 0.0
    %418 = vmatpush1.msra.mxu0 0.0
    %419 = vmatprep.subr.mxu0 0.0
    %420 = vmatpush1.msra.mxu0 0.0
    %421 = vmatprep.subr.mxu0 0.0
    %422 = vmatpush1.msra.mxu0 0.0
    %423 = vmatprep.subr.mxu0 0.0
    %424 = vmatpush1.msra.mxu0 0.0
    %425 = vmatprep.subr.mxu0 0.0
    %426 = vmatpush1.msra.mxu0 0.0
    %427 = vmatprep.subr.mxu0 0.0
    %428 = vmatpush1.msra.mxu0 0.0
    %429 = vmatprep.subr.mxu0 0.0
    %430 = vmatpush1.msra.mxu0 0.0
    %431 = vmatprep.mubr.f32.mxu0 0.0
    %432 = vmatmul.mubr.f32.gmra.mrb[0].mxu0 %v250
    %v433 = vpop.f32.mrb[0].mxu0
    %v434 = vadd.f32 0.0, %v433
    %v435 = vpop.f32.mrb[0].mxu0
    %436 = vmatprep.mubr.f32.mxu0 0.0
    %437 = vmatmul.mubr.f32.gmra.mrb[0].mxu0 %v253
    %v438 = vpop.f32.mrb[0].mxu0
    %v439 = vadd.f32 0.0, %v438
    %v440 = vpop.f32.mrb[0].mxu0
    %441 = vmatprep.mubr.f32.mxu0 0.0
    %442 = vmatmul.mubr.f32.gmra.mrb[0].mxu0 %v256
    %v443 = vpop.f32.mrb[0].mxu0
    %v444 = vadd.f32 0.0, %v443
    %v445 = vpop.f32.mrb[0].mxu0
    %446 = vmatprep.mubr.f32.mxu0 0.0
    %447 = vmatmul.mubr.f32.gmra.mrb[0].mxu0 %v259
    %v448 = vpop.f32.mrb[0].mxu0
    %v449 = vadd.f32 0.0, %v448
    %v450 = vpop.f32.mrb[0].mxu0
    %451 = vdwg.mxu0
    %v452 = vsel %vm346, %v434, 0.0
    %453 = vadd.xlane.f32.xlu0 %v452
    %v454 = vpop.xlane.xlu0 %453
    %v455 = vsel %vm346, %v439, 0.0
    %456 = vadd.xlane.f32.xlu0 %v455
    %v457 = vpop.xlane.xlu0 %456
    %v458 = vsel %vm346, %v444, 0.0
    %459 = vadd.xlane.f32.xlu0 %v458
    %v460 = vpop.xlane.xlu0 %459
    %v461 = vsel %vm346, %v449, 0.0
    %462 = vadd.xlane.f32.xlu0 %v461
    %v463 = vpop.xlane.xlu0 %462
    %v464 = vadd.f32 %v454, 1e-05
    %v465 = vadd.f32 %v457, 1e-05
    %v466 = vadd.f32 %v460, 1e-05
    %v467 = vadd.f32 %v463, 1e-05
    %v468 = vrsqrt.pop %v464
    %v469 = vmul.f32 %v464, %v468
    %vm470 = vcmp.eq.f32.partialorder %v464, inf
    %v471 = vsel %vm470, %v464, %v469
    %vm472 = vcmp.eq.f32.partialorder %v464, 0.0
    %v473 = vand.u32 %v464, 2147483648
    %v474 = vsel %vm472, %v473, %v471
    %v475 = vrsqrt.pop %v465
    %v476 = vmul.f32 %v465, %v475
    %vm477 = vcmp.eq.f32.partialorder %v465, inf
    %v478 = vsel %vm477, %v465, %v476
    %vm479 = vcmp.eq.f32.partialorder %v465, 0.0
    %v480 = vand.u32 %v465, 2147483648
    %v481 = vsel %vm479, %v480, %v478
    %v482 = vrsqrt.pop %v466
    %v483 = vmul.f32 %v466, %v482
    %vm484 = vcmp.eq.f32.partialorder %v466, inf
    %v485 = vsel %vm484, %v466, %v483
    %vm486 = vcmp.eq.f32.partialorder %v466, 0.0
    %v487 = vand.u32 %v466, 2147483648
    %v488 = vsel %vm486, %v487, %v485
    %v489 = vrsqrt.pop %v467
    %v490 = vmul.f32 %v467, %v489
    %vm491 = vcmp.eq.f32.partialorder %v467, inf
    %v492 = vsel %vm491, %v467, %v490
    %vm493 = vcmp.eq.f32.partialorder %v467, 0.0
    %v494 = vand.u32 %v467, 2147483648
    %v495 = vsel %vm493, %v494, %v492
    %v496 = vrsqrt.pop %v464
    %v497 = vrsqrt.pop %v465
    %v498 = vrsqrt.pop %v466
    %v499 = vrsqrt.pop %v467
    %v500 = vmul.f32 %v359, %v496
    %v501 = vmul.f32 %v360, %v497
    %v502 = vmul.f32 %v361, %v498
    %v503 = vmul.f32 %v362, %v499
    %v504 = vld [vmem:[#allocation2] sm:$0xff]
    %v505 = vld [vmem:[#allocation4] sm:$0xff]
    %v506 = vld [vmem:[#allocation4 + $0x8] sm:$0xff]
    %v507 = vld [vmem:[#allocation4 + $0x10] sm:$0xff]
    %v508 = vld [vmem:[#allocation4 + $0x18] sm:$0xff]
    %v510 = vsel %vm346, %v500, 0
    %v513 = vsel %vm346, %v501, 0
    %v516 = vsel %vm346, %v502, 0
    %v519 = vsel %vm346, %v503, 0
    %521 = vmatprep.subr.mxu0 0.0
    %522 = vmatpush1.msra.mxu0 %v504
    %523 = vmatprep.subr.mxu0 0.0
    %524 = vmatpush1.msra.mxu0 0.0
    %525 = vmatprep.subr.mxu0 0.0
    %526 = vmatpush1.msra.mxu0 0.0
    %527 = vmatprep.subr.mxu0 0.0
    %528 = vmatpush1.msra.mxu0 0.0
    %529 = vmatprep.subr.mxu0 0.0
    %530 = vmatpush1.msra.mxu0 0.0
    %531 = vmatprep.subr.mxu0 0.0
    %532 = vmatpush1.msra.mxu0 0.0
    %533 = vmatprep.subr.mxu0 0.0
    %534 = vmatpush1.msra.mxu0 0.0
    %535 = vmatprep.subr.mxu0 0.0
    %536 = vmatpush1.msra.mxu0 0.0
    %537 = vmatprep.subr.mxu0 0.0
    %538 = vmatpush1.msra.mxu0 0.0
    %539 = vmatprep.subr.mxu0 0.0
    %540 = vmatpush1.msra.mxu0 0.0
    %541 = vmatprep.subr.mxu0 0.0
    %542 = vmatpush1.msra.mxu0 0.0
    %543 = vmatprep.subr.mxu0 0.0
    %544 = vmatpush1.msra.mxu0 0.0
    %545 = vmatprep.subr.mxu0 0.0
    %546 = vmatpush1.msra.mxu0 0.0
    %547 = vmatprep.subr.mxu0 0.0
    %548 = vmatpush1.msra.mxu0 0.0
    %549 = vmatprep.subr.mxu0 0.0
    %550 = vmatpush1.msra.mxu0 0.0
    %551 = vmatprep.subr.mxu0 0.0
    %552 = vmatpush1.msra.mxu0 0.0
    %553 = vmatprep.subr.mxu0 0.0
    %554 = vmatpush1.msra.mxu0 0.0
    %555 = vmatprep.subr.mxu0 0.0
    %556 = vmatpush1.msra.mxu0 0.0
    %557 = vmatprep.subr.mxu0 0.0
    %558 = vmatpush1.msra.mxu0 0.0
    %559 = vmatprep.subr.mxu0 0.0
    %560 = vmatpush1.msra.mxu0 0.0
    %561 = vmatprep.subr.mxu0 0.0
    %562 = vmatpush1.msra.mxu0 0.0
    %563 = vmatprep.subr.mxu0 0.0
    %564 = vmatpush1.msra.mxu0 0.0
    %565 = vmatprep.subr.mxu0 0.0
    %566 = vmatpush1.msra.mxu0 0.0
    %567 = vmatprep.subr.mxu0 0.0
    %568 = vmatpush1.msra.mxu0 0.0
    %569 = vmatprep.subr.mxu0 0.0
    %570 = vmatpush1.msra.mxu0 0.0
    %571 = vmatprep.subr.mxu0 0.0
    %572 = vmatpush1.msra.mxu0 0.0
    %573 = vmatprep.subr.mxu0 0.0
    %574 = vmatpush1.msra.mxu0 0.0
    %575 = vmatprep.subr.mxu0 0.0
    %576 = vmatpush1.msra.mxu0 0.0
    %577 = vmatprep.subr.mxu0 0.0
    %578 = vmatpush1.msra.mxu0 0.0
    %579 = vmatprep.subr.mxu0 0.0
    %580 = vmatpush1.msra.mxu0 0.0
    %581 = vmatprep.subr.mxu0 0.0
    %582 = vmatpush1.msra.mxu0 0.0
    %583 = vmatprep.subr.mxu0 0.0
    %584 = vmatpush1.msra.mxu0 0.0
    %585 = vmatprep.mubr.f32.mxu0 0.0
    %586 = vmatmul.mubr.f32.gmra.mrb[0].mxu0 %v510
    %v587 = vpop.f32.mrb[0].mxu0
    %v588 = vadd.f32 %v505, %v587
    %v589 = vpop.f32.mrb[0].mxu0
    %590 = vmatprep.mubr.f32.mxu0 0.0
    %591 = vmatmul.mubr.f32.gmra.mrb[0].mxu0 %v513
    %v592 = vpop.f32.mrb[0].mxu0
    %v593 = vadd.f32 %v506, %v592
    %v594 = vpop.f32.mrb[0].mxu0
    %595 = vmatprep.mubr.f32.mxu0 0.0
    %596 = vmatmul.mubr.f32.gmra.mrb[0].mxu0 %v516
    %v597 = vpop.f32.mrb[0].mxu0
    %v598 = vadd.f32 %v507, %v597
    %v599 = vpop.f32.mrb[0].mxu0
    %600 = vmatprep.mubr.f32.mxu0 0.0
    %601 = vmatmul.mubr.f32.gmra.mrb[0].mxu0 %v519
    %v602 = vpop.f32.mrb[0].mxu0
    %v603 = vadd.f32 %v508, %v602
    %v604 = vpop.f32.mrb[0].mxu0
    %605 = vdwg.mxu0
    %v606 = vld [vmem:[#allocation16] sm:$0xff]
    %v607 = vld [vmem:[#allocation16 + $0x8] sm:$0xff]
    %v608 = vld [vmem:[#allocation16 + $0x10] sm:$0xff]
    %v609 = vld [vmem:[#allocation16 + $0x18] sm:$0xff]
    %v610 = vld [vmem:[#allocation18] sm:$0xff]
    %v611 = vld [vmem:[#allocation18 + $0x8] sm:$0xff]
    %v612 = vld [vmem:[#allocation18 + $0x10] sm:$0xff]
    %v613 = vld [vmem:[#allocation18 + $0x18] sm:$0xff]
    %v614 = vld [vmem:[#allocation18 + $0x20] sm:$0xff]
    %v615 = vld [vmem:[#allocation18 + $0x28] sm:$0xff]
    %v616 = vld [vmem:[#allocation18 + $0x30] sm:$0xff]
    %v617 = vld [vmem:[#allocation18 + $0x38] sm:$0xff]
    %v618 = vld [vmem:[#allocation18 + $0x40] sm:$0xff]
    %v619 = vld [vmem:[#allocation18 + $0x48] sm:$0xff]
    %v620 = vld [vmem:[#allocation18 + $0x50] sm:$0xff]
    %v621 = vld [vmem:[#allocation18 + $0x58] sm:$0xff]
    %v622 = vld [vmem:[#allocation18 + $0x60] sm:$0xff]
    %v623 = vld [vmem:[#allocation18 + $0x68] sm:$0xff]
    %v624 = vld [vmem:[#allocation18 + $0x70] sm:$0xff]
    %v625 = vld [vmem:[#allocation18 + $0x78] sm:$0xff]
    %v626 = vld [vmem:[#allocation19] sm:$0xff]
    %v627 = vld [vmem:[#allocation19 + $0x8] sm:$0xff]
    %v628 = vld [vmem:[#allocation19 + $0x10] sm:$0xff]
    %v629 = vld [vmem:[#allocation19 + $0x18] sm:$0xff]
    %v630 = vld [vmem:[#allocation19 + $0x20] sm:$0xff]
    %v631 = vld [vmem:[#allocation19 + $0x28] sm:$0xff]
    %v632 = vld [vmem:[#allocation19 + $0x30] sm:$0xff]
    %v633 = vld [vmem:[#allocation19 + $0x38] sm:$0xff]
    %v634 = vld [vmem:[#allocation19 + $0x40] sm:$0xff]
    %v635 = vld [vmem:[#allocation19 + $0x48] sm:$0xff]
    %v636 = vld [vmem:[#allocation19 + $0x50] sm:$0xff]
    %v637 = vld [vmem:[#allocation19 + $0x58] sm:$0xff]
    %v638 = vld [vmem:[#allocation19 + $0x60] sm:$0xff]
    %v639 = vld [vmem:[#allocation19 + $0x68] sm:$0xff]
    %v640 = vld [vmem:[#allocation19 + $0x70] sm:$0xff]
    %v641 = vld [vmem:[#allocation19 + $0x78] sm:$0xff]
    %v642 = vld [vmem:[#allocation21] sm:$0xff]
    %v643 = vld [vmem:[#allocation21 + $0x8] sm:$0xff]
    %v644 = vld [vmem:[#allocation21 + $0x10] sm:$0xff]
    %v645 = vld [vmem:[#allocation21 + $0x18] sm:$0xff]
    %v646 = vld [vmem:[#allocation21 + $0x20] sm:$0xff]
    %v647 = vld [vmem:[#allocation21 + $0x28] sm:$0xff]
    %v648 = vld [vmem:[#allocation21 + $0x30] sm:$0xff]
    %v649 = vld [vmem:[#allocation21 + $0x38] sm:$0xff]
    %v650 = vld [vmem:[#allocation21 + $0x40] sm:$0xff]
    %v651 = vld [vmem:[#allocation21 + $0x48] sm:$0xff]
    %v652 = vld [vmem:[#allocation21 + $0x50] sm:$0xff]
    %v653 = vld [vmem:[#allocation21 + $0x58] sm:$0xff]
    %v654 = vld [vmem:[#allocation21 + $0x60] sm:$0xff]
    %v655 = vld [vmem:[#allocation21 + $0x68] sm:$0xff]
    %v656 = vld [vmem:[#allocation21 + $0x70] sm:$0xff]
    %v657 = vld [vmem:[#allocation21 + $0x78] sm:$0xff]
    %v658 = vld [vmem:[#allocation10] sm:$0x3f]
    %v659 = vld [vmem:[#allocation6] sm:$0xff]
    %v660 = vld [vmem:[#allocation6 + $0x8] sm:$0xff]
    %v661 = vld [vmem:[#allocation6 + $0x10] sm:$0xff]
    %v662 = vld [vmem:[#allocation6 + $0x18] sm:$0xff]
    %v663 = vld [vmem:[%s4] sm:$0x1]
    %v665 = vlaneseq
    %v666 = vshrl.u32 %v665, 7
    %v667 = vsub.s32 0, %v666
    %v668 = vrot.slane %v663, %v667
    %v671 = vsel %vm248, %v588, 0
    %v674 = vsel %vm248, %v593, 0
    %v677 = vsel %vm248, %v598, 0
    %v680 = vsel %vm248, %v603, 0
    %682 = vmatprep.subr.mxu0 0.0
    %683 = vmatpush1.msra.mxu0 %v659
    %684 = vmatprep.subr.mxu0 0.0
    %685 = vmatpush1.msra.mxu0 %v660
    %686 = vmatprep.subr.mxu0 0.0
    %687 = vmatpush1.msra.mxu0 %v661
    %688 = vmatprep.subr.mxu0 0.0
    %689 = vmatpush1.msra.mxu0 %v662
    %690 = vmatprep.subr.mxu0 0.0
    %691 = vmatpush1.msra.mxu0 0.0
    %692 = vmatprep.subr.mxu0 0.0
    %693 = vmatpush1.msra.mxu0 0.0
    %694 = vmatprep.subr.mxu0 0.0
    %695 = vmatpush1.msra.mxu0 0.0
    %696 = vmatprep.subr.mxu0 0.0
    %697 = vmatpush1.msra.mxu0 0.0
    %698 = vmatprep.subr.mxu0 0.0
    %699 = vmatpush1.msra.mxu0 0.0
    %700 = vmatprep.subr.mxu0 0.0
    %701 = vmatpush1.msra.mxu0 0.0
    %702 = vmatprep.subr.mxu0 0.0
    %703 = vmatpush1.msra.mxu0 0.0
    %704 = vmatprep.subr.mxu0 0.0
    %705 = vmatpush1.msra.mxu0 0.0
    %706 = vmatprep.subr.mxu0 0.0
    %707 = vmatpush1.msra.mxu0 0.0
    %708 = vmatprep.subr.mxu0 0.0
    %709 = vmatpush1.msra.mxu0 0.0
    %710 = vmatprep.subr.mxu0 0.0
    %711 = vmatpush1.msra.mxu0 0.0
    %712 = vmatprep.subr.mxu0 0.0
    %713 = vmatpush1.msra.mxu0 0.0
    %714 = vmatprep.subr.mxu0 0.0
    %715 = vmatpush1.msra.mxu0 0.0
    %716 = vmatprep.subr.mxu0 0.0
    %717 = vmatpush1.msra.mxu0 0.0
    %718 = vmatprep.subr.mxu0 0.0
    %719 = vmatpush1.msra.mxu0 0.0
    %720 = vmatprep.subr.mxu0 0.0
    %721 = vmatpush1.msra.mxu0 0.0
    %722 = vmatprep.subr.mxu0 0.0
    %723 = vmatpush1.msra.mxu0 0.0
    %724 = vmatprep.subr.mxu0 0.0
    %725 = vmatpush1.msra.mxu0 0.0
    %726 = vmatprep.subr.mxu0 0.0
    %727 = vmatpush1.msra.mxu0 0.0
    %728 = vmatprep.subr.mxu0 0.0
    %729 = vmatpush1.msra.mxu0 0.0
    %730 = vmatprep.subr.mxu0 0.0
    %731 = vmatpush1.msra.mxu0 0.0
    %732 = vmatprep.subr.mxu0 0.0
    %733 = vmatpush1.msra.mxu0 0.0
    %734 = vmatprep.subr.mxu0 0.0
    %735 = vmatpush1.msra.mxu0 0.0
    %736 = vmatprep.subr.mxu0 0.0
    %737 = vmatpush1.msra.mxu0 0.0
    %738 = vmatprep.subr.mxu0 0.0
    %739 = vmatpush1.msra.mxu0 0.0
    %740 = vmatprep.subr.mxu0 0.0
    %741 = vmatpush1.msra.mxu0 0.0
    %742 = vmatprep.subr.mxu0 0.0
    %743 = vmatpush1.msra.mxu0 0.0
    %744 = vmatprep.subr.mxu0 0.0
    %745 = vmatpush1.msra.mxu0 0.0
    %746 = vmatprep.mubr.f32.mxu0 0.0
    %747 = vmatmul.mubr.f32.gmra.mrb[0].mxu0 %v671
    %v748 = vpop.f32.mrb[0].mxu0
    %v749 = vadd.f32 %v668, %v748
    %v750 = vpop.f32.mrb[0].mxu0
    %751 = vmatprep.mubr.f32.mxu0 0.0
    %752 = vmatmul.mubr.f32.gmra.mrb[0].mxu0 %v674
    %v753 = vpop.f32.mrb[0].mxu0
    %v754 = vadd.f32 %v668, %v753
    %v755 = vpop.f32.mrb[0].mxu0
    %756 = vmatprep.mubr.f32.mxu0 0.0
    %757 = vmatmul.mubr.f32.gmra.mrb[0].mxu0 %v677
    %v758 = vpop.f32.mrb[0].mxu0
    %v759 = vadd.f32 %v668, %v758
    %v760 = vpop.f32.mrb[0].mxu0
    %761 = vmatprep.mubr.f32.mxu0 0.0
    %762 = vmatmul.mubr.f32.gmra.mrb[0].mxu0 %v680
    %v763 = vpop.f32.mrb[0].mxu0
    %v764 = vadd.f32 %v668, %v763
    %v765 = vpop.f32.mrb[0].mxu0
    %766 = vdwg.mxu0
    %771 = vrot.lane.b32.xlu0 %v749, 96
    %v772 = vpop.permute.xlu0 %771
    %773 = vrot.lane.b32.xlu0 %v754, 96
    %v774 = vpop.permute.xlu0 %773
    %775 = vrot.lane.b32.xlu0 %v759, 96
    %v776 = vpop.permute.xlu0 %775
    %777 = vrot.lane.b32.xlu0 %v764, 96
    %v778 = vpop.permute.xlu0 %777
    %v784 = vsel %vm248, %v610, 0
    %v787 = vsel %vm248, %v611, 0
    %v790 = vsel %vm248, %v612, 0
    %v793 = vsel %vm248, %v613, 0
    %v796 = vsel %vm248, %v614, 0
    %v799 = vsel %vm248, %v615, 0
    %v802 = vsel %vm248, %v616, 0
    %v805 = vsel %vm248, %v617, 0
    %v808 = vsel %vm248, %v618, 0
    %v811 = vsel %vm248, %v619, 0
    %v814 = vsel %vm248, %v620, 0
    %v817 = vsel %vm248, %v621, 0
    %v820 = vsel %vm248, %v622, 0
    %v823 = vsel %vm248, %v623, 0
    %v826 = vsel %vm248, %v624, 0
    %v829 = vsel %vm248, %v625, 0
    %831 = vmatprep.subr.mxu0 0.0
    %832 = vmatpush1.msra.mxu0 %v772
    %833 = vmatprep.subr.mxu0 0.0
    %834 = vmatpush1.msra.mxu0 %v774
    %835 = vmatprep.subr.mxu0 0.0
    %836 = vmatpush1.msra.mxu0 %v776
    %837 = vmatprep.subr.mxu0 0.0
    %838 = vmatpush1.msra.mxu0 %v778
    %839 = vmatprep.subr.mxu0 0.0
    %840 = vmatpush1.msra.mxu0 0.0
    %841 = vmatprep.subr.mxu0 0.0
    %842 = vmatpush1.msra.mxu0 0.0
    %843 = vmatprep.subr.mxu0 0.0
    %844 = vmatpush1.msra.mxu0 0.0
    %845 = vmatprep.subr.mxu0 0.0
    %846 = vmatpush1.msra.mxu0 0.0
    %847 = vmatprep.subr.mxu0 0.0
    %848 = vmatpush1.msra.mxu0 0.0
    %849 = vmatprep.subr.mxu0 0.0
    %850 = vmatpush1.msra.mxu0 0.0
    %851 = vmatprep.subr.mxu0 0.0
    %852 = vmatpush1.msra.mxu0 0.0
    %853 = vmatprep.subr.mxu0 0.0
    %854 = vmatpush1.msra.mxu0 0.0
    %855 = vmatprep.subr.mxu0 0.0
    %856 = vmatpush1.msra.mxu0 0.0
    %857 = vmatprep.subr.mxu0 0.0
    %858 = vmatpush1.msra.mxu0 0.0
    %859 = vmatprep.subr.mxu0 0.0
    %860 = vmatpush1.msra.mxu0 0.0
    %861 = vmatprep.subr.mxu0 0.0
    %862 = vmatpush1.msra.mxu0 0.0
    %863 = vmatprep.subr.mxu0 0.0
    %864 = vmatpush1.msra.mxu0 0.0
    %865 = vmatprep.subr.mxu0 0.0
    %866 = vmatpush1.msra.mxu0 0.0
    %867 = vmatprep.subr.mxu0 0.0
    %868 = vmatpush1.msra.mxu0 0.0
    %869 = vmatprep.subr.mxu0 0.0
    %870 = vmatpush1.msra.mxu0 0.0
    %871 = vmatprep.subr.mxu0 0.0
    %872 = vmatpush1.msra.mxu0 0.0
    %873 = vmatprep.subr.mxu0 0.0
    %874 = vmatpush1.msra.mxu0 0.0
    %875 = vmatprep.subr.mxu0 0.0
    %876 = vmatpush1.msra.mxu0 0.0
    %877 = vmatprep.subr.mxu0 0.0
    %878 = vmatpush1.msra.mxu0 0.0
    %879 = vmatprep.subr.mxu0 0.0
    %880 = vmatpush1.msra.mxu0 0.0
    %881 = vmatprep.subr.mxu0 0.0
    %882 = vmatpush1.msra.mxu0 0.0
    %883 = vmatprep.subr.mxu0 0.0
    %884 = vmatpush1.msra.mxu0 0.0
    %885 = vmatprep.subr.mxu0 0.0
    %886 = vmatpush1.msra.mxu0 0.0
    %887 = vmatprep.subr.mxu0 0.0
    %888 = vmatpush1.msra.mxu0 0.0
    %889 = vmatprep.subr.mxu0 0.0
    %890 = vmatpush1.msra.mxu0 0.0
    %891 = vmatprep.subr.mxu0 0.0
    %892 = vmatpush1.msra.mxu0 0.0
    %893 = vmatprep.subr.mxu0 0.0
    %894 = vmatpush1.msra.mxu0 0.0
    %895 = vmatprep.mubr.f32.mxu0 0.0
    %896 = vmatmul.mubr.f32.gmra.mrb[0].mxu0 %v784
    %v897 = vpop.f32.mrb[0].mxu0
    %v898 = vadd.f32 0.0, %v897
    %v899 = vpop.f32.mrb[0].mxu0
    %900 = vmatprep.mubr.f32.mxu0 0.0
    %901 = vmatmul.mubr.f32.gmra.mrb[0].mxu0 %v787
    %v902 = vpop.f32.mrb[0].mxu0
    %v903 = vadd.f32 0.0, %v902
    %v904 = vpop.f32.mrb[0].mxu0
    %905 = vmatprep.mubr.f32.mxu0 0.0
    %906 = vmatmul.mubr.f32.gmra.mrb[0].mxu0 %v790
    %v907 = vpop.f32.mrb[0].mxu0
    %v908 = vadd.f32 0.0, %v907
    %v909 = vpop.f32.mrb[0].mxu0
    %910 = vmatprep.mubr.f32.mxu0 0.0
    %911 = vmatmul.mubr.f32.gmra.mrb[0].mxu0 %v793
    %v912 = vpop.f32.mrb[0].mxu0
    %v913 = vadd.f32 0.0, %v912
    %v914 = vpop.f32.mrb[0].mxu0
    %915 = vmatprep.mubr.f32.mxu0 0.0
    %916 = vmatmul.mubr.f32.gmra.mrb[0].mxu0 %v796
    %v917 = vpop.f32.mrb[0].mxu0
    %v918 = vadd.f32 0.0, %v917
    %v919 = vpop.f32.mrb[0].mxu0
    %920 = vmatprep.mubr.f32.mxu0 0.0
    %921 = vmatmul.mubr.f32.gmra.mrb[0].mxu0 %v799
    %v922 = vpop.f32.mrb[0].mxu0
    %v923 = vadd.f32 0.0, %v922
    %v924 = vpop.f32.mrb[0].mxu0
    %925 = vmatprep.mubr.f32.mxu0 0.0
    %926 = vmatmul.mubr.f32.gmra.mrb[0].mxu0 %v802
    %v927 = vpop.f32.mrb[0].mxu0
    %v928 = vadd.f32 0.0, %v927
    %v929 = vpop.f32.mrb[0].mxu0
    %930 = vmatprep.mubr.f32.mxu0 0.0
    %931 = vmatmul.mubr.f32.gmra.mrb[0].mxu0 %v805
    %v932 = vpop.f32.mrb[0].mxu0
    %v933 = vadd.f32 0.0, %v932
    %v934 = vpop.f32.mrb[0].mxu0
    %935 = vmatprep.mubr.f32.mxu0 0.0
    %936 = vmatmul.mubr.f32.gmra.mrb[0].mxu0 %v808
    %v937 = vpop.f32.mrb[0].mxu0
    %v938 = vadd.f32 0.0, %v937
    %v939 = vpop.f32.mrb[0].mxu0
    %940 = vmatprep.mubr.f32.mxu0 0.0
    %941 = vmatmul.mubr.f32.gmra.mrb[0].mxu0 %v811
    %v942 = vpop.f32.mrb[0].mxu0
    %v943 = vadd.f32 0.0, %v942
    %v944 = vpop.f32.mrb[0].mxu0
    %945 = vmatprep.mubr.f32.mxu0 0.0
    %946 = vmatmul.mubr.f32.gmra.mrb[0].mxu0 %v814
    %v947 = vpop.f32.mrb[0].mxu0
    %v948 = vadd.f32 0.0, %v947
    %v949 = vpop.f32.mrb[0].mxu0
    %950 = vmatprep.mubr.f32.mxu0 0.0
    %951 = vmatmul.mubr.f32.gmra.mrb[0].mxu0 %v817
    %v952 = vpop.f32.mrb[0].mxu0
    %v953 = vadd.f32 0.0, %v952
    %v954 = vpop.f32.mrb[0].mxu0
    %955 = vmatprep.mubr.f32.mxu0 0.0
    %956 = vmatmul.mubr.f32.gmra.mrb[0].mxu0 %v820
    %v957 = vpop.f32.mrb[0].mxu0
    %v958 = vadd.f32 0.0, %v957
    %v959 = vpop.f32.mrb[0].mxu0
    %960 = vmatprep.mubr.f32.mxu0 0.0
    %961 = vmatmul.mubr.f32.gmra.mrb[0].mxu0 %v823
    %v962 = vpop.f32.mrb[0].mxu0
    %v963 = vadd.f32 0.0, %v962
    %v964 = vpop.f32.mrb[0].mxu0
    %965 = vmatprep.mubr.f32.mxu0 0.0
    %966 = vmatmul.mubr.f32.gmra.mrb[0].mxu0 %v826
    %v967 = vpop.f32.mrb[0].mxu0
    %v968 = vadd.f32 0.0, %v967
    %v969 = vpop.f32.mrb[0].mxu0
    %970 = vmatprep.mubr.f32.mxu0 0.0
    %971 = vmatmul.mubr.f32.gmra.mrb[0].mxu0 %v829
    %v972 = vpop.f32.mrb[0].mxu0
    %v973 = vadd.f32 0.0, %v972
    %v974 = vpop.f32.mrb[0].mxu0
    %975 = vdwg.mxu0
    %v976 = vmul.f32 %v898, %v626
    %v977 = vmul.f32 %v903, %v627
    %v978 = vmul.f32 %v908, %v628
    %v979 = vmul.f32 %v913, %v629
    %v980 = vmul.f32 %v918, %v630
    %v981 = vmul.f32 %v923, %v631
    %v982 = vmul.f32 %v928, %v632
    %v983 = vmul.f32 %v933, %v633
    %v984 = vmul.f32 %v938, %v634
    %v985 = vmul.f32 %v943, %v635
    %v986 = vmul.f32 %v948, %v636
    %v987 = vmul.f32 %v953, %v637
    %v988 = vmul.f32 %v958, %v638
    %v989 = vmul.f32 %v963, %v639
    %v990 = vmul.f32 %v968, %v640
    %v991 = vmul.f32 %v973, %v641
    %992 = vrot.lane.b32.xlu0 %v749, 64
    %v993 = vpop.permute.xlu0 %992
    %994 = vrot.lane.b32.xlu0 %v754, 64
    %v995 = vpop.permute.xlu0 %994
    %996 = vrot.lane.b32.xlu0 %v759, 64
    %v997 = vpop.permute.xlu0 %996
    %998 = vrot.lane.b32.xlu0 %v764, 64
    %v999 = vpop.permute.xlu0 %998
    %1004 = vmatprep.subr.mxu0 0.0
    %1005 = vmatpush1.msra.mxu0 %v993
    %1006 = vmatprep.subr.mxu0 0.0
    %1007 = vmatpush1.msra.mxu0 %v995
    %1008 = vmatprep.subr.mxu0 0.0
    %1009 = vmatpush1.msra.mxu0 %v997
    %1010 = vmatprep.subr.mxu0 0.0
    %1011 = vmatpush1.msra.mxu0 %v999
    %1012 = vmatprep.subr.mxu0 0.0
    %1013 = vmatpush1.msra.mxu0 0.0
    %1014 = vmatprep.subr.mxu0 0.0
    %1015 = vmatpush1.msra.mxu0 0.0
    %1016 = vmatprep.subr.mxu0 0.0
    %1017 = vmatpush1.msra.mxu0 0.0
    %1018 = vmatprep.subr.mxu0 0.0
    %1019 = vmatpush1.msra.mxu0 0.0
    %1020 = vmatprep.subr.mxu0 0.0
    %1021 = vmatpush1.msra.mxu0 0.0
    %1022 = vmatprep.subr.mxu0 0.0
    %1023 = vmatpush1.msra.mxu0 0.0
    %1024 = vmatprep.subr.mxu0 0.0
    %1025 = vmatpush1.msra.mxu0 0.0
    %1026 = vmatprep.subr.mxu0 0.0
    %1027 = vmatpush1.msra.mxu0 0.0
    %1028 = vmatprep.subr.mxu0 0.0
    %1029 = vmatpush1.msra.mxu0 0.0
    %1030 = vmatprep.subr.mxu0 0.0
    %1031 = vmatpush1.msra.mxu0 0.0
    %1032 = vmatprep.subr.mxu0 0.0
    %1033 = vmatpush1.msra.mxu0 0.0
    %1034 = vmatprep.subr.mxu0 0.0
    %1035 = vmatpush1.msra.mxu0 0.0
    %1036 = vmatprep.subr.mxu0 0.0
    %1037 = vmatpush1.msra.mxu0 0.0
    %1038 = vmatprep.subr.mxu0 0.0
    %1039 = vmatpush1.msra.mxu0 0.0
    %1040 = vmatprep.subr.mxu0 0.0
    %1041 = vmatpush1.msra.mxu0 0.0
    %1042 = vmatprep.subr.mxu0 0.0
    %1043 = vmatpush1.msra.mxu0 0.0
    %1044 = vmatprep.subr.mxu0 0.0
    %1045 = vmatpush1.msra.mxu0 0.0
    %1046 = vmatprep.subr.mxu0 0.0
    %1047 = vmatpush1.msra.mxu0 0.0
    %1048 = vmatprep.subr.mxu0 0.0
    %1049 = vmatpush1.msra.mxu0 0.0
    %1050 = vmatprep.subr.mxu0 0.0
    %1051 = vmatpush1.msra.mxu0 0.0
    %1052 = vmatprep.subr.mxu0 0.0
    %1053 = vmatpush1.msra.mxu0 0.0
    %1054 = vmatprep.subr.mxu0 0.0
    %1055 = vmatpush1.msra.mxu0 0.0
    %1056 = vmatprep.subr.mxu0 0.0
    %1057 = vmatpush1.msra.mxu0 0.0
    %1058 = vmatprep.subr.mxu0 0.0
    %1059 = vmatpush1.msra.mxu0 0.0
    %1060 = vmatprep.subr.mxu0 0.0
    %1061 = vmatpush1.msra.mxu0 0.0
    %1062 = vmatprep.subr.mxu0 0.0
    %1063 = vmatpush1.msra.mxu0 0.0
    %1064 = vmatprep.subr.mxu0 0.0
    %1065 = vmatpush1.msra.mxu0 0.0
    %1066 = vmatprep.subr.mxu0 0.0
    %1067 = vmatpush1.msra.mxu0 0.0
    %1068 = vmatprep.mubr.f32.mxu0 0.0
    %1069 = vmatmul.mubr.f32.gmra.mrb[0].mxu0 %v784
    %v1070 = vpop.f32.mrb[0].mxu0
    %v1071 = vadd.f32 0.0, %v1070
    %v1072 = vpop.f32.mrb[0].mxu0
    %1073 = vmatprep.mubr.f32.mxu0 0.0
    %1074 = vmatmul.mubr.f32.gmra.mrb[0].mxu0 %v787
    %v1075 = vpop.f32.mrb[0].mxu0
    %v1076 = vadd.f32 0.0, %v1075
    %v1077 = vpop.f32.mrb[0].mxu0
    %1078 = vmatprep.mubr.f32.mxu0 0.0
    %1079 = vmatmul.mubr.f32.gmra.mrb[0].mxu0 %v790
    %v1080 = vpop.f32.mrb[0].mxu0
    %v1081 = vadd.f32 0.0, %v1080
    %v1082 = vpop.f32.mrb[0].mxu0
    %1083 = vmatprep.mubr.f32.mxu0 0.0
    %1084 = vmatmul.mubr.f32.gmra.mrb[0].mxu0 %v793
    %v1085 = vpop.f32.mrb[0].mxu0
    %v1086 = vadd.f32 0.0, %v1085
    %v1087 = vpop.f32.mrb[0].mxu0
    %1088 = vmatprep.mubr.f32.mxu0 0.0
    %1089 = vmatmul.mubr.f32.gmra.mrb[0].mxu0 %v796
    %v1090 = vpop.f32.mrb[0].mxu0
    %v1091 = vadd.f32 0.0, %v1090
    %v1092 = vpop.f32.mrb[0].mxu0
    %1093 = vmatprep.mubr.f32.mxu0 0.0
    %1094 = vmatmul.mubr.f32.gmra.mrb[0].mxu0 %v799
    %v1095 = vpop.f32.mrb[0].mxu0
    %v1096 = vadd.f32 0.0, %v1095
    %v1097 = vpop.f32.mrb[0].mxu0
    %1098 = vmatprep.mubr.f32.mxu0 0.0
    %1099 = vmatmul.mubr.f32.gmra.mrb[0].mxu0 %v802
    %v1100 = vpop.f32.mrb[0].mxu0
    %v1101 = vadd.f32 0.0, %v1100
    %v1102 = vpop.f32.mrb[0].mxu0
    %1103 = vmatprep.mubr.f32.mxu0 0.0
    %1104 = vmatmul.mubr.f32.gmra.mrb[0].mxu0 %v805
    %v1105 = vpop.f32.mrb[0].mxu0
    %v1106 = vadd.f32 0.0, %v1105
    %v1107 = vpop.f32.mrb[0].mxu0
    %1108 = vmatprep.mubr.f32.mxu0 0.0
    %1109 = vmatmul.mubr.f32.gmra.mrb[0].mxu0 %v808
    %v1110 = vpop.f32.mrb[0].mxu0
    %v1111 = vadd.f32 0.0, %v1110
    %v1112 = vpop.f32.mrb[0].mxu0
    %1113 = vmatprep.mubr.f32.mxu0 0.0
    %1114 = vmatmul.mubr.f32.gmra.mrb[0].mxu0 %v811
    %v1115 = vpop.f32.mrb[0].mxu0
    %v1116 = vadd.f32 0.0, %v1115
    %v1117 = vpop.f32.mrb[0].mxu0
    %1118 = vmatprep.mubr.f32.mxu0 0.0
    %1119 = vmatmul.mubr.f32.gmra.mrb[0].mxu0 %v814
    %v1120 = vpop.f32.mrb[0].mxu0
    %v1121 = vadd.f32 0.0, %v1120
    %v1122 = vpop.f32.mrb[0].mxu0
    %1123 = vmatprep.mubr.f32.mxu0 0.0
    %1124 = vmatmul.mubr.f32.gmra.mrb[0].mxu0 %v817
    %v1125 = vpop.f32.mrb[0].mxu0
    %v1126 = vadd.f32 0.0, %v1125
    %v1127 = vpop.f32.mrb[0].mxu0
    %1128 = vmatprep.mubr.f32.mxu0 0.0
    %1129 = vmatmul.mubr.f32.gmra.mrb[0].mxu0 %v820
    %v1130 = vpop.f32.mrb[0].mxu0
    %v1131 = vadd.f32 0.0, %v1130
    %v1132 = vpop.f32.mrb[0].mxu0
    %1133 = vmatprep.mubr.f32.mxu0 0.0
    %1134 = vmatmul.mubr.f32.gmra.mrb[0].mxu0 %v823
    %v1135 = vpop.f32.mrb[0].mxu0
    %v1136 = vadd.f32 0.0, %v1135
    %v1137 = vpop.f32.mrb[0].mxu0
    %1138 = vmatprep.mubr.f32.mxu0 0.0
    %1139 = vmatmul.mubr.f32.gmra.mrb[0].mxu0 %v826
    %v1140 = vpop.f32.mrb[0].mxu0
    %v1141 = vadd.f32 0.0, %v1140
    %v1142 = vpop.f32.mrb[0].mxu0
    %1143 = vmatprep.mubr.f32.mxu0 0.0
    %1144 = vmatmul.mubr.f32.gmra.mrb[0].mxu0 %v829
    %v1145 = vpop.f32.mrb[0].mxu0
    %v1146 = vadd.f32 0.0, %v1145
    %v1147 = vpop.f32.mrb[0].mxu0
    %1148 = vdwg.mxu0
    %v1149 = vmul.f32 %v1071, %v626
    %v1150 = vmul.f32 %v1076, %v627
    %v1151 = vmul.f32 %v1081, %v628
    %v1152 = vmul.f32 %v1086, %v629
    %v1153 = vmul.f32 %v1091, %v630
    %v1154 = vmul.f32 %v1096, %v631
    %v1155 = vmul.f32 %v1101, %v632
    %v1156 = vmul.f32 %v1106, %v633
    %v1157 = vmul.f32 %v1111, %v634
    %v1158 = vmul.f32 %v1116, %v635
    %v1159 = vmul.f32 %v1121, %v636
    %v1160 = vmul.f32 %v1126, %v637
    %v1161 = vmul.f32 %v1131, %v638
    %v1162 = vmul.f32 %v1136, %v639
    %v1163 = vmul.f32 %v1141, %v640
    %v1164 = vmul.f32 %v1146, %v641
    %v1165 = vsel %vm248, %v749, 0
    %v1167 = vsel %vm248, %v754, 0
    %v1169 = vsel %vm248, %v759, 0
    %v1171 = vsel %vm248, %v764, 0
    %v1174 = vsel %vm248, %v976, 0
    %v1177 = vsel %vm248, %v977, 0
    %v1180 = vsel %vm248, %v978, 0
    %v1183 = vsel %vm248, %v979, 0
    %v1186 = vsel %vm248, %v980, 0
    %v1189 = vsel %vm248, %v981, 0
    %v1192 = vsel %vm248, %v982, 0
    %v1195 = vsel %vm248, %v983, 0
    %v1198 = vsel %vm248, %v984, 0
    %v1201 = vsel %vm248, %v985, 0
    %v1204 = vsel %vm248, %v986, 0
    %v1207 = vsel %vm248, %v987, 0
    %v1210 = vsel %vm248, %v988, 0
    %v1213 = vsel %vm248, %v989, 0
    %v1216 = vsel %vm248, %v990, 0
    %v1219 = vsel %vm248, %v991, 0
    %1221 = vmatprep.subr.mxu0 0.0
    %1222 = vmatpush1.xpose.msra.mxu0 %v1174
    %1223 = vmatprep.subr.mxu0 0.0
    %1224 = vmatpush1.xpose.msra.mxu0 %v1177
    %1225 = vmatprep.subr.mxu0 0.0
    %1226 = vmatpush1.xpose.msra.mxu0 %v1180
    %1227 = vmatprep.subr.mxu0 0.0
    %1228 = vmatpush1.xpose.msra.mxu0 %v1183
    %1229 = vmatprep.subr.mxu0 0.0
    %1230 = vmatpush1.xpose.msra.mxu0 %v1186
    %1231 = vmatprep.subr.mxu0 0.0
    %1232 = vmatpush1.xpose.msra.mxu0 %v1189
    %1233 = vmatprep.subr.mxu0 0.0
    %1234 = vmatpush1.xpose.msra.mxu0 %v1192
    %1235 = vmatprep.subr.mxu0 0.0
    %1236 = vmatpush1.xpose.msra.mxu0 %v1195
    %1237 = vmatprep.subr.mxu0 0.0
    %1238 = vmatpush1.xpose.msra.mxu0 %v1198
    %1239 = vmatprep.subr.mxu0 0.0
    %1240 = vmatpush1.xpose.msra.mxu0 %v1201
    %1241 = vmatprep.subr.mxu0 0.0
    %1242 = vmatpush1.xpose.msra.mxu0 %v1204
    %1243 = vmatprep.subr.mxu0 0.0
    %1244 = vmatpush1.xpose.msra.mxu0 %v1207
    %1245 = vmatprep.subr.mxu0 0.0
    %1246 = vmatpush1.xpose.msra.mxu0 %v1210
    %1247 = vmatprep.subr.mxu0 0.0
    %1248 = vmatpush1.xpose.msra.mxu0 %v1213
    %1249 = vmatprep.subr.mxu0 0.0
    %1250 = vmatpush1.xpose.msra.mxu0 %v1216
    %1251 = vmatprep.subr.mxu0 0.0
    %1252 = vmatpush1.xpose.msra.mxu0 %v1219
    %1253 = vmatprep.subr.mxu0 0.0
    %1254 = vmatpush1.xpose.msra.mxu0 0.0
    %1255 = vmatprep.subr.mxu0 0.0
    %1256 = vmatpush1.xpose.msra.mxu0 0.0
    %1257 = vmatprep.subr.mxu0 0.0
    %1258 = vmatpush1.xpose.msra.mxu0 0.0
    %1259 = vmatprep.subr.mxu0 0.0
    %1260 = vmatpush1.xpose.msra.mxu0 0.0
    %1261 = vmatprep.subr.mxu0 0.0
    %1262 = vmatpush1.xpose.msra.mxu0 0.0
    %1263 = vmatprep.subr.mxu0 0.0
    %1264 = vmatpush1.xpose.msra.mxu0 0.0
    %1265 = vmatprep.subr.mxu0 0.0
    %1266 = vmatpush1.xpose.msra.mxu0 0.0
    %1267 = vmatprep.subr.mxu0 0.0
    %1268 = vmatpush1.xpose.msra.mxu0 0.0
    %1269 = vmatprep.subr.mxu0 0.0
    %1270 = vmatpush1.xpose.msra.mxu0 0.0
    %1271 = vmatprep.subr.mxu0 0.0
    %1272 = vmatpush1.xpose.msra.mxu0 0.0
    %1273 = vmatprep.subr.mxu0 0.0
    %1274 = vmatpush1.xpose.msra.mxu0 0.0
    %1275 = vmatprep.subr.mxu0 0.0
    %1276 = vmatpush1.xpose.msra.mxu0 0.0
    %1277 = vmatprep.subr.mxu0 0.0
    %1278 = vmatpush1.xpose.msra.mxu0 0.0
    %1279 = vmatprep.subr.mxu0 0.0
    %1280 = vmatpush1.xpose.msra.mxu0 0.0
    %1281 = vmatprep.subr.mxu0 0.0
    %1282 = vmatpush1.xpose.msra.mxu0 0.0
    %1283 = vmatprep.subr.mxu0 0.0
    %1284 = vmatpush1.xpose.msra.mxu0 0.0
    %1285 = vmatprep.mubr.f32.mxu0 0.0
    %1286 = vmatmul.mubr.f32.gmra.mrb[0].mxu0 %v1165
    %v1287 = vpop.f32.mrb[0].mxu0
    %v1288 = vadd.f32 %v606, %v1287
    %v1289 = vpop.f32.mrb[0].mxu0
    %1290 = vmatprep.mubr.f32.mxu0 0.0
    %1291 = vmatmul.mubr.f32.gmra.mrb[0].mxu0 %v1167
    %v1292 = vpop.f32.mrb[0].mxu0
    %v1293 = vadd.f32 %v607, %v1292
    %v1294 = vpop.f32.mrb[0].mxu0
    %1295 = vmatprep.mubr.f32.mxu0 0.0
    %1296 = vmatmul.mubr.f32.gmra.mrb[0].mxu0 %v1169
    %v1297 = vpop.f32.mrb[0].mxu0
    %v1298 = vadd.f32 %v608, %v1297
    %v1299 = vpop.f32.mrb[0].mxu0
    %1300 = vmatprep.mubr.f32.mxu0 0.0
    %1301 = vmatmul.mubr.f32.gmra.mrb[0].mxu0 %v1171
    %v1302 = vpop.f32.mrb[0].mxu0
    %v1303 = vadd.f32 %v609, %v1302
    %v1304 = vpop.f32.mrb[0].mxu0
    %1305 = vdwg.mxu0
    %1306 = vmax.xlane.f32.xlu0 %v1288
    %v1307 = vpop.xlane.xlu0 %1306
    %1308 = vmax.xlane.f32.xlu0 %v1293
    %v1309 = vpop.xlane.xlu0 %1308
    %1310 = vmax.xlane.f32.xlu0 %v1298
    %v1311 = vpop.xlane.xlu0 %1310
    %1312 = vmax.xlane.f32.xlu0 %v1303
    %v1313 = vpop.xlane.xlu0 %1312
    %v1314 = vsub.f32 %v1288, %v1307
    %v1315 = vsub.f32 %v1293, %v1309
    %v1316 = vsub.f32 %v1298, %v1311
    %v1317 = vsub.f32 %v1303, %v1313
    %v1318 = vmul.f32 %v1314, 1.442695
    %v1319 = vpow.pop %v1318
    %v1320 = vmul.f32 %v1315, 1.442695
    %v1321 = vpow.pop %v1320
    %v1322 = vmul.f32 %v1316, 1.442695
    %v1323 = vpow.pop %v1322
    %v1324 = vmul.f32 %v1317, 1.442695
    %v1325 = vpow.pop %v1324
    %1326 = vmatprep.subr.mxu0 0.0
    %1327 = vmatpush1.msra.mxu0 %v642
    %1328 = vmatprep.subr.mxu0 0.0
    %1329 = vmatpush1.msra.mxu0 %v643
    %1330 = vmatprep.subr.mxu0 0.0
    %1331 = vmatpush1.msra.mxu0 %v644
    %1332 = vmatprep.subr.mxu0 0.0
    %1333 = vmatpush1.msra.mxu0 %v645
    %1334 = vmatprep.subr.mxu0 0.0
    %1335 = vmatpush1.msra.mxu0 %v646
    %1336 = vmatprep.subr.mxu0 0.0
    %1337 = vmatpush1.msra.mxu0 %v647
    %1338 = vmatprep.subr.mxu0 0.0
    %1339 = vmatpush1.msra.mxu0 %v648
    %1340 = vmatprep.subr.mxu0 0.0
    %1341 = vmatpush1.msra.mxu0 %v649
    %1342 = vmatprep.subr.mxu0 0.0
    %1343 = vmatpush1.msra.mxu0 %v650
    %1344 = vmatprep.subr.mxu0 0.0
    %1345 = vmatpush1.msra.mxu0 %v651
    %1346 = vmatprep.subr.mxu0 0.0
    %1347 = vmatpush1.msra.mxu0 %v652
    %1348 = vmatprep.subr.mxu0 0.0
    %1349 = vmatpush1.msra.mxu0 %v653
    %1350 = vmatprep.subr.mxu0 0.0
    %1351 = vmatpush1.msra.mxu0 %v654
    %1352 = vmatprep.subr.mxu0 0.0
    %1353 = vmatpush1.msra.mxu0 %v655
    %1354 = vmatprep.subr.mxu0 0.0
    %1355 = vmatpush1.msra.mxu0 %v656
    %1356 = vmatprep.subr.mxu0 0.0
    %1357 = vmatpush1.msra.mxu0 %v657
    %1358 = vmatprep.subr.mxu0 0.0
    %1359 = vmatpush1.msra.mxu0 0.0
    %1360 = vmatprep.subr.mxu0 0.0
    %1361 = vmatpush1.msra.mxu0 0.0
    %1362 = vmatprep.subr.mxu0 0.0
    %1363 = vmatpush1.msra.mxu0 0.0
    %1364 = vmatprep.subr.mxu0 0.0
    %1365 = vmatpush1.msra.mxu0 0.0
    %1366 = vmatprep.subr.mxu0 0.0
    %1367 = vmatpush1.msra.mxu0 0.0
    %1368 = vmatprep.subr.mxu0 0.0
    %1369 = vmatpush1.msra.mxu0 0.0
    %1370 = vmatprep.subr.mxu0 0.0
    %1371 = vmatpush1.msra.mxu0 0.0
    %1372 = vmatprep.subr.mxu0 0.0
    %1373 = vmatpush1.msra.mxu0 0.0
    %1374 = vmatprep.subr.mxu0 0.0
    %1375 = vmatpush1.msra.mxu0 0.0
    %1376 = vmatprep.subr.mxu0 0.0
    %1377 = vmatpush1.msra.mxu0 0.0
    %1378 = vmatprep.subr.mxu0 0.0
    %1379 = vmatpush1.msra.mxu0 0.0
    %1380 = vmatprep.subr.mxu0 0.0
    %1381 = vmatpush1.msra.mxu0 0.0
    %1382 = vmatprep.subr.mxu0 0.0
    %1383 = vmatpush1.msra.mxu0 0.0
    %1384 = vmatprep.subr.mxu0 0.0
    %1385 = vmatpush1.msra.mxu0 0.0
    %1386 = vmatprep.subr.mxu0 0.0
    %1387 = vmatpush1.msra.mxu0 0.0
    %1388 = vmatprep.subr.mxu0 0.0
    %1389 = vmatpush1.msra.mxu0 0.0
    %1390 = vmatprep.mubr.f32.mxu0 0.0
    %1391 = vmatmul.mubr.f32.gmra.mrb[0].mxu0 %v1319
    %v1392 = vpop.f32.mrb[0].mxu0
    %v1393 = vadd.f32 0.0, %v1392
    %v1394 = vpop.f32.mrb[0].mxu0
    %1395 = vmatprep.mubr.f32.mxu0 0.0
    %1396 = vmatmul.mubr.f32.gmra.mrb[0].mxu0 %v1321
    %v1397 = vpop.f32.mrb[0].mxu0
    %v1398 = vadd.f32 0.0, %v1397
    %v1399 = vpop.f32.mrb[0].mxu0
    %1400 = vmatprep.mubr.f32.mxu0 0.0
    %1401 = vmatmul.mubr.f32.gmra.mrb[0].mxu0 %v1323
    %v1402 = vpop.f32.mrb[0].mxu0
    %v1403 = vadd.f32 0.0, %v1402
    %v1404 = vpop.f32.mrb[0].mxu0
    %1405 = vmatprep.mubr.f32.mxu0 0.0
    %1406 = vmatmul.mubr.f32.gmra.mrb[0].mxu0 %v1325
    %v1407 = vpop.f32.mrb[0].mxu0
    %v1408 = vadd.f32 0.0, %v1407
    %v1409 = vpop.f32.mrb[0].mxu0
    %1410 = vdwg.mxu0
    %v1411 = vrcp.pop %v1393
    %v1412 = vrcp.pop %v1398
    %v1413 = vrcp.pop %v1403
    %v1414 = vrcp.pop %v1408
    %v1415 = vmul.f32 %v1319, %v1411
    %v1416 = vmul.f32 %v1321, %v1412
    %v1417 = vmul.f32 %v1323, %v1413
    %v1418 = vmul.f32 %v1325, %v1414
    %1419 = vmatprep.subr.mxu0 0.0
    %1420 = vmatpush1.msra.mxu0 %v1149
    %1421 = vmatprep.subr.mxu0 0.0
    %1422 = vmatpush1.msra.mxu0 %v1150
    %1423 = vmatprep.subr.mxu0 0.0
    %1424 = vmatpush1.msra.mxu0 %v1151
    %1425 = vmatprep.subr.mxu0 0.0
    %1426 = vmatpush1.msra.mxu0 %v1152
    %1427 = vmatprep.subr.mxu0 0.0
    %1428 = vmatpush1.msra.mxu0 %v1153
    %1429 = vmatprep.subr.mxu0 0.0
    %1430 = vmatpush1.msra.mxu0 %v1154
    %1431 = vmatprep.subr.mxu0 0.0
    %1432 = vmatpush1.msra.mxu0 %v1155
    %1433 = vmatprep.subr.mxu0 0.0
    %1434 = vmatpush1.msra.mxu0 %v1156
    %1435 = vmatprep.subr.mxu0 0.0
    %1436 = vmatpush1.msra.mxu0 %v1157
    %1437 = vmatprep.subr.mxu0 0.0
    %1438 = vmatpush1.msra.mxu0 %v1158
    %1439 = vmatprep.subr.mxu0 0.0
    %1440 = vmatpush1.msra.mxu0 %v1159
    %1441 = vmatprep.subr.mxu0 0.0
    %1442 = vmatpush1.msra.mxu0 %v1160
    %1443 = vmatprep.subr.mxu0 0.0
    %1444 = vmatpush1.msra.mxu0 %v1161
    %1445 = vmatprep.subr.mxu0 0.0
    %1446 = vmatpush1.msra.mxu0 %v1162
    %1447 = vmatprep.subr.mxu0 0.0
    %1448 = vmatpush1.msra.mxu0 %v1163
    %1449 = vmatprep.subr.mxu0 0.0
    %1450 = vmatpush1.msra.mxu0 %v1164
    %1451 = vmatprep.subr.mxu0 0.0
    %1452 = vmatpush1.msra.mxu0 0.0
    %1453 = vmatprep.subr.mxu0 0.0
    %1454 = vmatpush1.msra.mxu0 0.0
    %1455 = vmatprep.subr.mxu0 0.0
    %1456 = vmatpush1.msra.mxu0 0.0
    %1457 = vmatprep.subr.mxu0 0.0
    %1458 = vmatpush1.msra.mxu0 0.0
    %1459 = vmatprep.subr.mxu0 0.0
    %1460 = vmatpush1.msra.mxu0 0.0
    %1461 = vmatprep.subr.mxu0 0.0
    %1462 = vmatpush1.msra.mxu0 0.0
    %1463 = vmatprep.subr.mxu0 0.0
    %1464 = vmatpush1.msra.mxu0 0.0
    %1465 = vmatprep.subr.mxu0 0.0
    %1466 = vmatpush1.msra.mxu0 0.0
    %1467 = vmatprep.subr.mxu0 0.0
    %1468 = vmatpush1.msra.mxu0 0.0
    %1469 = vmatprep.subr.mxu0 0.0
    %1470 = vmatpush1.msra.mxu0 0.0
    %1471 = vmatprep.subr.mxu0 0.0
    %1472 = vmatpush1.msra.mxu0 0.0
    %1473 = vmatprep.subr.mxu0 0.0
    %1474 = vmatpush1.msra.mxu0 0.0
    %1475 = vmatprep.subr.mxu0 0.0
    %1476 = vmatpush1.msra.mxu0 0.0
    %1477 = vmatprep.subr.mxu0 0.0
    %1478 = vmatpush1.msra.mxu0 0.0
    %1479 = vmatprep.subr.mxu0 0.0
    %1480 = vmatpush1.msra.mxu0 0.0
    %1481 = vmatprep.subr.mxu0 0.0
    %1482 = vmatpush1.msra.mxu0 0.0
    %1483 = vmatprep.mubr.f32.mxu0 0.0
    %1484 = vmatmul.mubr.f32.gmra.mrb[0].mxu0 %v1415
    %v1485 = vpop.f32.mrb[0].mxu0
    %v1486 = vadd.f32 0.0, %v1485
    %v1487 = vpop.f32.mrb[0].mxu0
    %1488 = vmatprep.mubr.f32.mxu0 0.0
    %1489 = vmatmul.mubr.f32.gmra.mrb[0].mxu0 %v1416
    %v1490 = vpop.f32.mrb[0].mxu0
    %v1491 = vadd.f32 0.0, %v1490
    %v1492 = vpop.f32.mrb[0].mxu0
    %1493 = vmatprep.mubr.f32.mxu0 0.0
    %1494 = vmatmul.mubr.f32.gmra.mrb[0].mxu0 %v1417
    %v1495 = vpop.f32.mrb[0].mxu0
    %v1496 = vadd.f32 0.0, %v1495
    %v1497 = vpop.f32.mrb[0].mxu0
    %1498 = vmatprep.mubr.f32.mxu0 0.0
    %1499 = vmatmul.mubr.f32.gmra.mrb[0].mxu0 %v1418
    %v1500 = vpop.f32.mrb[0].mxu0
    %v1501 = vadd.f32 0.0, %v1500
    %v1502 = vpop.f32.mrb[0].mxu0
    %1503 = vdwg.mxu0
    %v1504 = vld [vmem:[#allocation7] sm:$0xff]
    %v1505 = vld [vmem:[#allocation7 + $0x8] sm:$0xff]
    %v1506 = vld [vmem:[#allocation7 + $0x10] sm:$0xff]
    %v1507 = vld [vmem:[#allocation7 + $0x18] sm:$0xff]
    %v1508 = vlaneseq
    %v1509 = vshrl.u32 %v1508, 7
    %v1510 = vsub.s32 0, %v1509
    %v1511 = vrot.slane %v658, %v1510
    %v1513 = vsel %vm248, %v1486, 0
    %v1516 = vsel %vm248, %v1491, 0
    %v1519 = vsel %vm248, %v1496, 0
    %v1522 = vsel %vm248, %v1501, 0
    %1524 = vmatprep.subr.mxu0 0.0
    %1525 = vmatpush1.msra.mxu0 %v1504
    %1526 = vmatprep.subr.mxu0 0.0
    %1527 = vmatpush1.msra.mxu0 %v1505
    %1528 = vmatprep.subr.mxu0 0.0
    %1529 = vmatpush1.msra.mxu0 %v1506
    %1530 = vmatprep.subr.mxu0 0.0
    %1531 = vmatpush1.msra.mxu0 %v1507
    %1532 = vmatprep.subr.mxu0 0.0
    %1533 = vmatpush1.msra.mxu0 0.0
    %1534 = vmatprep.subr.mxu0 0.0
    %1535 = vmatpush1.msra.mxu0 0.0
    %1536 = vmatprep.subr.mxu0 0.0
    %1537 = vmatpush1.msra.mxu0 0.0
    %1538 = vmatprep.subr.mxu0 0.0
    %1539 = vmatpush1.msra.mxu0 0.0
    %1540 = vmatprep.subr.mxu0 0.0
    %1541 = vmatpush1.msra.mxu0 0.0
    %1542 = vmatprep.subr.mxu0 0.0
    %1543 = vmatpush1.msra.mxu0 0.0
    %1544 = vmatprep.subr.mxu0 0.0
    %1545 = vmatpush1.msra.mxu0 0.0
    %1546 = vmatprep.subr.mxu0 0.0
    %1547 = vmatpush1.msra.mxu0 0.0
    %1548 = vmatprep.subr.mxu0 0.0
    %1549 = vmatpush1.msra.mxu0 0.0
    %1550 = vmatprep.subr.mxu0 0.0
    %1551 = vmatpush1.msra.mxu0 0.0
    %1552 = vmatprep.subr.mxu0 0.0
    %1553 = vmatpush1.msra.mxu0 0.0
    %1554 = vmatprep.subr.mxu0 0.0
    %1555 = vmatpush1.msra.mxu0 0.0
    %1556 = vmatprep.subr.mxu0 0.0
    %1557 = vmatpush1.msra.mxu0 0.0
    %1558 = vmatprep.subr.mxu0 0.0
    %1559 = vmatpush1.msra.mxu0 0.0
    %1560 = vmatprep.subr.mxu0 0.0
    %1561 = vmatpush1.msra.mxu0 0.0
    %1562 = vmatprep.subr.mxu0 0.0
    %1563 = vmatpush1.msra.mxu0 0.0
    %1564 = vmatprep.subr.mxu0 0.0
    %1565 = vmatpush1.msra.mxu0 0.0
    %1566 = vmatprep.subr.mxu0 0.0
    %1567 = vmatpush1.msra.mxu0 0.0
    %1568 = vmatprep.subr.mxu0 0.0
    %1569 = vmatpush1.msra.mxu0 0.0
    %1570 = vmatprep.subr.mxu0 0.0
    %1571 = vmatpush1.msra.mxu0 0.0
    %1572 = vmatprep.subr.mxu0 0.0
    %1573 = vmatpush1.msra.mxu0 0.0
    %1574 = vmatprep.subr.mxu0 0.0
    %1575 = vmatpush1.msra.mxu0 0.0
    %1576 = vmatprep.subr.mxu0 0.0
    %1577 = vmatpush1.msra.mxu0 0.0
    %1578 = vmatprep.subr.mxu0 0.0
    %1579 = vmatpush1.msra.mxu0 0.0
    %1580 = vmatprep.subr.mxu0 0.0
    %1581 = vmatpush1.msra.mxu0 0.0
    %1582 = vmatprep.subr.mxu0 0.0
    %1583 = vmatpush1.msra.mxu0 0.0
    %1584 = vmatprep.subr.mxu0 0.0
    %1585 = vmatpush1.msra.mxu0 0.0
    %1586 = vmatprep.subr.mxu0 0.0
    %1587 = vmatpush1.msra.mxu0 0.0
    %1588 = vmatprep.mubr.f32.mxu0 0.0
    %1589 = vmatmul.mubr.f32.gmra.mrb[0].mxu0 %v1513
    %v1590 = vpop.f32.mrb[0].mxu0
    %v1591 = vadd.f32 %v1511, %v1590
    %v1592 = vpop.f32.mrb[0].mxu0
    %1593 = vmatprep.mubr.f32.mxu0 0.0
    %1594 = vmatmul.mubr.f32.gmra.mrb[0].mxu0 %v1516
    %v1595 = vpop.f32.mrb[0].mxu0
    %v1596 = vadd.f32 %v1511, %v1595
    %v1597 = vpop.f32.mrb[0].mxu0
    %1598 = vmatprep.mubr.f32.mxu0 0.0
    %1599 = vmatmul.mubr.f32.gmra.mrb[0].mxu0 %v1519
    %v1600 = vpop.f32.mrb[0].mxu0
    %v1601 = vadd.f32 %v1511, %v1600
    %v1602 = vpop.f32.mrb[0].mxu0
    %1603 = vmatprep.mubr.f32.mxu0 0.0
    %1604 = vmatmul.mubr.f32.gmra.mrb[0].mxu0 %v1522
    %v1605 = vpop.f32.mrb[0].mxu0
    %v1606 = vadd.f32 %v1511, %v1605
    %v1607 = vpop.f32.mrb[0].mxu0
    %1608 = vdwg.mxu0
    %v1609 = vadd.f32 %v588, %v1591
    %v1610 = vadd.f32 %v593, %v1596
    %v1611 = vadd.f32 %v598, %v1601
    %v1612 = vadd.f32 %v603, %v1606
    %v1613 = vsel %vm248, %v1609, 0.0
    %1614 = vadd.xlane.f32.xlu0 %v1613
    %v1615 = vpop.xlane.xlu0 %1614
    %v1616 = vsel %vm248, %v1610, 0.0
    %1617 = vadd.xlane.f32.xlu0 %v1616
    %v1618 = vpop.xlane.xlu0 %1617
    %v1619 = vsel %vm248, %v1611, 0.0
    %1620 = vadd.xlane.f32.xlu0 %v1619
    %v1621 = vpop.xlane.xlu0 %1620
    %v1622 = vsel %vm248, %v1612, 0.0
    %1623 = vadd.xlane.f32.xlu0 %v1622
    %v1624 = vpop.xlane.xlu0 %1623
    %v1625 = vrcp.pop 32.0
    %v1626 = vmul.f32 %v1615, %v1625
    %v1627 = vmul.f32 %v1618, %v1625
    %v1628 = vmul.f32 %v1621, %v1625
    %v1629 = vmul.f32 %v1624, %v1625
    %v1630 = vsub.f32 %v1609, %v1626
    %v1631 = vsub.f32 %v1610, %v1627
    %v1632 = vsub.f32 %v1611, %v1628
    %v1633 = vsub.f32 %v1612, %v1629
    %v1634 = vmul.f32 %v1630, %v1630
    %v1635 = vmul.f32 %v1631, %v1631
    %v1636 = vmul.f32 %v1632, %v1632
    %v1637 = vmul.f32 %v1633, %v1633
    %v1638 = vsel %vm248, %v1634, 0.0
    %1639 = vadd.xlane.f32.xlu0 %v1638
    %v1640 = vpop.xlane.xlu0 %1639
    %v1641 = vsel %vm248, %v1635, 0.0
    %1642 = vadd.xlane.f32.xlu0 %v1641
    %v1643 = vpop.xlane.xlu0 %1642
    %v1644 = vsel %vm248, %v1636, 0.0
    %1645 = vadd.xlane.f32.xlu0 %v1644
    %v1646 = vpop.xlane.xlu0 %1645
    %v1647 = vsel %vm248, %v1637, 0.0
    %1648 = vadd.xlane.f32.xlu0 %v1647
    %v1649 = vpop.xlane.xlu0 %1648
    %v1650 = vmul.f32 %v1640, %v1625
    %v1651 = vmul.f32 %v1643, %v1625
    %v1652 = vmul.f32 %v1646, %v1625
    %v1653 = vmul.f32 %v1649, %v1625
    %v1654 = vadd.f32 %v1650, 1e-05
    %v1655 = vadd.f32 %v1651, 1e-05
    %v1656 = vadd.f32 %v1652, 1e-05
    %v1657 = vadd.f32 %v1653, 1e-05
    %v1658 = vrsqrt.pop %v1654
    %v1659 = vrsqrt.pop %v1655
    %v1660 = vrsqrt.pop %v1656
    %v1661 = vrsqrt.pop %v1657
    %v1662 = vmul.f32 %v1630, %v1658
    %v1663 = vmul.f32 %v1631, %v1659
    %v1664 = vmul.f32 %v1632, %v1660
    %v1665 = vmul.f32 %v1633, %v1661
    %v1666 = vlaneseq
    %v1667 = vshrl.u32 %v1666, 7
    %v1668 = vsub.s32 2, %v1667
    %v1669 = vrot.slane %v658, %v1668
    %v1670 = vmul.f32 %v1662, %v1669
    %v1671 = vmul.f32 %v1663, %v1669
    %v1672 = vmul.f32 %v1664, %v1669
    %v1673 = vmul.f32 %v1665, %v1669
    %v1674 = vlaneseq
    %v1675 = vshrl.u32 %v1674, 7
    %v1676 = vsub.s32 3, %v1675
    %v1677 = vrot.slane %v658, %v1676
    %v1678 = vadd.f32 %v1670, %v1677
    %v1679 = vadd.f32 %v1671, %v1677
    %v1680 = vadd.f32 %v1672, %v1677
    %v1681 = vadd.f32 %v1673, %v1677
    %v1682 = vld [vmem:[%s6] sm:$0xff]
    %v1683 = vld [vmem:[%s6 + $0x8] sm:$0xff]
    %v1684 = vld [vmem:[%s6 + $0x10] sm:$0xff]
    %v1685 = vld [vmem:[%s6 + $0x18] sm:$0xff]
    %v1686 = vld [vmem:[%s7] sm:$0x1]
    %v1688 = vlaneseq
    %v1689 = vshrl.u32 %v1688, 7
    %v1690 = vsub.s32 0, %v1689
    %v1691 = vrot.slane %v1686, %v1690
    %v1694 = vsel %vm248, %v1678, 0
    %v1697 = vsel %vm248, %v1679, 0
    %v1700 = vsel %vm248, %v1680, 0
    %v1703 = vsel %vm248, %v1681, 0
    %1705 = vmatprep.subr.mxu0 0.0
    %1706 = vmatpush1.msra.mxu0 %v1682
    %1707 = vmatprep.subr.mxu0 0.0
    %1708 = vmatpush1.msra.mxu0 %v1683
    %1709 = vmatprep.subr.mxu0 0.0
    %1710 = vmatpush1.msra.mxu0 %v1684
    %1711 = vmatprep.subr.mxu0 0.0
    %1712 = vmatpush1.msra.mxu0 %v1685
    %1713 = vmatprep.subr.mxu0 0.0
    %1714 = vmatpush1.msra.mxu0 0.0
    %1715 = vmatprep.subr.mxu0 0.0
    %1716 = vmatpush1.msra.mxu0 0.0
    %1717 = vmatprep.subr.mxu0 0.0
    %1718 = vmatpush1.msra.mxu0 0.0
    %1719 = vmatprep.subr.mxu0 0.0
    %1720 = vmatpush1.msra.mxu0 0.0
    %1721 = vmatprep.subr.mxu0 0.0
    %1722 = vmatpush1.msra.mxu0 0.0
    %1723 = vmatprep.subr.mxu0 0.0
    %1724 = vmatpush1.msra.mxu0 0.0
    %1725 = vmatprep.subr.mxu0 0.0
    %1726 = vmatpush1.msra.mxu0 0.0
    %1727 = vmatprep.subr.mxu0 0.0
    %1728 = vmatpush1.msra.mxu0 0.0
    %1729 = vmatprep.subr.mxu0 0.0
    %1730 = vmatpush1.msra.mxu0 0.0
    %1731 = vmatprep.subr.mxu0 0.0
    %1732 = vmatpush1.msra.mxu0 0.0
    %1733 = vmatprep.subr.mxu0 0.0
    %1734 = vmatpush1.msra.mxu0 0.0
    %1735 = vmatprep.subr.mxu0 0.0
    %1736 = vmatpush1.msra.mxu0 0.0
    %1737 = vmatprep.subr.mxu0 0.0
    %1738 = vmatpush1.msra.mxu0 0.0
    %1739 = vmatprep.subr.mxu0 0.0
    %1740 = vmatpush1.msra.mxu0 0.0
    %1741 = vmatprep.subr.mxu0 0.0
    %1742 = vmatpush1.msra.mxu0 0.0
    %1743 = vmatprep.subr.mxu0 0.0
    %1744 = vmatpush1.msra.mxu0 0.0
    %1745 = vmatprep.subr.mxu0 0.0
    %1746 = vmatpush1.msra.mxu0 0.0
    %1747 = vmatprep.subr.mxu0 0.0
    %1748 = vmatpush1.msra.mxu0 0.0
    %1749 = vmatprep.subr.mxu0 0.0
    %1750 = vmatpush1.msra.mxu0 0.0
    %1751 = vmatprep.subr.mxu0 0.0
    %1752 = vmatpush1.msra.mxu0 0.0
    %1753 = vmatprep.subr.mxu0 0.0
    %1754 = vmatpush1.msra.mxu0 0.0
    %1755 = vmatprep.subr.mxu0 0.0
    %1756 = vmatpush1.msra.mxu0 0.0
    %1757 = vmatprep.subr.mxu0 0.0
    %1758 = vmatpush1.msra.mxu0 0.0
    %1759 = vmatprep.subr.mxu0 0.0
    %1760 = vmatpush1.msra.mxu0 0.0
    %1761 = vmatprep.subr.mxu0 0.0
    %1762 = vmatpush1.msra.mxu0 0.0
    %1763 = vmatprep.subr.mxu0 0.0
    %1764 = vmatpush1.msra.mxu0 0.0
    %1765 = vmatprep.subr.mxu0 0.0
    %1766 = vmatpush1.msra.mxu0 0.0
    %1767 = vmatprep.subr.mxu0 0.0
    %1768 = vmatpush1.msra.mxu0 0.0
    %1769 = vmatprep.mubr.f32.mxu0 0.0
    %1770 = vmatmul.mubr.f32.gmra.mrb[0].mxu0 %v1694
    %v1771 = vpop.f32.mrb[0].mxu0
    %v1772 = vadd.f32 %v1691, %v1771
    %v1773 = vpop.f32.mrb[0].mxu0
    %1774 = vmatprep.mubr.f32.mxu0 0.0
    %1775 = vmatmul.mubr.f32.gmra.mrb[0].mxu0 %v1697
    %v1776 = vpop.f32.mrb[0].mxu0
    %v1777 = vadd.f32 %v1691, %v1776
    %v1778 = vpop.f32.mrb[0].mxu0
    %1779 = vmatprep.mubr.f32.mxu0 0.0
    %1780 = vmatmul.mubr.f32.gmra.mrb[0].mxu0 %v1700
    %v1781 = vpop.f32.mrb[0].mxu0
    %v1782 = vadd.f32 %v1691, %v1781
    %v1783 = vpop.f32.mrb[0].mxu0
    %1784 = vmatprep.mubr.f32.mxu0 0.0
    %1785 = vmatmul.mubr.f32.gmra.mrb[0].mxu0 %v1703
    %v1786 = vpop.f32.mrb[0].mxu0
    %v1787 = vadd.f32 %v1691, %v1786
    %v1788 = vpop.f32.mrb[0].mxu0
    %1789 = vdwg.mxu0
    %v1790 = vmax.f32 %v1772, 0.0
    %v1791 = vmax.f32 %v1777, 0.0
    %v1792 = vmax.f32 %v1782, 0.0
    %v1793 = vmax.f32 %v1787, 0.0
    %v1794 = vld [vmem:[#allocation9] sm:$0xff]
    %v1795 = vld [vmem:[#allocation9 + $0x8] sm:$0xff]
    %v1796 = vld [vmem:[#allocation9 + $0x10] sm:$0xff]
    %v1797 = vld [vmem:[#allocation9 + $0x18] sm:$0xff]
    %v1798 = vld [vmem:[#allocation9 + $0x20] sm:$0xff]
    %v1799 = vld [vmem:[#allocation9 + $0x28] sm:$0xff]
    %v1800 = vld [vmem:[#allocation9 + $0x30] sm:$0xff]
    %v1801 = vld [vmem:[#allocation9 + $0x38] sm:$0xff]
    %v1802 = vlaneseq
    %v1803 = vshrl.u32 %v1802, 7
    %v1804 = vsub.s32 1, %v1803
    %v1805 = vrot.slane %v658, %v1804
    %vm1806 = vcmask 523264
    %v1808 = vsel %vm1806, %v1790, 0
    %v1811 = vsel %vm1806, %v1791, 0
    %v1814 = vsel %vm1806, %v1792, 0
    %v1817 = vsel %vm1806, %v1793, 0
    %1819 = vmatprep.subr.mxu0 0.0
    %1820 = vmatpush1.msra.mxu0 %v1794
    %1821 = vmatprep.subr.mxu0 0.0
    %1822 = vmatpush1.msra.mxu0 %v1795
    %1823 = vmatprep.subr.mxu0 0.0
    %1824 = vmatpush1.msra.mxu0 %v1796
    %1825 = vmatprep.subr.mxu0 0.0
    %1826 = vmatpush1.msra.mxu0 %v1797
    %1827 = vmatprep.subr.mxu0 0.0
    %1828 = vmatpush1.msra.mxu0 %v1798
    %1829 = vmatprep.subr.mxu0 0.0
    %1830 = vmatpush1.msra.mxu0 %v1799
    %1831 = vmatprep.subr.mxu0 0.0
    %1832 = vmatpush1.msra.mxu0 %v1800
    %1833 = vmatprep.subr.mxu0 0.0
    %1834 = vmatpush1.msra.mxu0 %v1801
    %1835 = vmatprep.subr.mxu0 0.0
    %1836 = vmatpush1.msra.mxu0 0.0
    %1837 = vmatprep.subr.mxu0 0.0
    %1838 = vmatpush1.msra.mxu0 0.0
    %1839 = vmatprep.subr.mxu0 0.0
    %1840 = vmatpush1.msra.mxu0 0.0
    %1841 = vmatprep.subr.mxu0 0.0
    %1842 = vmatpush1.msra.mxu0 0.0
    %1843 = vmatprep.subr.mxu0 0.0
    %1844 = vmatpush1.msra.mxu0 0.0
    %1845 = vmatprep.subr.mxu0 0.0
    %1846 = vmatpush1.msra.mxu0 0.0
    %1847 = vmatprep.subr.mxu0 0.0
    %1848 = vmatpush1.msra.mxu0 0.0
    %1849 = vmatprep.subr.mxu0 0.0
    %1850 = vmatpush1.msra.mxu0 0.0
    %1851 = vmatprep.subr.mxu0 0.0
    %1852 = vmatpush1.msra.mxu0 0.0
    %1853 = vmatprep.subr.mxu0 0.0
    %1854 = vmatpush1.msra.mxu0 0.0
    %1855 = vmatprep.subr.mxu0 0.0
    %1856 = vmatpush1.msra.mxu0 0.0
    %1857 = vmatprep.subr.mxu0 0.0
    %1858 = vmatpush1.msra.mxu0 0.0
    %1859 = vmatprep.subr.mxu0 0.0
    %1860 = vmatpush1.msra.mxu0 0.0
    %1861 = vmatprep.subr.mxu0 0.0
    %1862 = vmatpush1.msra.mxu0 0.0
    %1863 = vmatprep.subr.mxu0 0.0
    %1864 = vmatpush1.msra.mxu0 0.0
    %1865 = vmatprep.subr.mxu0 0.0
    %1866 = vmatpush1.msra.mxu0 0.0
    %1867 = vmatprep.subr.mxu0 0.0
    %1868 = vmatpush1.msra.mxu0 0.0
    %1869 = vmatprep.subr.mxu0 0.0
    %1870 = vmatpush1.msra.mxu0 0.0
    %1871 = vmatprep.subr.mxu0 0.0
    %1872 = vmatpush1.msra.mxu0 0.0
    %1873 = vmatprep.subr.mxu0 0.0
    %1874 = vmatpush1.msra.mxu0 0.0
    %1875 = vmatprep.subr.mxu0 0.0
    %1876 = vmatpush1.msra.mxu0 0.0
    %1877 = vmatprep.subr.mxu0 0.0
    %1878 = vmatpush1.msra.mxu0 0.0
    %1879 = vmatprep.subr.mxu0 0.0
    %1880 = vmatpush1.msra.mxu0 0.0
    %1881 = vmatprep.subr.mxu0 0.0
    %1882 = vmatpush1.msra.mxu0 0.0
    %1883 = vmatprep.mubr.f32.mxu0 0.0
    %1884 = vmatmul.mubr.f32.gmra.mrb[0].mxu0 %v1808
    %v1885 = vpop.f32.mrb[0].mxu0
    %v1886 = vadd.f32 %v1805, %v1885
    %v1887 = vpop.f32.mrb[0].mxu0
    %1888 = vmatprep.mubr.f32.mxu0 0.0
    %1889 = vmatmul.mubr.f32.gmra.mrb[0].mxu0 %v1811
    %v1890 = vpop.f32.mrb[0].mxu0
    %v1891 = vadd.f32 %v1805, %v1890
    %v1892 = vpop.f32.mrb[0].mxu0
    %1893 = vmatprep.mubr.f32.mxu0 0.0
    %1894 = vmatmul.mubr.f32.gmra.mrb[0].mxu0 %v1814
    %v1895 = vpop.f32.mrb[0].mxu0
    %v1896 = vadd.f32 %v1805, %v1895
    %v1897 = vpop.f32.mrb[0].mxu0
    %1898 = vmatprep.mubr.f32.mxu0 0.0
    %1899 = vmatmul.mubr.f32.gmra.mrb[0].mxu0 %v1817
    %v1900 = vpop.f32.mrb[0].mxu0
    %v1901 = vadd.f32 %v1805, %v1900
    %v1902 = vpop.f32.mrb[0].mxu0
    %1903 = vdwg.mxu0
    %v1904 = vadd.f32 %v1678, %v1886
    %v1905 = vadd.f32 %v1679, %v1891
    %v1906 = vadd.f32 %v1680, %v1896
    %v1907 = vadd.f32 %v1681, %v1901
    %v1908 = vsel %vm248, %v1904, 0.0
    %1909 = vadd.xlane.f32.xlu0 %v1908
    %v1910 = vpop.xlane.xlu0 %1909
    %v1911 = vsel %vm248, %v1905, 0.0
    %1912 = vadd.xlane.f32.xlu0 %v1911
    %v1913 = vpop.xlane.xlu0 %1912
    %v1914 = vsel %vm248, %v1906, 0.0
    %1915 = vadd.xlane.f32.xlu0 %v1914
    %v1916 = vpop.xlane.xlu0 %1915
    %v1917 = vsel %vm248, %v1907, 0.0
    %1918 = vadd.xlane.f32.xlu0 %v1917
    %v1919 = vpop.xlane.xlu0 %1918
    %v1920 = vmul.f32 %v1910, %v1625
    %v1921 = vmul.f32 %v1913, %v1625
    %v1922 = vmul.f32 %v1916, %v1625
    %v1923 = vmul.f32 %v1919, %v1625
    %v1924 = vsub.f32 %v1904, %v1920
    %v1925 = vsub.f32 %v1905, %v1921
    %v1926 = vsub.f32 %v1906, %v1922
    %v1927 = vsub.f32 %v1907, %v1923
    %v1928 = vmul.f32 %v1924, %v1924
    %v1929 = vmul.f32 %v1925, %v1925
    %v1930 = vmul.f32 %v1926, %v1926
    %v1931 = vmul.f32 %v1927, %v1927
    %v1932 = vsel %vm248, %v1928, 0.0
    %1933 = vadd.xlane.f32.xlu0 %v1932
    %v1934 = vpop.xlane.xlu0 %1933
    %v1935 = vsel %vm248, %v1929, 0.0
    %1936 = vadd.xlane.f32.xlu0 %v1935
    %v1937 = vpop.xlane.xlu0 %1936
    %v1938 = vsel %vm248, %v1930, 0.0
    %1939 = vadd.xlane.f32.xlu0 %v1938
    %v1940 = vpop.xlane.xlu0 %1939
    %v1941 = vsel %vm248, %v1931, 0.0
    %1942 = vadd.xlane.f32.xlu0 %v1941
    %v1943 = vpop.xlane.xlu0 %1942
    %v1944 = vmul.f32 %v1934, %v1625
    %v1945 = vmul.f32 %v1937, %v1625
    %v1946 = vmul.f32 %v1940, %v1625
    %v1947 = vmul.f32 %v1943, %v1625
    %v1948 = vadd.f32 %v1944, 1e-05
    %v1949 = vadd.f32 %v1945, 1e-05
    %v1950 = vadd.f32 %v1946, 1e-05
    %v1951 = vadd.f32 %v1947, 1e-05
    %v1952 = vrsqrt.pop %v1948
    %v1953 = vrsqrt.pop %v1949
    %v1954 = vrsqrt.pop %v1950
    %v1955 = vrsqrt.pop %v1951
    %v1956 = vmul.f32 %v1924, %v1952
    %v1957 = vmul.f32 %v1925, %v1953
    %v1958 = vmul.f32 %v1926, %v1954
    %v1959 = vmul.f32 %v1927, %v1955
    %v1960 = vlaneseq
    %v1961 = vshrl.u32 %v1960, 7
    %v1962 = vsub.s32 4, %v1961
    %v1963 = vrot.slane %v658, %v1962
    %v1964 = vmul.f32 %v1956, %v1963
    %v1965 = vmul.f32 %v1957, %v1963
    %v1966 = vmul.f32 %v1958, %v1963
    %v1967 = vmul.f32 %v1959, %v1963
    %v1968 = vlaneseq
    %v1969 = vshrl.u32 %v1968, 7
    %v1970 = vsub.s32 5, %v1969
    %v1971 = vrot.slane %v658, %v1970
    %v1972 = vadd.f32 %v1964, %v1971
    %v1973 = vadd.f32 %v1965, %v1971
    %v1974 = vadd.f32 %v1966, %v1971
    %v1975 = vadd.f32 %v1967, %v1971
    %s1976 = scalar_lea.vmem [#allocation10], 8
    %v1977 = vld [vmem:[%s1976] sm:$0x3f]
    %s1978 = scalar_lea.vmem [#allocation6], 32
    %v1979 = vld [vmem:[%s1978] sm:$0xff]
    %v1980 = vld [vmem:[%s1978 + $0x8] sm:$0xff]
    %v1981 = vld [vmem:[%s1978 + $0x10] sm:$0xff]
    %v1982 = vld [vmem:[%s1978 + $0x18] sm:$0xff]
    %s1983 = scalar_lea.vmem %s4, 1
    %v1984 = vld [vmem:[%s1983] sm:$0x1]
    %v1986 = vlaneseq
    %v1987 = vshrl.u32 %v1986, 7
    %v1988 = vsub.s32 0, %v1987
    %v1989 = vrot.slane %v1984, %v1988
    %v1992 = vsel %vm248, %v1972, 0
    %v1995 = vsel %vm248, %v1973, 0
    %v1998 = vsel %vm248, %v1974, 0
    %v2001 = vsel %vm248, %v1975, 0
    %2003 = vmatprep.subr.mxu0 0.0
    %2004 = vmatpush1.msra.mxu0 %v1979
    %2005 = vmatprep.subr.mxu0 0.0
    %2006 = vmatpush1.msra.mxu0 %v1980
    %2007 = vmatprep.subr.mxu0 0.0
    %2008 = vmatpush1.msra.mxu0 %v1981
    %2009 = vmatprep.subr.mxu0 0.0
    %2010 = vmatpush1.msra.mxu0 %v1982
    %2011 = vmatprep.subr.mxu0 0.0
    %2012 = vmatpush1.msra.mxu0 0.0
    %2013 = vmatprep.subr.mxu0 0.0
    %2014 = vmatpush1.msra.mxu0 0.0
    %2015 = vmatprep.subr.mxu0 0.0
    %2016 = vmatpush1.msra.mxu0 0.0
    %2017 = vmatprep.subr.mxu0 0.0
    %2018 = vmatpush1.msra.mxu0 0.0
    %2019 = vmatprep.subr.mxu0 0.0
    %2020 = vmatpush1.msra.mxu0 0.0
    %2021 = vmatprep.subr.mxu0 0.0
    %2022 = vmatpush1.msra.mxu0 0.0
    %2023 = vmatprep.subr.mxu0 0.0
    %2024 = vmatpush1.msra.mxu0 0.0
    %2025 = vmatprep.subr.mxu0 0.0
    %2026 = vmatpush1.msra.mxu0 0.0
    %2027 = vmatprep.subr.mxu0 0.0
    %2028 = vmatpush1.msra.mxu0 0.0
    %2029 = vmatprep.subr.mxu0 0.0
    %2030 = vmatpush1.msra.mxu0 0.0
    %2031 = vmatprep.subr.mxu0 0.0
    %2032 = vmatpush1.msra.mxu0 0.0
    %2033 = vmatprep.subr.mxu0 0.0
    %2034 = vmatpush1.msra.mxu0 0.0
    %2035 = vmatprep.subr.mxu0 0.0
    %2036 = vmatpush1.msra.mxu0 0.0
    %2037 = vmatprep.subr.mxu0 0.0
    %2038 = vmatpush1.msra.mxu0 0.0
    %2039 = vmatprep.subr.mxu0 0.0
    %2040 = vmatpush1.msra.mxu0 0.0
    %2041 = vmatprep.subr.mxu0 0.0
    %2042 = vmatpush1.msra.mxu0 0.0
    %2043 = vmatprep.subr.mxu0 0.0
    %2044 = vmatpush1.msra.mxu0 0.0
    %2045 = vmatprep.subr.mxu0 0.0
    %2046 = vmatpush1.msra.mxu0 0.0
    %2047 = vmatprep.subr.mxu0 0.0
    %2048 = vmatpush1.msra.mxu0 0.0
    %2049 = vmatprep.subr.mxu0 0.0
    %2050 = vmatpush1.msra.mxu0 0.0
    %2051 = vmatprep.subr.mxu0 0.0
    %2052 = vmatpush1.msra.mxu0 0.0
    %2053 = vmatprep.subr.mxu0 0.0
    %2054 = vmatpush1.msra.mxu0 0.0
    %2055 = vmatprep.subr.mxu0 0.0
    %2056 = vmatpush1.msra.mxu0 0.0
    %2057 = vmatprep.subr.mxu0 0.0
    %2058 = vmatpush1.msra.mxu0 0.0
    %2059 = vmatprep.subr.mxu0 0.0
    %2060 = vmatpush1.msra.mxu0 0.0
    %2061 = vmatprep.subr.mxu0 0.0
    %2062 = vmatpush1.msra.mxu0 0.0
    %2063 = vmatprep.subr.mxu0 0.0
    %2064 = vmatpush1.msra.mxu0 0.0
    %2065 = vmatprep.subr.mxu0 0.0
    %2066 = vmatpush1.msra.mxu0 0.0
    %2067 = vmatprep.mubr.f32.mxu0 0.0
    %2068 = vmatmul.mubr.f32.gmra.mrb[0].mxu0 %v1992
    %v2069 = vpop.f32.mrb[0].mxu0
    %v2070 = vadd.f32 %v1989, %v2069
    %v2071 = vpop.f32.mrb[0].mxu0
    %2072 = vmatprep.mubr.f32.mxu0 0.0
    %2073 = vmatmul.mubr.f32.gmra.mrb[0].mxu0 %v1995
    %v2074 = vpop.f32.mrb[0].mxu0
    %v2075 = vadd.f32 %v1989, %v2074
    %v2076 = vpop.f32.mrb[0].mxu0
    %2077 = vmatprep.mubr.f32.mxu0 0.0
    %2078 = vmatmul.mubr.f32.gmra.mrb[0].mxu0 %v1998
    %v2079 = vpop.f32.mrb[0].mxu0
    %v2080 = vadd.f32 %v1989, %v2079
    %v2081 = vpop.f32.mrb[0].mxu0
    %2082 = vmatprep.mubr.f32.mxu0 0.0
    %2083 = vmatmul.mubr.f32.gmra.mrb[0].mxu0 %v2001
    %v2084 = vpop.f32.mrb[0].mxu0
    %v2085 = vadd.f32 %v1989, %v2084
    %v2086 = vpop.f32.mrb[0].mxu0
    %2087 = vdwg.mxu0
    %2092 = vrot.lane.b32.xlu0 %v2070, 96
    %v2093 = vpop.permute.xlu0 %2092
    %2094 = vrot.lane.b32.xlu0 %v2075, 96
    %v2095 = vpop.permute.xlu0 %2094
    %2096 = vrot.lane.b32.xlu0 %v2080, 96
    %v2097 = vpop.permute.xlu0 %2096
    %2098 = vrot.lane.b32.xlu0 %v2085, 96
    %v2099 = vpop.permute.xlu0 %2098
    %2104 = vmatprep.subr.mxu0 0.0
    %2105 = vmatpush1.msra.mxu0 %v2093
    %2106 = vmatprep.subr.mxu0 0.0
    %2107 = vmatpush1.msra.mxu0 %v2095
    %2108 = vmatprep.subr.mxu0 0.0
    %2109 = vmatpush1.msra.mxu0 %v2097
    %2110 = vmatprep.subr.mxu0 0.0
    %2111 = vmatpush1.msra.mxu0 %v2099
    %2112 = vmatprep.subr.mxu0 0.0
    %2113 = vmatpush1.msra.mxu0 0.0
    %2114 = vmatprep.subr.mxu0 0.0
    %2115 = vmatpush1.msra.mxu0 0.0
    %2116 = vmatprep.subr.mxu0 0.0
    %2117 = vmatpush1.msra.mxu0 0.0
    %2118 = vmatprep.subr.mxu0 0.0
    %2119 = vmatpush1.msra.mxu0 0.0
    %2120 = vmatprep.subr.mxu0 0.0
    %2121 = vmatpush1.msra.mxu0 0.0
    %2122 = vmatprep.subr.mxu0 0.0
    %2123 = vmatpush1.msra.mxu0 0.0
    %2124 = vmatprep.subr.mxu0 0.0
    %2125 = vmatpush1.msra.mxu0 0.0
    %2126 = vmatprep.subr.mxu0 0.0
    %2127 = vmatpush1.msra.mxu0 0.0
    %2128 = vmatprep.subr.mxu0 0.0
    %2129 = vmatpush1.msra.mxu0 0.0
    %2130 = vmatprep.subr.mxu0 0.0
    %2131 = vmatpush1.msra.mxu0 0.0
    %2132 = vmatprep.subr.mxu0 0.0
    %2133 = vmatpush1.msra.mxu0 0.0
    %2134 = vmatprep.subr.mxu0 0.0
    %2135 = vmatpush1.msra.mxu0 0.0
    %2136 = vmatprep.subr.mxu0 0.0
    %2137 = vmatpush1.msra.mxu0 0.0
    %2138 = vmatprep.subr.mxu0 0.0
    %2139 = vmatpush1.msra.mxu0 0.0
    %2140 = vmatprep.subr.mxu0 0.0
    %2141 = vmatpush1.msra.mxu0 0.0
    %2142 = vmatprep.subr.mxu0 0.0
    %2143 = vmatpush1.msra.mxu0 0.0
    %2144 = vmatprep.subr.mxu0 0.0
    %2145 = vmatpush1.msra.mxu0 0.0
    %2146 = vmatprep.subr.mxu0 0.0
    %2147 = vmatpush1.msra.mxu0 0.0
    %2148 = vmatprep.subr.mxu0 0.0
    %2149 = vmatpush1.msra.mxu0 0.0
    %2150 = vmatprep.subr.mxu0 0.0
    %2151 = vmatpush1.msra.mxu0 0.0
    %2152 = vmatprep.subr.mxu0 0.0
    %2153 = vmatpush1.msra.mxu0 0.0
    %2154 = vmatprep.subr.mxu0 0.0
    %2155 = vmatpush1.msra.mxu0 0.0
    %2156 = vmatprep.subr.mxu0 0.0
    %2157 = vmatpush1.msra.mxu0 0.0
    %2158 = vmatprep.subr.mxu0 0.0
    %2159 = vmatpush1.msra.mxu0 0.0
    %2160 = vmatprep.subr.mxu0 0.0
    %2161 = vmatpush1.msra.mxu0 0.0
    %2162 = vmatprep.subr.mxu0 0.0
    %2163 = vmatpush1.msra.mxu0 0.0
    %2164 = vmatprep.subr.mxu0 0.0
    %2165 = vmatpush1.msra.mxu0 0.0
    %2166 = vmatprep.subr.mxu0 0.0
    %2167 = vmatpush1.msra.mxu0 0.0
    %2168 = vmatprep.mubr.f32.mxu0 0.0
    %2169 = vmatmul.mubr.f32.gmra.mrb[0].mxu0 %v784
    %v2170 = vpop.f32.mrb[0].mxu0
    %v2171 = vadd.f32 0.0, %v2170
    %v2172 = vpop.f32.mrb[0].mxu0
    %2173 = vmatprep.mubr.f32.mxu0 0.0
    %2174 = vmatmul.mubr.f32.gmra.mrb[0].mxu0 %v787
    %v2175 = vpop.f32.mrb[0].mxu0
    %v2176 = vadd.f32 0.0, %v2175
    %v2177 = vpop.f32.mrb[0].mxu0
    %2178 = vmatprep.mubr.f32.mxu0 0.0
    %2179 = vmatmul.mubr.f32.gmra.mrb[0].mxu0 %v790
    %v2180 = vpop.f32.mrb[0].mxu0
    %v2181 = vadd.f32 0.0, %v2180
    %v2182 = vpop.f32.mrb[0].mxu0
    %2183 = vmatprep.mubr.f32.mxu0 0.0
    %2184 = vmatmul.mubr.f32.gmra.mrb[0].mxu0 %v793
    %v2185 = vpop.f32.mrb[0].mxu0
    %v2186 = vadd.f32 0.0, %v2185
    %v2187 = vpop.f32.mrb[0].mxu0
    %2188 = vmatprep.mubr.f32.mxu0 0.0
    %2189 = vmatmul.mubr.f32.gmra.mrb[0].mxu0 %v796
    %v2190 = vpop.f32.mrb[0].mxu0
    %v2191 = vadd.f32 0.0, %v2190
    %v2192 = vpop.f32.mrb[0].mxu0
    %2193 = vmatprep.mubr.f32.mxu0 0.0
    %2194 = vmatmul.mubr.f32.gmra.mrb[0].mxu0 %v799
    %v2195 = vpop.f32.mrb[0].mxu0
    %v2196 = vadd.f32 0.0, %v2195
    %v2197 = vpop.f32.mrb[0].mxu0
    %2198 = vmatprep.mubr.f32.mxu0 0.0
    %2199 = vmatmul.mubr.f32.gmra.mrb[0].mxu0 %v802
    %v2200 = vpop.f32.mrb[0].mxu0
    %v2201 = vadd.f32 0.0, %v2200
    %v2202 = vpop.f32.mrb[0].mxu0
    %2203 = vmatprep.mubr.f32.mxu0 0.0
    %2204 = vmatmul.mubr.f32.gmra.mrb[0].mxu0 %v805
    %v2205 = vpop.f32.mrb[0].mxu0
    %v2206 = vadd.f32 0.0, %v2205
    %v2207 = vpop.f32.mrb[0].mxu0
    %2208 = vmatprep.mubr.f32.mxu0 0.0
    %2209 = vmatmul.mubr.f32.gmra.mrb[0].mxu0 %v808
    %v2210 = vpop.f32.mrb[0].mxu0
    %v2211 = vadd.f32 0.0, %v2210
    %v2212 = vpop.f32.mrb[0].mxu0
    %2213 = vmatprep.mubr.f32.mxu0 0.0
    %2214 = vmatmul.mubr.f32.gmra.mrb[0].mxu0 %v811
    %v2215 = vpop.f32.mrb[0].mxu0
    %v2216 = vadd.f32 0.0, %v2215
    %v2217 = vpop.f32.mrb[0].mxu0
    %2218 = vmatprep.mubr.f32.mxu0 0.0
    %2219 = vmatmul.mubr.f32.gmra.mrb[0].mxu0 %v814
    %v2220 = vpop.f32.mrb[0].mxu0
    %v2221 = vadd.f32 0.0, %v2220
    %v2222 = vpop.f32.mrb[0].mxu0
    %2223 = vmatprep.mubr.f32.mxu0 0.0
    %2224 = vmatmul.mubr.f32.gmra.mrb[0].mxu0 %v817
    %v2225 = vpop.f32.mrb[0].mxu0
    %v2226 = vadd.f32 0.0, %v2225
    %v2227 = vpop.f32.mrb[0].mxu0
    %2228 = vmatprep.mubr.f32.mxu0 0.0
    %2229 = vmatmul.mubr.f32.gmra.mrb[0].mxu0 %v820
    %v2230 = vpop.f32.mrb[0].mxu0
    %v2231 = vadd.f32 0.0, %v2230
    %v2232 = vpop.f32.mrb[0].mxu0
    %2233 = vmatprep.mubr.f32.mxu0 0.0
    %2234 = vmatmul.mubr.f32.gmra.mrb[0].mxu0 %v823
    %v2235 = vpop.f32.mrb[0].mxu0
    %v2236 = vadd.f32 0.0, %v2235
    %v2237 = vpop.f32.mrb[0].mxu0
    %2238 = vmatprep.mubr.f32.mxu0 0.0
    %2239 = vmatmul.mubr.f32.gmra.mrb[0].mxu0 %v826
    %v2240 = vpop.f32.mrb[0].mxu0
    %v2241 = vadd.f32 0.0, %v2240
    %v2242 = vpop.f32.mrb[0].mxu0
    %2243 = vmatprep.mubr.f32.mxu0 0.0
    %2244 = vmatmul.mubr.f32.gmra.mrb[0].mxu0 %v829
    %v2245 = vpop.f32.mrb[0].mxu0
    %v2246 = vadd.f32 0.0, %v2245
    %v2247 = vpop.f32.mrb[0].mxu0
    %2248 = vdwg.mxu0
    %v2249 = vmul.f32 %v2171, %v626
    %v2250 = vmul.f32 %v2176, %v627
    %v2251 = vmul.f32 %v2181, %v628
    %v2252 = vmul.f32 %v2186, %v629
    %v2253 = vmul.f32 %v2191, %v630
    %v2254 = vmul.f32 %v2196, %v631
    %v2255 = vmul.f32 %v2201, %v632
    %v2256 = vmul.f32 %v2206, %v633
    %v2257 = vmul.f32 %v2211, %v634
    %v2258 = vmul.f32 %v2216, %v635
    %v2259 = vmul.f32 %v2221, %v636
    %v2260 = vmul.f32 %v2226, %v637
    %v2261 = vmul.f32 %v2231, %v638
    %v2262 = vmul.f32 %v2236, %v639
    %v2263 = vmul.f32 %v2241, %v640
    %v2264 = vmul.f32 %v2246, %v641
    %2265 = vrot.lane.b32.xlu0 %v2070, 64
    %v2266 = vpop.permute.xlu0 %2265
    %2267 = vrot.lane.b32.xlu0 %v2075, 64
    %v2268 = vpop.permute.xlu0 %2267
    %2269 = vrot.lane.b32.xlu0 %v2080, 64
    %v2270 = vpop.permute.xlu0 %2269
    %2271 = vrot.lane.b32.xlu0 %v2085, 64
    %v2272 = vpop.permute.xlu0 %2271
    %2277 = vmatprep.subr.mxu0 0.0
    %2278 = vmatpush1.msra.mxu0 %v2266
    %2279 = vmatprep.subr.mxu0 0.0
    %2280 = vmatpush1.msra.mxu0 %v2268
    %2281 = vmatprep.subr.mxu0 0.0
    %2282 = vmatpush1.msra.mxu0 %v2270
    %2283 = vmatprep.subr.mxu0 0.0
    %2284 = vmatpush1.msra.mxu0 %v2272
    %2285 = vmatprep.subr.mxu0 0.0
    %2286 = vmatpush1.msra.mxu0 0.0
    %2287 = vmatprep.subr.mxu0 0.0
    %2288 = vmatpush1.msra.mxu0 0.0
    %2289 = vmatprep.subr.mxu0 0.0
    %2290 = vmatpush1.msra.mxu0 0.0
    %2291 = vmatprep.subr.mxu0 0.0
    %2292 = vmatpush1.msra.mxu0 0.0
    %2293 = vmatprep.subr.mxu0 0.0
    %2294 = vmatpush1.msra.mxu0 0.0
    %2295 = vmatprep.subr.mxu0 0.0
    %2296 = vmatpush1.msra.mxu0 0.0
    %2297 = vmatprep.subr.mxu0 0.0
    %2298 = vmatpush1.msra.mxu0 0.0
    %2299 = vmatprep.subr.mxu0 0.0
    %2300 = vmatpush1.msra.mxu0 0.0
    %2301 = vmatprep.subr.mxu0 0.0
    %2302 = vmatpush1.msra.mxu0 0.0
    %2303 = vmatprep.subr.mxu0 0.0
    %2304 = vmatpush1.msra.mxu0 0.0
    %2305 = vmatprep.subr.mxu0 0.0
    %2306 = vmatpush1.msra.mxu0 0.0
    %2307 = vmatprep.subr.mxu0 0.0
    %2308 = vmatpush1.msra.mxu0 0.0
    %2309 = vmatprep.subr.mxu0 0.0
    %2310 = vmatpush1.msra.mxu0 0.0
    %2311 = vmatprep.subr.mxu0 0.0
    %2312 = vmatpush1.msra.mxu0 0.0
    %2313 = vmatprep.subr.mxu0 0.0
    %2314 = vmatpush1.msra.mxu0 0.0
    %2315 = vmatprep.subr.mxu0 0.0
    %2316 = vmatpush1.msra.mxu0 0.0
    %2317 = vmatprep.subr.mxu0 0.0
    %2318 = vmatpush1.msra.mxu0 0.0
    %2319 = vmatprep.subr.mxu0 0.0
    %2320 = vmatpush1.msra.mxu0 0.0
    %2321 = vmatprep.subr.mxu0 0.0
    %2322 = vmatpush1.msra.mxu0 0.0
    %2323 = vmatprep.subr.mxu0 0.0
    %2324 = vmatpush1.msra.mxu0 0.0
    %2325 = vmatprep.subr.mxu0 0.0
    %2326 = vmatpush1.msra.mxu0 0.0
    %2327 = vmatprep.subr.mxu0 0.0
    %2328 = vmatpush1.msra.mxu0 0.0
    %2329 = vmatprep.subr.mxu0 0.0
    %2330 = vmatpush1.msra.mxu0 0.0
    %2331 = vmatprep.subr.mxu0 0.0
    %2332 = vmatpush1.msra.mxu0 0.0
    %2333 = vmatprep.subr.mxu0 0.0
    %2334 = vmatpush1.msra.mxu0 0.0
    %2335 = vmatprep.subr.mxu0 0.0
    %2336 = vmatpush1.msra.mxu0 0.0
    %2337 = vmatprep.subr.mxu0 0.0
    %2338 = vmatpush1.msra.mxu0 0.0
    %2339 = vmatprep.subr.mxu0 0.0
    %2340 = vmatpush1.msra.mxu0 0.0
    %2341 = vmatprep.mubr.f32.mxu0 0.0
    %2342 = vmatmul.mubr.f32.gmra.mrb[0].mxu0 %v784
    %v2343 = vpop.f32.mrb[0].mxu0
    %v2344 = vadd.f32 0.0, %v2343
    %v2345 = vpop.f32.mrb[0].mxu0
    %2346 = vmatprep.mubr.f32.mxu0 0.0
    %2347 = vmatmul.mubr.f32.gmra.mrb[0].mxu0 %v787
    %v2348 = vpop.f32.mrb[0].mxu0
    %v2349 = vadd.f32 0.0, %v2348
    %v2350 = vpop.f32.mrb[0].mxu0
    %2351 = vmatprep.mubr.f32.mxu0 0.0
    %2352 = vmatmul.mubr.f32.gmra.mrb[0].mxu0 %v790
    %v2353 = vpop.f32.mrb[0].mxu0
    %v2354 = vadd.f32 0.0, %v2353
    %v2355 = vpop.f32.mrb[0].mxu0
    %2356 = vmatprep.mubr.f32.mxu0 0.0
    %2357 = vmatmul.mubr.f32.gmra.mrb[0].mxu0 %v793
    %v2358 = vpop.f32.mrb[0].mxu0
    %v2359 = vadd.f32 0.0, %v2358
    %v2360 = vpop.f32.mrb[0].mxu0
    %2361 = vmatprep.mubr.f32.mxu0 0.0
    %2362 = vmatmul.mubr.f32.gmra.mrb[0].mxu0 %v796
    %v2363 = vpop.f32.mrb[0].mxu0
    %v2364 = vadd.f32 0.0, %v2363
    %v2365 = vpop.f32.mrb[0].mxu0
    %2366 = vmatprep.mubr.f32.mxu0 0.0
    %2367 = vmatmul.mubr.f32.gmra.mrb[0].mxu0 %v799
    %v2368 = vpop.f32.mrb[0].mxu0
    %v2369 = vadd.f32 0.0, %v2368
    %v2370 = vpop.f32.mrb[0].mxu0
    %2371 = vmatprep.mubr.f32.mxu0 0.0
    %2372 = vmatmul.mubr.f32.gmra.mrb[0].mxu0 %v802
    %v2373 = vpop.f32.mrb[0].mxu0
    %v2374 = vadd.f32 0.0, %v2373
    %v2375 = vpop.f32.mrb[0].mxu0
    %2376 = vmatprep.mubr.f32.mxu0 0.0
    %2377 = vmatmul.mubr.f32.gmra.mrb[0].mxu0 %v805
    %v2378 = vpop.f32.mrb[0].mxu0
    %v2379 = vadd.f32 0.0, %v2378
    %v2380 = vpop.f32.mrb[0].mxu0
    %2381 = vmatprep.mubr.f32.mxu0 0.0
    %2382 = vmatmul.mubr.f32.gmra.mrb[0].mxu0 %v808
    %v2383 = vpop.f32.mrb[0].mxu0
    %v2384 = vadd.f32 0.0, %v2383
    %v2385 = vpop.f32.mrb[0].mxu0
    %2386 = vmatprep.mubr.f32.mxu0 0.0
    %2387 = vmatmul.mubr.f32.gmra.mrb[0].mxu0 %v811
    %v2388 = vpop.f32.mrb[0].mxu0
    %v2389 = vadd.f32 0.0, %v2388
    %v2390 = vpop.f32.mrb[0].mxu0
    %2391 = vmatprep.mubr.f32.mxu0 0.0
    %2392 = vmatmul.mubr.f32.gmra.mrb[0].mxu0 %v814
    %v2393 = vpop.f32.mrb[0].mxu0
    %v2394 = vadd.f32 0.0, %v2393
    %v2395 = vpop.f32.mrb[0].mxu0
    %2396 = vmatprep.mubr.f32.mxu0 0.0
    %2397 = vmatmul.mubr.f32.gmra.mrb[0].mxu0 %v817
    %v2398 = vpop.f32.mrb[0].mxu0
    %v2399 = vadd.f32 0.0, %v2398
    %v2400 = vpop.f32.mrb[0].mxu0
    %2401 = vmatprep.mubr.f32.mxu0 0.0
    %2402 = vmatmul.mubr.f32.gmra.mrb[0].mxu0 %v820
    %v2403 = vpop.f32.mrb[0].mxu0
    %v2404 = vadd.f32 0.0, %v2403
    %v2405 = vpop.f32.mrb[0].mxu0
    %2406 = vmatprep.mubr.f32.mxu0 0.0
    %2407 = vmatmul.mubr.f32.gmra.mrb[0].mxu0 %v823
    %v2408 = vpop.f32.mrb[0].mxu0
    %v2409 = vadd.f32 0.0, %v2408
    %v2410 = vpop.f32.mrb[0].mxu0
    %2411 = vmatprep.mubr.f32.mxu0 0.0
    %2412 = vmatmul.mubr.f32.gmra.mrb[0].mxu0 %v826
    %v2413 = vpop.f32.mrb[0].mxu0
    %v2414 = vadd.f32 0.0, %v2413
    %v2415 = vpop.f32.mrb[0].mxu0
    %2416 = vmatprep.mubr.f32.mxu0 0.0
    %2417 = vmatmul.mubr.f32.gmra.mrb[0].mxu0 %v829
    %v2418 = vpop.f32.mrb[0].mxu0
    %v2419 = vadd.f32 0.0, %v2418
    %v2420 = vpop.f32.mrb[0].mxu0
    %2421 = vdwg.mxu0
    %v2422 = vmul.f32 %v2344, %v626
    %v2423 = vmul.f32 %v2349, %v627
    %v2424 = vmul.f32 %v2354, %v628
    %v2425 = vmul.f32 %v2359, %v629
    %v2426 = vmul.f32 %v2364, %v630
    %v2427 = vmul.f32 %v2369, %v631
    %v2428 = vmul.f32 %v2374, %v632
    %v2429 = vmul.f32 %v2379, %v633
    %v2430 = vmul.f32 %v2384, %v634
    %v2431 = vmul.f32 %v2389, %v635
    %v2432 = vmul.f32 %v2394, %v636
    %v2433 = vmul.f32 %v2399, %v637
    %v2434 = vmul.f32 %v2404, %v638
    %v2435 = vmul.f32 %v2409, %v639
    %v2436 = vmul.f32 %v2414, %v640
    %v2437 = vmul.f32 %v2419, %v641
    %v2438 = vsel %vm248, %v2070, 0
    %v2440 = vsel %vm248, %v2075, 0
    %v2442 = vsel %vm248, %v2080, 0
    %v2444 = vsel %vm248, %v2085, 0
    %v2447 = vsel %vm248, %v2249, 0
    %v2450 = vsel %vm248, %v2250, 0
    %v2453 = vsel %vm248, %v2251, 0
    %v2456 = vsel %vm248, %v2252, 0
    %v2459 = vsel %vm248, %v2253, 0
    %v2462 = vsel %vm248, %v2254, 0
    %v2465 = vsel %vm248, %v2255, 0
    %v2468 = vsel %vm248, %v2256, 0
    %v2471 = vsel %vm248, %v2257, 0
    %v2474 = vsel %vm248, %v2258, 0
    %v2477 = vsel %vm248, %v2259, 0
    %v2480 = vsel %vm248, %v2260, 0
    %v2483 = vsel %vm248, %v2261, 0
    %v2486 = vsel %vm248, %v2262, 0
    %v2489 = vsel %vm248, %v2263, 0
    %v2492 = vsel %vm248, %v2264, 0
    %2494 = vmatprep.subr.mxu0 0.0
    %2495 = vmatpush1.xpose.msra.mxu0 %v2447
    %2496 = vmatprep.subr.mxu0 0.0
    %2497 = vmatpush1.xpose.msra.mxu0 %v2450
    %2498 = vmatprep.subr.mxu0 0.0
    %2499 = vmatpush1.xpose.msra.mxu0 %v2453
    %2500 = vmatprep.subr.mxu0 0.0
    %2501 = vmatpush1.xpose.msra.mxu0 %v2456
    %2502 = vmatprep.subr.mxu0 0.0
    %2503 = vmatpush1.xpose.msra.mxu0 %v2459
    %2504 = vmatprep.subr.mxu0 0.0
    %2505 = vmatpush1.xpose.msra.mxu0 %v2462
    %2506 = vmatprep.subr.mxu0 0.0
    %2507 = vmatpush1.xpose.msra.mxu0 %v2465
    %2508 = vmatprep.subr.mxu0 0.0
    %2509 = vmatpush1.xpose.msra.mxu0 %v2468
    %2510 = vmatprep.subr.mxu0 0.0
    %2511 = vmatpush1.xpose.msra.mxu0 %v2471
    %2512 = vmatprep.subr.mxu0 0.0
    %2513 = vmatpush1.xpose.msra.mxu0 %v2474
    %2514 = vmatprep.subr.mxu0 0.0
    %2515 = vmatpush1.xpose.msra.mxu0 %v2477
    %2516 = vmatprep.subr.mxu0 0.0
    %2517 = vmatpush1.xpose.msra.mxu0 %v2480
    %2518 = vmatprep.subr.mxu0 0.0
    %2519 = vmatpush1.xpose.msra.mxu0 %v2483
    %2520 = vmatprep.subr.mxu0 0.0
    %2521 = vmatpush1.xpose.msra.mxu0 %v2486
    %2522 = vmatprep.subr.mxu0 0.0
    %2523 = vmatpush1.xpose.msra.mxu0 %v2489
    %2524 = vmatprep.subr.mxu0 0.0
    %2525 = vmatpush1.xpose.msra.mxu0 %v2492
    %2526 = vmatprep.subr.mxu0 0.0
    %2527 = vmatpush1.xpose.msra.mxu0 0.0
    %2528 = vmatprep.subr.mxu0 0.0
    %2529 = vmatpush1.xpose.msra.mxu0 0.0
    %2530 = vmatprep.subr.mxu0 0.0
    %2531 = vmatpush1.xpose.msra.mxu0 0.0
    %2532 = vmatprep.subr.mxu0 0.0
    %2533 = vmatpush1.xpose.msra.mxu0 0.0
    %2534 = vmatprep.subr.mxu0 0.0
    %2535 = vmatpush1.xpose.msra.mxu0 0.0
    %2536 = vmatprep.subr.mxu0 0.0
    %2537 = vmatpush1.xpose.msra.mxu0 0.0
    %2538 = vmatprep.subr.mxu0 0.0
    %2539 = vmatpush1.xpose.msra.mxu0 0.0
    %2540 = vmatprep.subr.mxu0 0.0
    %2541 = vmatpush1.xpose.msra.mxu0 0.0
    %2542 = vmatprep.subr.mxu0 0.0
    %2543 = vmatpush1.xpose.msra.mxu0 0.0
    %2544 = vmatprep.subr.mxu0 0.0
    %2545 = vmatpush1.xpose.msra.mxu0 0.0
    %2546 = vmatprep.subr.mxu0 0.0
    %2547 = vmatpush1.xpose.msra.mxu0 0.0
    %2548 = vmatprep.subr.mxu0 0.0
    %2549 = vmatpush1.xpose.msra.mxu0 0.0
    %2550 = vmatprep.subr.mxu0 0.0
    %2551 = vmatpush1.xpose.msra.mxu0 0.0
    %2552 = vmatprep.subr.mxu0 0.0
    %2553 = vmatpush1.xpose.msra.mxu0 0.0
    %2554 = vmatprep.subr.mxu0 0.0
    %2555 = vmatpush1.xpose.msra.mxu0 0.0
    %2556 = vmatprep.subr.mxu0 0.0
    %2557 = vmatpush1.xpose.msra.mxu0 0.0
    %2558 = vmatprep.mubr.f32.mxu0 0.0
    %2559 = vmatmul.mubr.f32.gmra.mrb[0].mxu0 %v2438
    %v2560 = vpop.f32.mrb[0].mxu0
    %v2561 = vadd.f32 %v606, %v2560
    %v2562 = vpop.f32.mrb[0].mxu0
    %2563 = vmatprep.mubr.f32.mxu0 0.0
    %2564 = vmatmul.mubr.f32.gmra.mrb[0].mxu0 %v2440
    %v2565 = vpop.f32.mrb[0].mxu0
    %v2566 = vadd.f32 %v607, %v2565
    %v2567 = vpop.f32.mrb[0].mxu0
    %2568 = vmatprep.mubr.f32.mxu0 0.0
    %2569 = vmatmul.mubr.f32.gmra.mrb[0].mxu0 %v2442
    %v2570 = vpop.f32.mrb[0].mxu0
    %v2571 = vadd.f32 %v608, %v2570
    %v2572 = vpop.f32.mrb[0].mxu0
    %2573 = vmatprep.mubr.f32.mxu0 0.0
    %2574 = vmatmul.mubr.f32.gmra.mrb[0].mxu0 %v2444
    %v2575 = vpop.f32.mrb[0].mxu0
    %v2576 = vadd.f32 %v609, %v2575
    %v2577 = vpop.f32.mrb[0].mxu0
    %2578 = vdwg.mxu0
    %2579 = vmax.xlane.f32.xlu0 %v2561
    %v2580 = vpop.xlane.xlu0 %2579
    %2581 = vmax.xlane.f32.xlu0 %v2566
    %v2582 = vpop.xlane.xlu0 %2581
    %2583 = vmax.xlane.f32.xlu0 %v2571
    %v2584 = vpop.xlane.xlu0 %2583
    %2585 = vmax.xlane.f32.xlu0 %v2576
    %v2586 = vpop.xlane.xlu0 %2585
    %v2587 = vsub.f32 %v2561, %v2580
    %v2588 = vsub.f32 %v2566, %v2582
    %v2589 = vsub.f32 %v2571, %v2584
    %v2590 = vsub.f32 %v2576, %v2586
    %v2591 = vmul.f32 %v2587, 1.442695
    %v2592 = vpow.pop %v2591
    %v2593 = vmul.f32 %v2588, 1.442695
    %v2594 = vpow.pop %v2593
    %v2595 = vmul.f32 %v2589, 1.442695
    %v2596 = vpow.pop %v2595
    %v2597 = vmul.f32 %v2590, 1.442695
    %v2598 = vpow.pop %v2597
    %2599 = vmatprep.subr.mxu0 0.0
    %2600 = vmatpush1.msra.mxu0 %v642
    %2601 = vmatprep.subr.mxu0 0.0
    %2602 = vmatpush1.msra.mxu0 %v643
    %2603 = vmatprep.subr.mxu0 0.0
    %2604 = vmatpush1.msra.mxu0 %v644
    %2605 = vmatprep.subr.mxu0 0.0
    %2606 = vmatpush1.msra.mxu0 %v645
    %2607 = vmatprep.subr.mxu0 0.0
    %2608 = vmatpush1.msra.mxu0 %v646
    %2609 = vmatprep.subr.mxu0 0.0
    %2610 = vmatpush1.msra.mxu0 %v647
    %2611 = vmatprep.subr.mxu0 0.0
    %2612 = vmatpush1.msra.mxu0 %v648
    %2613 = vmatprep.subr.mxu0 0.0
    %2614 = vmatpush1.msra.mxu0 %v649
    %2615 = vmatprep.subr.mxu0 0.0
    %2616 = vmatpush1.msra.mxu0 %v650
    %2617 = vmatprep.subr.mxu0 0.0
    %2618 = vmatpush1.msra.mxu0 %v651
    %2619 = vmatprep.subr.mxu0 0.0
    %2620 = vmatpush1.msra.mxu0 %v652
    %2621 = vmatprep.subr.mxu0 0.0
    %2622 = vmatpush1.msra.mxu0 %v653
    %2623 = vmatprep.subr.mxu0 0.0
    %2624 = vmatpush1.msra.mxu0 %v654
    %2625 = vmatprep.subr.mxu0 0.0
    %2626 = vmatpush1.msra.mxu0 %v655
    %2627 = vmatprep.subr.mxu0 0.0
    %2628 = vmatpush1.msra.mxu0 %v656
    %2629 = vmatprep.subr.mxu0 0.0
    %2630 = vmatpush1.msra.mxu0 %v657
    %2631 = vmatprep.subr.mxu0 0.0
    %2632 = vmatpush1.msra.mxu0 0.0
    %2633 = vmatprep.subr.mxu0 0.0
    %2634 = vmatpush1.msra.mxu0 0.0
    %2635 = vmatprep.subr.mxu0 0.0
    %2636 = vmatpush1.msra.mxu0 0.0
    %2637 = vmatprep.subr.mxu0 0.0
    %2638 = vmatpush1.msra.mxu0 0.0
    %2639 = vmatprep.subr.mxu0 0.0
    %2640 = vmatpush1.msra.mxu0 0.0
    %2641 = vmatprep.subr.mxu0 0.0
    %2642 = vmatpush1.msra.mxu0 0.0
    %2643 = vmatprep.subr.mxu0 0.0
    %2644 = vmatpush1.msra.mxu0 0.0
    %2645 = vmatprep.subr.mxu0 0.0
    %2646 = vmatpush1.msra.mxu0 0.0
    %2647 = vmatprep.subr.mxu0 0.0
    %2648 = vmatpush1.msra.mxu0 0.0
    %2649 = vmatprep.subr.mxu0 0.0
    %2650 = vmatpush1.msra.mxu0 0.0
    %2651 = vmatprep.subr.mxu0 0.0
    %2652 = vmatpush1.msra.mxu0 0.0
    %2653 = vmatprep.subr.mxu0 0.0
    %2654 = vmatpush1.msra.mxu0 0.0
    %2655 = vmatprep.subr.mxu0 0.0
    %2656 = vmatpush1.msra.mxu0 0.0
    %2657 = vmatprep.subr.mxu0 0.0
    %2658 = vmatpush1.msra.mxu0 0.0
    %2659 = vmatprep.subr.mxu0 0.0
    %2660 = vmatpush1.msra.mxu0 0.0
    %2661 = vmatprep.subr.mxu0 0.0
    %2662 = vmatpush1.msra.mxu0 0.0
    %2663 = vmatprep.mubr.f32.mxu0 0.0
    %2664 = vmatmul.mubr.f32.gmra.mrb[0].mxu0 %v2592
    %v2665 = vpop.f32.mrb[0].mxu0
    %v2666 = vadd.f32 0.0, %v2665
    %v2667 = vpop.f32.mrb[0].mxu0
    %2668 = vmatprep.mubr.f32.mxu0 0.0
    %2669 = vmatmul.mubr.f32.gmra.mrb[0].mxu0 %v2594
    %v2670 = vpop.f32.mrb[0].mxu0
    %v2671 = vadd.f32 0.0, %v2670
    %v2672 = vpop.f32.mrb[0].mxu0
    %2673 = vmatprep.mubr.f32.mxu0 0.0
    %2674 = vmatmul.mubr.f32.gmra.mrb[0].mxu0 %v2596
    %v2675 = vpop.f32.mrb[0].mxu0
    %v2676 = vadd.f32 0.0, %v2675
    %v2677 = vpop.f32.mrb[0].mxu0
    %2678 = vmatprep.mubr.f32.mxu0 0.0
    %2679 = vmatmul.mubr.f32.gmra.mrb[0].mxu0 %v2598
    %v2680 = vpop.f32.mrb[0].mxu0
    %v2681 = vadd.f32 0.0, %v2680
    %v2682 = vpop.f32.mrb[0].mxu0
    %2683 = vdwg.mxu0
    %v2684 = vrcp.pop %v2666
    %v2685 = vrcp.pop %v2671
    %v2686 = vrcp.pop %v2676
    %v2687 = vrcp.pop %v2681
    %v2688 = vmul.f32 %v2592, %v2684
    %v2689 = vmul.f32 %v2594, %v2685
    %v2690 = vmul.f32 %v2596, %v2686
    %v2691 = vmul.f32 %v2598, %v2687
    %2692 = vmatprep.subr.mxu0 0.0
    %2693 = vmatpush1.msra.mxu0 %v2422
    %2694 = vmatprep.subr.mxu0 0.0
    %2695 = vmatpush1.msra.mxu0 %v2423
    %2696 = vmatprep.subr.mxu0 0.0
    %2697 = vmatpush1.msra.mxu0 %v2424
    %2698 = vmatprep.subr.mxu0 0.0
    %2699 = vmatpush1.msra.mxu0 %v2425
    %2700 = vmatprep.subr.mxu0 0.0
    %2701 = vmatpush1.msra.mxu0 %v2426
    %2702 = vmatprep.subr.mxu0 0.0
    %2703 = vmatpush1.msra.mxu0 %v2427
    %2704 = vmatprep.subr.mxu0 0.0
    %2705 = vmatpush1.msra.mxu0 %v2428
    %2706 = vmatprep.subr.mxu0 0.0
    %2707 = vmatpush1.msra.mxu0 %v2429
    %2708 = vmatprep.subr.mxu0 0.0
    %2709 = vmatpush1.msra.mxu0 %v2430
    %2710 = vmatprep.subr.mxu0 0.0
    %2711 = vmatpush1.msra.mxu0 %v2431
    %2712 = vmatprep.subr.mxu0 0.0
    %2713 = vmatpush1.msra.mxu0 %v2432
    %2714 = vmatprep.subr.mxu0 0.0
    %2715 = vmatpush1.msra.mxu0 %v2433
    %2716 = vmatprep.subr.mxu0 0.0
    %2717 = vmatpush1.msra.mxu0 %v2434
    %2718 = vmatprep.subr.mxu0 0.0
    %2719 = vmatpush1.msra.mxu0 %v2435
    %2720 = vmatprep.subr.mxu0 0.0
    %2721 = vmatpush1.msra.mxu0 %v2436
    %2722 = vmatprep.subr.mxu0 0.0
    %2723 = vmatpush1.msra.mxu0 %v2437
    %2724 = vmatprep.subr.mxu0 0.0
    %2725 = vmatpush1.msra.mxu0 0.0
    %2726 = vmatprep.subr.mxu0 0.0
    %2727 = vmatpush1.msra.mxu0 0.0
    %2728 = vmatprep.subr.mxu0 0.0
    %2729 = vmatpush1.msra.mxu0 0.0
    %2730 = vmatprep.subr.mxu0 0.0
    %2731 = vmatpush1.msra.mxu0 0.0
    %2732 = vmatprep.subr.mxu0 0.0
    %2733 = vmatpush1.msra.mxu0 0.0
    %2734 = vmatprep.subr.mxu0 0.0
    %2735 = vmatpush1.msra.mxu0 0.0
    %2736 = vmatprep.subr.mxu0 0.0
    %2737 = vmatpush1.msra.mxu0 0.0
    %2738 = vmatprep.subr.mxu0 0.0
    %2739 = vmatpush1.msra.mxu0 0.0
    %2740 = vmatprep.subr.mxu0 0.0
    %2741 = vmatpush1.msra.mxu0 0.0
    %2742 = vmatprep.subr.mxu0 0.0
    %2743 = vmatpush1.msra.mxu0 0.0
    %2744 = vmatprep.subr.mxu0 0.0
    %2745 = vmatpush1.msra.mxu0 0.0
    %2746 = vmatprep.subr.mxu0 0.0
    %2747 = vmatpush1.msra.mxu0 0.0
    %2748 = vmatprep.subr.mxu0 0.0
    %2749 = vmatpush1.msra.mxu0 0.0
    %2750 = vmatprep.subr.mxu0 0.0
    %2751 = vmatpush1.msra.mxu0 0.0
    %2752 = vmatprep.subr.mxu0 0.0
    %2753 = vmatpush1.msra.mxu0 0.0
    %2754 = vmatprep.subr.mxu0 0.0
    %2755 = vmatpush1.msra.mxu0 0.0
    %2756 = vmatprep.mubr.f32.mxu0 0.0
    %2757 = vmatmul.mubr.f32.gmra.mrb[0].mxu0 %v2688
    %v2758 = vpop.f32.mrb[0].mxu0
    %v2759 = vadd.f32 0.0, %v2758
    %v2760 = vpop.f32.mrb[0].mxu0
    %2761 = vmatprep.mubr.f32.mxu0 0.0
    %2762 = vmatmul.mubr.f32.gmra.mrb[0].mxu0 %v2689
    %v2763 = vpop.f32.mrb[0].mxu0
    %v2764 = vadd.f32 0.0, %v2763
    %v2765 = vpop.f32.mrb[0].mxu0
    %2766 = vmatprep.mubr.f32.mxu0 0.0
    %2767 = vmatmul.mubr.f32.gmra.mrb[0].mxu0 %v2690
    %v2768 = vpop.f32.mrb[0].mxu0
    %v2769 = vadd.f32 0.0, %v2768
    %v2770 = vpop.f32.mrb[0].mxu0
    %2771 = vmatprep.mubr.f32.mxu0 0.0
    %2772 = vmatmul.mubr.f32.gmra.mrb[0].mxu0 %v2691
    %v2773 = vpop.f32.mrb[0].mxu0
    %v2774 = vadd.f32 0.0, %v2773
    %v2775 = vpop.f32.mrb[0].mxu0
    %2776 = vdwg.mxu0
    %s2777 = scalar_lea.vmem [#allocation7], 32
    %v2778 = vld [vmem:[%s2777] sm:$0xff]
    %v2779 = vld [vmem:[%s2777 + $0x8] sm:$0xff]
    %v2780 = vld [vmem:[%s2777 + $0x10] sm:$0xff]
    %v2781 = vld [vmem:[%s2777 + $0x18] sm:$0xff]
    %v2782 = vlaneseq
    %v2783 = vshrl.u32 %v2782, 7
    %v2784 = vsub.s32 0, %v2783
    %v2785 = vrot.slane %v1977, %v2784
    %v2787 = vsel %vm248, %v2759, 0
    %v2790 = vsel %vm248, %v2764, 0
    %v2793 = vsel %vm248, %v2769, 0
    %v2796 = vsel %vm248, %v2774, 0
    %2798 = vmatprep.subr.mxu0 0.0
    %2799 = vmatpush1.msra.mxu0 %v2778
    %2800 = vmatprep.subr.mxu0 0.0
    %2801 = vmatpush1.msra.mxu0 %v2779
    %2802 = vmatprep.subr.mxu0 0.0
    %2803 = vmatpush1.msra.mxu0 %v2780
    %2804 = vmatprep.subr.mxu0 0.0
    %2805 = vmatpush1.msra.mxu0 %v2781
    %2806 = vmatprep.subr.mxu0 0.0
    %2807 = vmatpush1.msra.mxu0 0.0
    %2808 = vmatprep.subr.mxu0 0.0
    %2809 = vmatpush1.msra.mxu0 0.0
    %2810 = vmatprep.subr.mxu0 0.0
    %2811 = vmatpush1.msra.mxu0 0.0
    %2812 = vmatprep.subr.mxu0 0.0
    %2813 = vmatpush1.msra.mxu0 0.0
    %2814 = vmatprep.subr.mxu0 0.0
    %2815 = vmatpush1.msra.mxu0 0.0
    %2816 = vmatprep.subr.mxu0 0.0
    %2817 = vmatpush1.msra.mxu0 0.0
    %2818 = vmatprep.subr.mxu0 0.0
    %2819 = vmatpush1.msra.mxu0 0.0
    %2820 = vmatprep.subr.mxu0 0.0
    %2821 = vmatpush1.msra.mxu0 0.0
    %2822 = vmatprep.subr.mxu0 0.0
    %2823 = vmatpush1.msra.mxu0 0.0
    %2824 = vmatprep.subr.mxu0 0.0
    %2825 = vmatpush1.msra.mxu0 0.0
    %2826 = vmatprep.subr.mxu0 0.0
    %2827 = vmatpush1.msra.mxu0 0.0
    %2828 = vmatprep.subr.mxu0 0.0
    %2829 = vmatpush1.msra.mxu0 0.0
    %2830 = vmatprep.subr.mxu0 0.0
    %2831 = vmatpush1.msra.mxu0 0.0
    %2832 = vmatprep.subr.mxu0 0.0
    %2833 = vmatpush1.msra.mxu0 0.0
    %2834 = vmatprep.subr.mxu0 0.0
    %2835 = vmatpush1.msra.mxu0 0.0
    %2836 = vmatprep.subr.mxu0 0.0
    %2837 = vmatpush1.msra.mxu0 0.0
    %2838 = vmatprep.subr.mxu0 0.0
    %2839 = vmatpush1.msra.mxu0 0.0
    %2840 = vmatprep.subr.mxu0 0.0
    %2841 = vmatpush1.msra.mxu0 0.0
    %2842 = vmatprep.subr.mxu0 0.0
    %2843 = vmatpush1.msra.mxu0 0.0
    %2844 = vmatprep.subr.mxu0 0.0
    %2845 = vmatpush1.msra.mxu0 0.0
    %2846 = vmatprep.subr.mxu0 0.0
    %2847 = vmatpush1.msra.mxu0 0.0
    %2848 = vmatprep.subr.mxu0 0.0
    %2849 = vmatpush1.msra.mxu0 0.0
    %2850 = vmatprep.subr.mxu0 0.0
    %2851 = vmatpush1.msra.mxu0 0.0
    %2852 = vmatprep.subr.mxu0 0.0
    %2853 = vmatpush1.msra.mxu0 0.0
    %2854 = vmatprep.subr.mxu0 0.0
    %2855 = vmatpush1.msra.mxu0 0.0
    %2856 = vmatprep.subr.mxu0 0.0
    %2857 = vmatpush1.msra.mxu0 0.0
    %2858 = vmatprep.subr.mxu0 0.0
    %2859 = vmatpush1.msra.mxu0 0.0
    %2860 = vmatprep.subr.mxu0 0.0
    %2861 = vmatpush1.msra.mxu0 0.0
    %2862 = vmatprep.mubr.f32.mxu0 0.0
    %2863 = vmatmul.mubr.f32.gmra.mrb[0].mxu0 %v2787
    %v2864 = vpop.f32.mrb[0].mxu0
    %v2865 = vadd.f32 %v2785, %v2864
    %v2866 = vpop.f32.mrb[0].mxu0
    %2867 = vmatprep.mubr.f32.mxu0 0.0
    %2868 = vmatmul.mubr.f32.gmra.mrb[0].mxu0 %v2790
    %v2869 = vpop.f32.mrb[0].mxu0
    %v2870 = vadd.f32 %v2785, %v2869
    %v2871 = vpop.f32.mrb[0].mxu0
    %2872 = vmatprep.mubr.f32.mxu0 0.0
    %2873 = vmatmul.mubr.f32.gmra.mrb[0].mxu0 %v2793
    %v2874 = vpop.f32.mrb[0].mxu0
    %v2875 = vadd.f32 %v2785, %v2874
    %v2876 = vpop.f32.mrb[0].mxu0
    %2877 = vmatprep.mubr.f32.mxu0 0.0
    %2878 = vmatmul.mubr.f32.gmra.mrb[0].mxu0 %v2796
    %v2879 = vpop.f32.mrb[0].mxu0
    %v2880 = vadd.f32 %v2785, %v2879
    %v2881 = vpop.f32.mrb[0].mxu0
    %2882 = vdwg.mxu0
    %v2883 = vadd.f32 %v1972, %v2865
    %v2884 = vadd.f32 %v1973, %v2870
    %v2885 = vadd.f32 %v1974, %v2875
    %v2886 = vadd.f32 %v1975, %v2880
    %v2887 = vsel %vm248, %v2883, 0.0
    %2888 = vadd.xlane.f32.xlu0 %v2887
    %v2889 = vpop.xlane.xlu0 %2888
    %v2890 = vsel %vm248, %v2884, 0.0
    %2891 = vadd.xlane.f32.xlu0 %v2890
    %v2892 = vpop.xlane.xlu0 %2891
    %v2893 = vsel %vm248, %v2885, 0.0
    %2894 = vadd.xlane.f32.xlu0 %v2893
    %v2895 = vpop.xlane.xlu0 %2894
    %v2896 = vsel %vm248, %v2886, 0.0
    %2897 = vadd.xlane.f32.xlu0 %v2896
    %v2898 = vpop.xlane.xlu0 %2897
    %v2899 = vmul.f32 %v2889, %v1625
    %v2900 = vmul.f32 %v2892, %v1625
    %v2901 = vmul.f32 %v2895, %v1625
    %v2902 = vmul.f32 %v2898, %v1625
    %v2903 = vsub.f32 %v2883, %v2899
    %v2904 = vsub.f32 %v2884, %v2900
    %v2905 = vsub.f32 %v2885, %v2901
    %v2906 = vsub.f32 %v2886, %v2902
    %v2907 = vmul.f32 %v2903, %v2903
    %v2908 = vmul.f32 %v2904, %v2904
    %v2909 = vmul.f32 %v2905, %v2905
    %v2910 = vmul.f32 %v2906, %v2906
    %v2911 = vsel %vm248, %v2907, 0.0
    %2912 = vadd.xlane.f32.xlu0 %v2911
    %v2913 = vpop.xlane.xlu0 %2912
    %v2914 = vsel %vm248, %v2908, 0.0
    %2915 = vadd.xlane.f32.xlu0 %v2914
    %v2916 = vpop.xlane.xlu0 %2915
    %v2917 = vsel %vm248, %v2909, 0.0
    %2918 = vadd.xlane.f32.xlu0 %v2917
    %v2919 = vpop.xlane.xlu0 %2918
    %v2920 = vsel %vm248, %v2910, 0.0
    %2921 = vadd.xlane.f32.xlu0 %v2920
    %v2922 = vpop.xlane.xlu0 %2921
    %v2923 = vmul.f32 %v2913, %v1625
    %v2924 = vmul.f32 %v2916, %v1625
    %v2925 = vmul.f32 %v2919, %v1625
    %v2926 = vmul.f32 %v2922, %v1625
    %v2927 = vadd.f32 %v2923, 1e-05
    %v2928 = vadd.f32 %v2924, 1e-05
    %v2929 = vadd.f32 %v2925, 1e-05
    %v2930 = vadd.f32 %v2926, 1e-05
    %v2931 = vrsqrt.pop %v2927
    %v2932 = vrsqrt.pop %v2928
    %v2933 = vrsqrt.pop %v2929
    %v2934 = vrsqrt.pop %v2930
    %v2935 = vmul.f32 %v2903, %v2931
    %v2936 = vmul.f32 %v2904, %v2932
    %v2937 = vmul.f32 %v2905, %v2933
    %v2938 = vmul.f32 %v2906, %v2934
    %v2939 = vlaneseq
    %v2940 = vshrl.u32 %v2939, 7
    %v2941 = vsub.s32 2, %v2940
    %v2942 = vrot.slane %v1977, %v2941
    %v2943 = vmul.f32 %v2935, %v2942
    %v2944 = vmul.f32 %v2936, %v2942
    %v2945 = vmul.f32 %v2937, %v2942
    %v2946 = vmul.f32 %v2938, %v2942
    %v2947 = vlaneseq
    %v2948 = vshrl.u32 %v2947, 7
    %v2949 = vsub.s32 3, %v2948
    %v2950 = vrot.slane %v1977, %v2949
    %v2951 = vadd.f32 %v2943, %v2950
    %v2952 = vadd.f32 %v2944, %v2950
    %v2953 = vadd.f32 %v2945, %v2950
    %v2954 = vadd.f32 %v2946, %v2950
    %s2955 = scalar_lea.vmem %s6, 32
    %v2956 = vld [vmem:[%s2955] sm:$0xff]
    %v2957 = vld [vmem:[%s2955 + $0x8] sm:$0xff]
    %v2958 = vld [vmem:[%s2955 + $0x10] sm:$0xff]
    %v2959 = vld [vmem:[%s2955 + $0x18] sm:$0xff]
    %s2960 = scalar_lea.vmem %s7, 1
    %v2961 = vld [vmem:[%s2960] sm:$0x1]
    %v2963 = vlaneseq
    %v2964 = vshrl.u32 %v2963, 7
    %v2965 = vsub.s32 0, %v2964
    %v2966 = vrot.slane %v2961, %v2965
    %v2969 = vsel %vm248, %v2951, 0
    %v2972 = vsel %vm248, %v2952, 0
    %v2975 = vsel %vm248, %v2953, 0
    %v2978 = vsel %vm248, %v2954, 0
    %2980 = vmatprep.subr.mxu0 0.0
    %2981 = vmatpush1.msra.mxu0 %v2956
    %2982 = vmatprep.subr.mxu0 0.0
    %2983 = vmatpush1.msra.mxu0 %v2957
    %2984 = vmatprep.subr.mxu0 0.0
    %2985 = vmatpush1.msra.mxu0 %v2958
    %2986 = vmatprep.subr.mxu0 0.0
    %2987 = vmatpush1.msra.mxu0 %v2959
    %2988 = vmatprep.subr.mxu0 0.0
    %2989 = vmatpush1.msra.mxu0 0.0
    %2990 = vmatprep.subr.mxu0 0.0
    %2991 = vmatpush1.msra.mxu0 0.0
    %2992 = vmatprep.subr.mxu0 0.0
    %2993 = vmatpush1.msra.mxu0 0.0
    %2994 = vmatprep.subr.mxu0 0.0
    %2995 = vmatpush1.msra.mxu0 0.0
    %2996 = vmatprep.subr.mxu0 0.0
    %2997 = vmatpush1.msra.mxu0 0.0
    %2998 = vmatprep.subr.mxu0 0.0
    %2999 = vmatpush1.msra.mxu0 0.0
    %3000 = vmatprep.subr.mxu0 0.0
    %3001 = vmatpush1.msra.mxu0 0.0
    %3002 = vmatprep.subr.mxu0 0.0
    %3003 = vmatpush1.msra.mxu0 0.0
    %3004 = vmatprep.subr.mxu0 0.0
    %3005 = vmatpush1.msra.mxu0 0.0
    %3006 = vmatprep.subr.mxu0 0.0
    %3007 = vmatpush1.msra.mxu0 0.0
    %3008 = vmatprep.subr.mxu0 0.0
    %3009 = vmatpush1.msra.mxu0 0.0
    %3010 = vmatprep.subr.mxu0 0.0
    %3011 = vmatpush1.msra.mxu0 0.0
    %3012 = vmatprep.subr.mxu0 0.0
    %3013 = vmatpush1.msra.mxu0 0.0
    %3014 = vmatprep.subr.mxu0 0.0
    %3015 = vmatpush1.msra.mxu0 0.0
    %3016 = vmatprep.subr.mxu0 0.0
    %3017 = vmatpush1.msra.mxu0 0.0
    %3018 = vmatprep.subr.mxu0 0.0
    %3019 = vmatpush1.msra.mxu0 0.0
    %3020 = vmatprep.subr.mxu0 0.0
    %3021 = vmatpush1.msra.mxu0 0.0
    %3022 = vmatprep.subr.mxu0 0.0
    %3023 = vmatpush1.msra.mxu0 0.0
    %3024 = vmatprep.subr.mxu0 0.0
    %3025 = vmatpush1.msra.mxu0 0.0
    %3026 = vmatprep.subr.mxu0 0.0
    %3027 = vmatpush1.msra.mxu0 0.0
    %3028 = vmatprep.subr.mxu0 0.0
    %3029 = vmatpush1.msra.mxu0 0.0
    %3030 = vmatprep.subr.mxu0 0.0
    %3031 = vmatpush1.msra.mxu0 0.0
    %3032 = vmatprep.subr.mxu0 0.0
    %3033 = vmatpush1.msra.mxu0 0.0
    %3034 = vmatprep.subr.mxu0 0.0
    %3035 = vmatpush1.msra.mxu0 0.0
    %3036 = vmatprep.subr.mxu0 0.0
    %3037 = vmatpush1.msra.mxu0 0.0
    %3038 = vmatprep.subr.mxu0 0.0
    %3039 = vmatpush1.msra.mxu0 0.0
    %3040 = vmatprep.subr.mxu0 0.0
    %3041 = vmatpush1.msra.mxu0 0.0
    %3042 = vmatprep.subr.mxu0 0.0
    %3043 = vmatpush1.msra.mxu0 0.0
    %3044 = vmatprep.mubr.f32.mxu0 0.0
    %3045 = vmatmul.mubr.f32.gmra.mrb[0].mxu0 %v2969
    %v3046 = vpop.f32.mrb[0].mxu0
    %v3047 = vadd.f32 %v2966, %v3046
    %v3048 = vpop.f32.mrb[0].mxu0
    %3049 = vmatprep.mubr.f32.mxu0 0.0
    %3050 = vmatmul.mubr.f32.gmra.mrb[0].mxu0 %v2972
    %v3051 = vpop.f32.mrb[0].mxu0
    %v3052 = vadd.f32 %v2966, %v3051
    %v3053 = vpop.f32.mrb[0].mxu0
    %3054 = vmatprep.mubr.f32.mxu0 0.0
    %3055 = vmatmul.mubr.f32.gmra.mrb[0].mxu0 %v2975
    %v3056 = vpop.f32.mrb[0].mxu0
    %v3057 = vadd.f32 %v2966, %v3056
    %v3058 = vpop.f32.mrb[0].mxu0
    %3059 = vmatprep.mubr.f32.mxu0 0.0
    %3060 = vmatmul.mubr.f32.gmra.mrb[0].mxu0 %v2978
    %v3061 = vpop.f32.mrb[0].mxu0
    %v3062 = vadd.f32 %v2966, %v3061
    %v3063 = vpop.f32.mrb[0].mxu0
    %3064 = vdwg.mxu0
    %v3065 = vmax.f32 %v3047, 0.0
    %v3066 = vmax.f32 %v3052, 0.0
    %v3067 = vmax.f32 %v3057, 0.0
    %v3068 = vmax.f32 %v3062, 0.0
    %s3069 = scalar_lea.vmem [#allocation9], 64
    %v3070 = vld [vmem:[%s3069] sm:$0xff]
    %v3071 = vld [vmem:[%s3069 + $0x8] sm:$0xff]
    %v3072 = vld [vmem:[%s3069 + $0x10] sm:$0xff]
    %v3073 = vld [vmem:[%s3069 + $0x18] sm:$0xff]
    %v3074 = vld [vmem:[%s3069 + $0x20] sm:$0xff]
    %v3075 = vld [vmem:[%s3069 + $0x28] sm:$0xff]
    %v3076 = vld [vmem:[%s3069 + $0x30] sm:$0xff]
    %v3077 = vld [vmem:[%s3069 + $0x38] sm:$0xff]
    %v3078 = vlaneseq
    %v3079 = vshrl.u32 %v3078, 7
    %v3080 = vsub.s32 1, %v3079
    %v3081 = vrot.slane %v1977, %v3080
    %v3083 = vsel %vm1806, %v3065, 0
    %v3086 = vsel %vm1806, %v3066, 0
    %v3089 = vsel %vm1806, %v3067, 0
    %v3092 = vsel %vm1806, %v3068, 0
    %3094 = vmatprep.subr.mxu0 0.0
    %3095 = vmatpush1.msra.mxu0 %v3070
    %3096 = vmatprep.subr.mxu0 0.0
    %3097 = vmatpush1.msra.mxu0 %v3071
    %3098 = vmatprep.subr.mxu0 0.0
    %3099 = vmatpush1.msra.mxu0 %v3072
    %3100 = vmatprep.subr.mxu0 0.0
    %3101 = vmatpush1.msra.mxu0 %v3073
    %3102 = vmatprep.subr.mxu0 0.0
    %3103 = vmatpush1.msra.mxu0 %v3074
    %3104 = vmatprep.subr.mxu0 0.0
    %3105 = vmatpush1.msra.mxu0 %v3075
    %3106 = vmatprep.subr.mxu0 0.0
    %3107 = vmatpush1.msra.mxu0 %v3076
    %3108 = vmatprep.subr.mxu0 0.0
    %3109 = vmatpush1.msra.mxu0 %v3077
    %3110 = vmatprep.subr.mxu0 0.0
    %3111 = vmatpush1.msra.mxu0 0.0
    %3112 = vmatprep.subr.mxu0 0.0
    %3113 = vmatpush1.msra.mxu0 0.0
    %3114 = vmatprep.subr.mxu0 0.0
    %3115 = vmatpush1.msra.mxu0 0.0
    %3116 = vmatprep.subr.mxu0 0.0
    %3117 = vmatpush1.msra.mxu0 0.0
    %3118 = vmatprep.subr.mxu0 0.0
    %3119 = vmatpush1.msra.mxu0 0.0
    %3120 = vmatprep.subr.mxu0 0.0
    %3121 = vmatpush1.msra.mxu0 0.0
    %3122 = vmatprep.subr.mxu0 0.0
    %3123 = vmatpush1.msra.mxu0 0.0
    %3124 = vmatprep.subr.mxu0 0.0
    %3125 = vmatpush1.msra.mxu0 0.0
    %3126 = vmatprep.subr.mxu0 0.0
    %3127 = vmatpush1.msra.mxu0 0.0
    %3128 = vmatprep.subr.mxu0 0.0
    %3129 = vmatpush1.msra.mxu0 0.0
    %3130 = vmatprep.subr.mxu0 0.0
    %3131 = vmatpush1.msra.mxu0 0.0
    %3132 = vmatprep.subr.mxu0 0.0
    %3133 = vmatpush1.msra.mxu0 0.0
    %3134 = vmatprep.subr.mxu0 0.0
    %3135 = vmatpush1.msra.mxu0 0.0
    %3136 = vmatprep.subr.mxu0 0.0
    %3137 = vmatpush1.msra.mxu0 0.0
    %3138 = vmatprep.subr.mxu0 0.0
    %3139 = vmatpush1.msra.mxu0 0.0
    %3140 = vmatprep.subr.mxu0 0.0
    %3141 = vmatpush1.msra.mxu0 0.0
    %3142 = vmatprep.subr.mxu0 0.0
    %3143 = vmatpush1.msra.mxu0 0.0
    %3144 = vmatprep.subr.mxu0 0.0
    %3145 = vmatpush1.msra.mxu0 0.0
    %3146 = vmatprep.subr.mxu0 0.0
    %3147 = vmatpush1.msra.mxu0 0.0
    %3148 = vmatprep.subr.mxu0 0.0
    %3149 = vmatpush1.msra.mxu0 0.0
    %3150 = vmatprep.subr.mxu0 0.0
    %3151 = vmatpush1.msra.mxu0 0.0
    %3152 = vmatprep.subr.mxu0 0.0
    %3153 = vmatpush1.msra.mxu0 0.0
    %3154 = vmatprep.subr.mxu0 0.0
    %3155 = vmatpush1.msra.mxu0 0.0
    %3156 = vmatprep.subr.mxu0 0.0
    %3157 = vmatpush1.msra.mxu0 0.0
    %3158 = vmatprep.mubr.f32.mxu0 0.0
    %3159 = vmatmul.mubr.f32.gmra.mrb[0].mxu0 %v3083
    %v3160 = vpop.f32.mrb[0].mxu0
    %v3161 = vadd.f32 %v3081, %v3160
    %v3162 = vpop.f32.mrb[0].mxu0
    %3163 = vmatprep.mubr.f32.mxu0 0.0
    %3164 = vmatmul.mubr.f32.gmra.mrb[0].mxu0 %v3086
    %v3165 = vpop.f32.mrb[0].mxu0
    %v3166 = vadd.f32 %v3081, %v3165
    %v3167 = vpop.f32.mrb[0].mxu0
    %3168 = vmatprep.mubr.f32.mxu0 0.0
    %3169 = vmatmul.mubr.f32.gmra.mrb[0].mxu0 %v3089
    %v3170 = vpop.f32.mrb[0].mxu0
    %v3171 = vadd.f32 %v3081, %v3170
    %v3172 = vpop.f32.mrb[0].mxu0
    %3173 = vmatprep.mubr.f32.mxu0 0.0
    %3174 = vmatmul.mubr.f32.gmra.mrb[0].mxu0 %v3092
    %v3175 = vpop.f32.mrb[0].mxu0
    %v3176 = vadd.f32 %v3081, %v3175
    %v3177 = vpop.f32.mrb[0].mxu0
    %3178 = vdwg.mxu0
    %v3179 = vadd.f32 %v2951, %v3161
    %v3180 = vadd.f32 %v2952, %v3166
    %v3181 = vadd.f32 %v2953, %v3171
    %v3182 = vadd.f32 %v2954, %v3176
    %v3183 = vsel %vm248, %v3179, 0.0
    %3184 = vadd.xlane.f32.xlu0 %v3183
    %v3185 = vpop.xlane.xlu0 %3184
    %v3186 = vsel %vm248, %v3180, 0.0
    %3187 = vadd.xlane.f32.xlu0 %v3186
    %v3188 = vpop.xlane.xlu0 %3187
    %v3189 = vsel %vm248, %v3181, 0.0
    %3190 = vadd.xlane.f32.xlu0 %v3189
    %v3191 = vpop.xlane.xlu0 %3190
    %v3192 = vsel %vm248, %v3182, 0.0
    %3193 = vadd.xlane.f32.xlu0 %v3192
    %v3194 = vpop.xlane.xlu0 %3193
    %v3195 = vmul.f32 %v3185, %v1625
    %v3196 = vmul.f32 %v3188, %v1625
    %v3197 = vmul.f32 %v3191, %v1625
    %v3198 = vmul.f32 %v3194, %v1625
    %v3199 = vsub.f32 %v3179, %v3195
    %v3200 = vsub.f32 %v3180, %v3196
    %v3201 = vsub.f32 %v3181, %v3197
    %v3202 = vsub.f32 %v3182, %v3198
    %v3203 = vmul.f32 %v3199, %v3199
    %v3204 = vmul.f32 %v3200, %v3200
    %v3205 = vmul.f32 %v3201, %v3201
    %v3206 = vmul.f32 %v3202, %v3202
    %v3207 = vsel %vm248, %v3203, 0.0
    %3208 = vadd.xlane.f32.xlu0 %v3207
    %v3209 = vpop.xlane.xlu0 %3208
    %v3210 = vsel %vm248, %v3204, 0.0
    %3211 = vadd.xlane.f32.xlu0 %v3210
    %v3212 = vpop.xlane.xlu0 %3211
    %v3213 = vsel %vm248, %v3205, 0.0
    %3214 = vadd.xlane.f32.xlu0 %v3213
    %v3215 = vpop.xlane.xlu0 %3214
    %v3216 = vsel %vm248, %v3206, 0.0
    %3217 = vadd.xlane.f32.xlu0 %v3216
    %v3218 = vpop.xlane.xlu0 %3217
    %v3219 = vmul.f32 %v3209, %v1625
    %v3220 = vmul.f32 %v3212, %v1625
    %v3221 = vmul.f32 %v3215, %v1625
    %v3222 = vmul.f32 %v3218, %v1625
    %v3223 = vadd.f32 %v3219, 1e-05
    %v3224 = vadd.f32 %v3220, 1e-05
    %v3225 = vadd.f32 %v3221, 1e-05
    %v3226 = vadd.f32 %v3222, 1e-05
    %v3227 = vrsqrt.pop %v3223
    %v3228 = vrsqrt.pop %v3224
    %v3229 = vrsqrt.pop %v3225
    %v3230 = vrsqrt.pop %v3226
    %v3231 = vmul.f32 %v3199, %v3227
    %v3232 = vmul.f32 %v3200, %v3228
    %v3233 = vmul.f32 %v3201, %v3229
    %v3234 = vmul.f32 %v3202, %v3230
    %v3235 = vlaneseq
    %v3236 = vshrl.u32 %v3235, 7
    %v3237 = vsub.s32 4, %v3236
    %v3238 = vrot.slane %v1977, %v3237
    %v3239 = vmul.f32 %v3231, %v3238
    %v3240 = vmul.f32 %v3232, %v3238
    %v3241 = vmul.f32 %v3233, %v3238
    %v3242 = vmul.f32 %v3234, %v3238
    %v3243 = vlaneseq
    %v3244 = vshrl.u32 %v3243, 7
    %v3245 = vsub.s32 5, %v3244
    %v3246 = vrot.slane %v1977, %v3245
    %v3247 = vadd.f32 %v3239, %v3246
    %v3248 = vadd.f32 %v3240, %v3246
    %v3249 = vadd.f32 %v3241, %v3246
    %v3250 = vadd.f32 %v3242, %v3246
    %v3251 = vld [vmem:[#allocation12] sm:$0x3]
    %v3252 = vsel %vm248, %v3247, 0.0
    %3253 = vadd.xlane.f32.xlu0 %v3252
    %v3254 = vpop.xlane.xlu0 %3253
    %v3255 = vsel %vm248, %v3248, 0.0
    %3256 = vadd.xlane.f32.xlu0 %v3255
    %v3257 = vpop.xlane.xlu0 %3256
    %v3258 = vsel %vm248, %v3249, 0.0
    %3259 = vadd.xlane.f32.xlu0 %v3258
    %v3260 = vpop.xlane.xlu0 %3259
    %v3261 = vsel %vm248, %v3250, 0.0
    %3262 = vadd.xlane.f32.xlu0 %v3261
    %v3263 = vpop.xlane.xlu0 %3262
    %v3264 = vmul.f32 %v3254, %v1625
    %v3265 = vmul.f32 %v3257, %v1625
    %v3266 = vmul.f32 %v3260, %v1625
    %v3267 = vmul.f32 %v3263, %v1625
    %v3268 = vsub.f32 %v3247, %v3264
    %v3269 = vsub.f32 %v3248, %v3265
    %v3270 = vsub.f32 %v3249, %v3266
    %v3271 = vsub.f32 %v3250, %v3267
    %v3272 = vmul.f32 %v3268, %v3268
    %v3273 = vmul.f32 %v3269, %v3269
    %v3274 = vmul.f32 %v3270, %v3270
    %v3275 = vmul.f32 %v3271, %v3271
    %v3276 = vsel %vm248, %v3272, 0.0
    %3277 = vadd.xlane.f32.xlu0 %v3276
    %v3278 = vpop.xlane.xlu0 %3277
    %v3279 = vsel %vm248, %v3273, 0.0
    %3280 = vadd.xlane.f32.xlu0 %v3279
    %v3281 = vpop.xlane.xlu0 %3280
    %v3282 = vsel %vm248, %v3274, 0.0
    %3283 = vadd.xlane.f32.xlu0 %v3282
    %v3284 = vpop.xlane.xlu0 %3283
    %v3285 = vsel %vm248, %v3275, 0.0
    %3286 = vadd.xlane.f32.xlu0 %v3285
    %v3287 = vpop.xlane.xlu0 %3286
    %v3288 = vmul.f32 %v3278, %v1625
    %v3289 = vmul.f32 %v3281, %v1625
    %v3290 = vmul.f32 %v3284, %v1625
    %v3291 = vmul.f32 %v3287, %v1625
    %v3292 = vadd.f32 %v3288, 1e-05
    %v3293 = vadd.f32 %v3289, 1e-05
    %v3294 = vadd.f32 %v3290, 1e-05
    %v3295 = vadd.f32 %v3291, 1e-05
    %v3296 = vrsqrt.pop %v3292
    %v3297 = vrsqrt.pop %v3293
    %v3298 = vrsqrt.pop %v3294
    %v3299 = vrsqrt.pop %v3295
    %v3300 = vmul.f32 %v3268, %v3296
    %v3301 = vmul.f32 %v3269, %v3297
    %v3302 = vmul.f32 %v3270, %v3298
    %v3303 = vmul.f32 %v3271, %v3299
    %v3304 = vlaneseq
    %v3305 = vshrl.u32 %v3304, 7
    %v3306 = vsub.s32 0, %v3305
    %v3307 = vrot.slane %v3251, %v3306
    %v3308 = vmul.f32 %v3300, %v3307
    %v3309 = vmul.f32 %v3301, %v3307
    %v3310 = vmul.f32 %v3302, %v3307
    %v3311 = vmul.f32 %v3303, %v3307
    %v3312 = vlaneseq
    %v3313 = vshrl.u32 %v3312, 7
    %v3314 = vsub.s32 1, %v3313
    %v3315 = vrot.slane %v3251, %v3314
    %v3316 = vadd.f32 %v3308, %v3315
    %v3317 = vadd.f32 %v3309, %v3315
    %v3318 = vadd.f32 %v3310, %v3315
    %v3319 = vadd.f32 %v3311, %v3315
    %v3320 = vld [vmem:[#allocation13] sm:$0xff]
    %v3321 = vld [vmem:[#allocation13 + $0x8] sm:$0xff]
    %v3322 = vld [vmem:[#allocation13 + $0x10] sm:$0xff]
    %v3323 = vld [vmem:[#allocation13 + $0x18] sm:$0xff]
    %v3324 = vld [vmem:[%s12] sm:$0x1]
    %v3326 = vlaneseq
    %v3327 = vshrl.u32 %v3326, 7
    %v3328 = vsub.s32 0, %v3327
    %v3329 = vrot.slane %v3324, %v3328
    %v3332 = vsel %vm248, %v3316, 0
    %v3335 = vsel %vm248, %v3317, 0
    %v3338 = vsel %vm248, %v3318, 0
    %v3341 = vsel %vm248, %v3319, 0
    %3343 = vmatprep.subr.mxu0 0.0
    %3344 = vmatpush1.msra.mxu0 %v3320
    %3345 = vmatprep.subr.mxu0 0.0
    %3346 = vmatpush1.msra.mxu0 %v3321
    %3347 = vmatprep.subr.mxu0 0.0
    %3348 = vmatpush1.msra.mxu0 %v3322
    %3349 = vmatprep.subr.mxu0 0.0
    %3350 = vmatpush1.msra.mxu0 %v3323
    %3351 = vmatprep.subr.mxu0 0.0
    %3352 = vmatpush1.msra.mxu0 0.0
    %3353 = vmatprep.subr.mxu0 0.0
    %3354 = vmatpush1.msra.mxu0 0.0
    %3355 = vmatprep.subr.mxu0 0.0
    %3356 = vmatpush1.msra.mxu0 0.0
    %3357 = vmatprep.subr.mxu0 0.0
    %3358 = vmatpush1.msra.mxu0 0.0
    %3359 = vmatprep.subr.mxu0 0.0
    %3360 = vmatpush1.msra.mxu0 0.0
    %3361 = vmatprep.subr.mxu0 0.0
    %3362 = vmatpush1.msra.mxu0 0.0
    %3363 = vmatprep.subr.mxu0 0.0
    %3364 = vmatpush1.msra.mxu0 0.0
    %3365 = vmatprep.subr.mxu0 0.0
    %3366 = vmatpush1.msra.mxu0 0.0
    %3367 = vmatprep.subr.mxu0 0.0
    %3368 = vmatpush1.msra.mxu0 0.0
    %3369 = vmatprep.subr.mxu0 0.0
    %3370 = vmatpush1.msra.mxu0 0.0
    %3371 = vmatprep.subr.mxu0 0.0
    %3372 = vmatpush1.msra.mxu0 0.0
    %3373 = vmatprep.subr.mxu0 0.0
    %3374 = vmatpush1.msra.mxu0 0.0
    %3375 = vmatprep.subr.mxu0 0.0
    %3376 = vmatpush1.msra.mxu0 0.0
    %3377 = vmatprep.subr.mxu0 0.0
    %3378 = vmatpush1.msra.mxu0 0.0
    %3379 = vmatprep.subr.mxu0 0.0
    %3380 = vmatpush1.msra.mxu0 0.0
    %3381 = vmatprep.subr.mxu0 0.0
    %3382 = vmatpush1.msra.mxu0 0.0
    %3383 = vmatprep.subr.mxu0 0.0
    %3384 = vmatpush1.msra.mxu0 0.0
    %3385 = vmatprep.subr.mxu0 0.0
    %3386 = vmatpush1.msra.mxu0 0.0
    %3387 = vmatprep.subr.mxu0 0.0
    %3388 = vmatpush1.msra.mxu0 0.0
    %3389 = vmatprep.subr.mxu0 0.0
    %3390 = vmatpush1.msra.mxu0 0.0
    %3391 = vmatprep.subr.mxu0 0.0
    %3392 = vmatpush1.msra.mxu0 0.0
    %3393 = vmatprep.subr.mxu0 0.0
    %3394 = vmatpush1.msra.mxu0 0.0
    %3395 = vmatprep.subr.mxu0 0.0
    %3396 = vmatpush1.msra.mxu0 0.0
    %3397 = vmatprep.subr.mxu0 0.0
    %3398 = vmatpush1.msra.mxu0 0.0
    %3399 = vmatprep.subr.mxu0 0.0
    %3400 = vmatpush1.msra.mxu0 0.0
    %3401 = vmatprep.subr.mxu0 0.0
    %3402 = vmatpush1.msra.mxu0 0.0
    %3403 = vmatprep.subr.mxu0 0.0
    %3404 = vmatpush1.msra.mxu0 0.0
    %3405 = vmatprep.subr.mxu0 0.0
    %3406 = vmatpush1.msra.mxu0 0.0
    %3407 = vmatprep.mubr.f32.mxu0 0.0
    %3408 = vmatmul.mubr.f32.gmra.mrb[0].mxu0 %v3332
    %v3409 = vpop.f32.mrb[0].mxu0
    %v3410 = vadd.f32 %v3329, %v3409
    %v3411 = vpop.f32.mrb[0].mxu0
    %3412 = vmatprep.mubr.f32.mxu0 0.0
    %3413 = vmatmul.mubr.f32.gmra.mrb[0].mxu0 %v3335
    %v3414 = vpop.f32.mrb[0].mxu0
    %v3415 = vadd.f32 %v3329, %v3414
    %v3416 = vpop.f32.mrb[0].mxu0
    %3417 = vmatprep.mubr.f32.mxu0 0.0
    %3418 = vmatmul.mubr.f32.gmra.mrb[0].mxu0 %v3338
    %v3419 = vpop.f32.mrb[0].mxu0
    %v3420 = vadd.f32 %v3329, %v3419
    %v3421 = vpop.f32.mrb[0].mxu0
    %3422 = vmatprep.mubr.f32.mxu0 0.0
    %3423 = vmatmul.mubr.f32.gmra.mrb[0].mxu0 %v3341
    %v3424 = vpop.f32.mrb[0].mxu0
    %v3425 = vadd.f32 %v3329, %v3424
    %v3426 = vpop.f32.mrb[0].mxu0
    %3427 = vdwg.mxu0
    %v3428 = vmul.f32 %v3410, %v474
    %v3429 = vmul.f32 %v3415, %v481
    %v3430 = vmul.f32 %v3420, %v488
    %v3431 = vmul.f32 %v3425, %v495
    %v3432 = vadd.f32 %v3428, %v349
    %v3433 = vadd.f32 %v3429, %v352
    %v3434 = vadd.f32 %v3430, %v355
    %v3435 = vadd.f32 %v3431, %v358
    %v3436 = vld [vmem:[%s18] sm:$0xff]
    %v3438 = vsel %vm346, %v3432, 0
    %v3441 = vsel %vm346, %v3433, 0
    %v3444 = vsel %vm346, %v3434, 0
    %v3447 = vsel %vm346, %v3435, 0
    %3449 = vmatprep.subr.mxu0 0.0
    %3450 = vmatpush1.msra.mxu0 %v3436
    %3451 = vmatprep.subr.mxu0 0.0
    %3452 = vmatpush1.msra.mxu0 0.0
    %3453 = vmatprep.subr.mxu0 0.0
    %3454 = vmatpush1.msra.mxu0 0.0
    %3455 = vmatprep.subr.mxu0 0.0
    %3456 = vmatpush1.msra.mxu0 0.0
    %3457 = vmatprep.subr.mxu0 0.0
    %3458 = vmatpush1.msra.mxu0 0.0
    %3459 = vmatprep.subr.mxu0 0.0
    %3460 = vmatpush1.msra.mxu0 0.0
    %3461 = vmatprep.subr.mxu0 0.0
    %3462 = vmatpush1.msra.mxu0 0.0
    %3463 = vmatprep.subr.mxu0 0.0
    %3464 = vmatpush1.msra.mxu0 0.0
    %3465 = vmatprep.subr.mxu0 0.0
    %3466 = vmatpush1.msra.mxu0 0.0
    %3467 = vmatprep.subr.mxu0 0.0
    %3468 = vmatpush1.msra.mxu0 0.0
    %3469 = vmatprep.subr.mxu0 0.0
    %3470 = vmatpush1.msra.mxu0 0.0
    %3471 = vmatprep.subr.mxu0 0.0
    %3472 = vmatpush1.msra.mxu0 0.0
    %3473 = vmatprep.subr.mxu0 0.0
    %3474 = vmatpush1.msra.mxu0 0.0
    %3475 = vmatprep.subr.mxu0 0.0
    %3476 = vmatpush1.msra.mxu0 0.0
    %3477 = vmatprep.subr.mxu0 0.0
    %3478 = vmatpush1.msra.mxu0 0.0
    %3479 = vmatprep.subr.mxu0 0.0
    %3480 = vmatpush1.msra.mxu0 0.0
    %3481 = vmatprep.subr.mxu0 0.0
    %3482 = vmatpush1.msra.mxu0 0.0
    %3483 = vmatprep.subr.mxu0 0.0
    %3484 = vmatpush1.msra.mxu0 0.0
    %3485 = vmatprep.subr.mxu0 0.0
    %3486 = vmatpush1.msra.mxu0 0.0
    %3487 = vmatprep.subr.mxu0 0.0
    %3488 = vmatpush1.msra.mxu0 0.0
    %3489 = vmatprep.subr.mxu0 0.0
    %3490 = vmatpush1.msra.mxu0 0.0
    %3491 = vmatprep.subr.mxu0 0.0
    %3492 = vmatpush1.msra.mxu0 0.0
    %3493 = vmatprep.subr.mxu0 0.0
    %3494 = vmatpush1.msra.mxu0 0.0
    %3495 = vmatprep.subr.mxu0 0.0
    %3496 = vmatpush1.msra.mxu0 0.0
    %3497 = vmatprep.subr.mxu0 0.0
    %3498 = vmatpush1.msra.mxu0 0.0
    %3499 = vmatprep.subr.mxu0 0.0
    %3500 = vmatpush1.msra.mxu0 0.0
    %3501 = vmatprep.subr.mxu0 0.0
    %3502 = vmatpush1.msra.mxu0 0.0
    %3503 = vmatprep.subr.mxu0 0.0
    %3504 = vmatpush1.msra.mxu0 0.0
    %3505 = vmatprep.subr.mxu0 0.0
    %3506 = vmatpush1.msra.mxu0 0.0
    %3507 = vmatprep.subr.mxu0 0.0
    %3508 = vmatpush1.msra.mxu0 0.0
    %3509 = vmatprep.subr.mxu0 0.0
    %3510 = vmatpush1.msra.mxu0 0.0
    %3511 = vmatprep.subr.mxu0 0.0
    %3512 = vmatpush1.msra.mxu0 0.0
    %3513 = vmatprep.mubr.f32.mxu0 0.0
    %3514 = vmatmul.mubr.f32.gmra.mrb[0].mxu0 %v3438
    %v3515 = vpop.f32.mrb[0].mxu0
    %v3516 = vadd.f32 0.0, %v3515
    %v3517 = vpop.f32.mrb[0].mxu0
    %3518 = vmatprep.mubr.f32.mxu0 0.0
    %3519 = vmatmul.mubr.f32.gmra.mrb[0].mxu0 %v3441
    %v3520 = vpop.f32.mrb[0].mxu0
    %v3521 = vadd.f32 0.0, %v3520
    %v3522 = vpop.f32.mrb[0].mxu0
    %3523 = vmatprep.mubr.f32.mxu0 0.0
    %3524 = vmatmul.mubr.f32.gmra.mrb[0].mxu0 %v3444
    %v3525 = vpop.f32.mrb[0].mxu0
    %v3526 = vadd.f32 0.0, %v3525
    %v3527 = vpop.f32.mrb[0].mxu0
    %3528 = vmatprep.mubr.f32.mxu0 0.0
    %3529 = vmatmul.mubr.f32.gmra.mrb[0].mxu0 %v3447
    %v3530 = vpop.f32.mrb[0].mxu0
    %v3531 = vadd.f32 0.0, %v3530
    %v3532 = vpop.f32.mrb[0].mxu0
    %3533 = vdwg.mxu0
    %v3534 = vld [vmem:[%s19] sm:$0xff]
    %v3535 = vld [vmem:[%s19 + $0x8] sm:$0xff]
    %v3536 = vld [vmem:[%s19 + $0x10] sm:$0xff]
    %v3537 = vld [vmem:[%s19 + $0x18] sm:$0xff]
    %v3538 = vmul.f32 %v3516, %v3534
    %v3539 = vmul.f32 %v3521, %v3535
    %v3540 = vmul.f32 %v3526, %v3536
    %v3541 = vmul.f32 %v3531, %v3537
    %v3542 = vld [vmem:[%s20] sm:$0x3]
    %v3544 = vsel %vm248, %v3542, 0
    %3546 = vmatprep.subr.mxu0 0.0
    %3547 = vmatpush1.msra.mxu0 %v3538
    %3548 = vmatprep.subr.mxu0 0.0
    %3549 = vmatpush1.msra.mxu0 %v3539
    %3550 = vmatprep.subr.mxu0 0.0
    %3551 = vmatpush1.msra.mxu0 %v3540
    %3552 = vmatprep.subr.mxu0 0.0
    %3553 = vmatpush1.msra.mxu0 %v3541
    %3554 = vmatprep.subr.mxu0 0.0
    %3555 = vmatpush1.msra.mxu0 0.0
    %3556 = vmatprep.subr.mxu0 0.0
    %3557 = vmatpush1.msra.mxu0 0.0
    %3558 = vmatprep.subr.mxu0 0.0
    %3559 = vmatpush1.msra.mxu0 0.0
    %3560 = vmatprep.subr.mxu0 0.0
    %3561 = vmatpush1.msra.mxu0 0.0
    %3562 = vmatprep.subr.mxu0 0.0
    %3563 = vmatpush1.msra.mxu0 0.0
    %3564 = vmatprep.subr.mxu0 0.0
    %3565 = vmatpush1.msra.mxu0 0.0
    %3566 = vmatprep.subr.mxu0 0.0
    %3567 = vmatpush1.msra.mxu0 0.0
    %3568 = vmatprep.subr.mxu0 0.0
    %3569 = vmatpush1.msra.mxu0 0.0
    %3570 = vmatprep.subr.mxu0 0.0
    %3571 = vmatpush1.msra.mxu0 0.0
    %3572 = vmatprep.subr.mxu0 0.0
    %3573 = vmatpush1.msra.mxu0 0.0
    %3574 = vmatprep.subr.mxu0 0.0
    %3575 = vmatpush1.msra.mxu0 0.0
    %3576 = vmatprep.subr.mxu0 0.0
    %3577 = vmatpush1.msra.mxu0 0.0
    %3578 = vmatprep.subr.mxu0 0.0
    %3579 = vmatpush1.msra.mxu0 0.0
    %3580 = vmatprep.subr.mxu0 0.0
    %3581 = vmatpush1.msra.mxu0 0.0
    %3582 = vmatprep.subr.mxu0 0.0
    %3583 = vmatpush1.msra.mxu0 0.0
    %3584 = vmatprep.subr.mxu0 0.0
    %3585 = vmatpush1.msra.mxu0 0.0
    %3586 = vmatprep.subr.mxu0 0.0
    %3587 = vmatpush1.msra.mxu0 0.0
    %3588 = vmatprep.subr.mxu0 0.0
    %3589 = vmatpush1.msra.mxu0 0.0
    %3590 = vmatprep.subr.mxu0 0.0
    %3591 = vmatpush1.msra.mxu0 0.0
    %3592 = vmatprep.subr.mxu0 0.0
    %3593 = vmatpush1.msra.mxu0 0.0
    %3594 = vmatprep.subr.mxu0 0.0
    %3595 = vmatpush1.msra.mxu0 0.0
    %3596 = vmatprep.subr.mxu0 0.0
    %3597 = vmatpush1.msra.mxu0 0.0
    %3598 = vmatprep.subr.mxu0 0.0
    %3599 = vmatpush1.msra.mxu0 0.0
    %3600 = vmatprep.subr.mxu0 0.0
    %3601 = vmatpush1.msra.mxu0 0.0
    %3602 = vmatprep.subr.mxu0 0.0
    %3603 = vmatpush1.msra.mxu0 0.0
    %3604 = vmatprep.subr.mxu0 0.0
    %3605 = vmatpush1.msra.mxu0 0.0
    %3606 = vmatprep.subr.mxu0 0.0
    %3607 = vmatpush1.msra.mxu0 0.0
    %3608 = vmatprep.subr.mxu0 0.0
    %3609 = vmatpush1.msra.mxu0 0.0
    %3610 = vmatprep.mubr.f32.mxu0 0.0
    %3611 = vmatmul.mubr.f32.gmra.mrb[0].mxu0 %v3544
    %v3612 = vpop.f32.mrb[0].mxu0
    %v3613 = vadd.f32 0.0, %v3612
    %v3614 = vpop.f32.mrb[0].mxu0
    %3615 = vdwg.mxu0
    %3616 = vst [vmem:[%s21] sm:$0x3] %v3613
    // Predicated region
    $region138: #{_lambda_.1} parent=1 // pred_check
      _
    $region139: #{_lambda_.1} parent=1 // pred_check_branch
      %3618 = sbr.rel (0) target = $region141
    $region140: #{_lambda_.1} parent=1 // pred_region
      _
    $region141: #{_lambda_.1} parent=1 // pred_fallthru
      _
    // Predicated region
    $region142: #{_lambda_.1} parent=1 // pred_check
      _
    $region143: #{_lambda_.1} parent=1 // pred_check_branch
      %3620 = sbr.rel (0) target = $region145
    $region144: #{_lambda_.1} parent=1 // pred_region
      _
    $region145: #{_lambda_.1} parent=1 // pred_fallthru
      _
    %3621 = vsyncpa [#allocation3], 1
    %3622 = vsyncpa [#allocation5], 1
    %3623 = vsyncpa [#allocation8], 1
    %3624 = vsyncpa [#allocation11], 1
    %3625 = vsyncpa [#allocation14], 1
    %3626 = vsyncpa [#allocation17], 1
    %3627 = vsyncpa [#allocation20], 1

</llo_original>
